<compile_context>
chip_gen: v7x
topology: tpu7x:2x2x1
jax: 0.10.0
libtpu: 0.0.40
codegen_flags: <defaults>
</compile_context>

<pallas_src>
import jax
import jax.numpy as jnp
from jax import lax
from jax.experimental import pallas as pl
from jax.experimental.pallas import tpu as pltpu


B_MAX = 8  # images per conv-kernel grid step


# --------------------------- fused conv+pool kernel ---------------------------

def _conv_stack_kernel(lhs1_ref, w1t_ref, b1t_ref, w2r_ref, b2t_ref, o_ref):
    B = lhs1_ref.shape[0]

    # -------- layer 1: conv(1->32) as ONE MXU dot + bias + ReLU + 2x2 pool --------
    # lhs1 rows = (img, h1, tq) with tq = output-column quad (0..7, quad 7 dead),
    # K = 8*kh + wq ;  output lanes = 32*ph + c with output column w1 = 4*tq + ph.
    lhs1 = lhs1_ref[...].reshape(B * 28 * 8, 24)
    y1 = jnp.dot(lhs1, w1t_ref[...], preferred_element_type=jnp.float32)   # (B*224,128)
    y1 = jnp.maximum(y1 + b1t_ref[...], 0.0)                               # bias + ReLU
    # pool over W: phases (0,1) -> pooled col 2*tq (parity plane u=0),
    #              phases (2,3) -> pooled col 2*tq+1 (parity plane u=1)
    m0 = jnp.maximum(y1[:, 0:32], y1[:, 32:64])                            # (B*224,32)
    m1 = jnp.maximum(y1[:, 64:96], y1[:, 96:128])

    # pool over H, kill the dead tq==7 quad, and stage (with a 2-row zero halo) for layer 2
    tq_idx = lax.broadcasted_iota(jnp.int32, (B, 14, 8, 32), 2)
    zrows = jnp.zeros((B, 2, 8, 32), jnp.float32)
    planes = []
    for mu in (m0, m1):
        p = jnp.max(mu.reshape(B, 14, 2, 8, 32), axis=2)                   # (B,14,8,32)
        p = jnp.where(tq_idx < 7, p, 0.0)                                  # zero dead column
        planes.append(jnp.concatenate([zrows, p, zrows], axis=1).reshape(B, 144, 32))

    # -------- layer 2: conv(32->64) as ONE K=384 MXU dot + bias + ReLU + pool --------
    # output rows = (img, h2, t_out) (t_out = pooled-w slot, 7 dead);
    # lanes = 64*j + co with pre-pool output column w2 = 2*t_out + j.
    pieces = []
    for kh in range(3):
        for g in range(4):                 # g = j + kw  (union over both parities)
            u = (g - 1) % 2                # source parity plane
            d = (g - 1) // 2               # -1 / 0 / +1 pooled-column shift
            s = 8 * (kh + 1) + d           # static row offset (in-register im2col)
            pieces.append(planes[u][:, s:s + 112, :])
    lhs2 = jnp.concatenate(pieces, axis=-1).reshape(B * 112, 384)
    y2 = jnp.dot(lhs2, w2r_ref[...], preferred_element_type=jnp.float32)   # (B*112,128)
    y2 = jnp.maximum(y2 + b2t_ref[...], 0.0)                               # bias + ReLU
    m = jnp.maximum(y2[:, 0:64], y2[:, 64:128])                            # pool over W
    o_ref[...] = jnp.max(m.reshape(B, 7, 2, 8, 64), axis=2)                # pool over H


def _conv_stack(lhs1, w1t, b1t, w2r, b2t, B):
    n = lhs1.shape[0]
    return pl.pallas_call(
        _conv_stack_kernel,
        out_shape=jax.ShapeDtypeStruct((n, 7, 8, 64), jnp.float32),
        grid=(n // B,),
        in_specs=[
            pl.BlockSpec((B, 28, 8, 24), lambda i: (i, 0, 0, 0)),
            pl.BlockSpec((24, 128), lambda i: (0, 0)),
            pl.BlockSpec((1, 128), lambda i: (0, 0)),
            pl.BlockSpec((384, 128), lambda i: (0, 0)),
            pl.BlockSpec((1, 128), lambda i: (0, 0)),
        ],
        out_specs=pl.BlockSpec((B, 7, 8, 64), lambda i: (i, 0, 0, 0)),
        compiler_params=pltpu.CompilerParams(dimension_semantics=("parallel",)),
    )(lhs1, w1t, b1t, w2r, b2t)


# ---------------------------------- FC kernel ---------------------------------

def _fc_kernel(x_ref, w_ref, b_ref, o_ref):
    o_ref[...] = jnp.dot(x_ref[...], w_ref[...],
                         preferred_element_type=jnp.float32) + b_ref[...]


def _fc(x, w, b, tm):
    m, k = x.shape
    n = w.shape[1]
    return pl.pallas_call(
        _fc_kernel,
        out_shape=jax.ShapeDtypeStruct((m, n), jnp.float32),
        grid=(pl.cdiv(m, tm),),
        in_specs=[
            pl.BlockSpec((tm, k), lambda i: (i, 0)),
            pl.BlockSpec((k, n), lambda i: (0, 0)),
            pl.BlockSpec((1, n), lambda i: (0, 0)),
        ],
        out_specs=pl.BlockSpec((tm, n), lambda i: (i, 0)),
        compiler_params=pltpu.CompilerParams(dimension_semantics=("parallel",)),
    )(x, w, b)


# ------------------------------ params & wrappers ------------------------------

def init_params(key):
    """Parameters in the PyTorch layouts (OIHW conv weights, (out,in) Linear)."""
    k = jax.random.split(key, 6)
    w1 = 0.3 * jax.random.normal(k[0], (32, 1, 3, 3), jnp.float32)
    b1 = 0.05 * jax.random.normal(k[1], (32,), jnp.float32)
    w2 = 0.05 * jax.random.normal(k[2], (64, 32, 3, 3), jnp.float32)
    b2 = 0.05 * jax.random.normal(k[3], (64,), jnp.float32)
    fan_in, fan_out = 7 * 7 * 64, 10
    bound = (6.0 / (fan_in + fan_out)) ** 0.5          # xavier_uniform like the spec
    wfc = jax.random.uniform(k[4], (fan_out, fan_in), jnp.float32, -bound, bound)
    bfc = 0.05 * jax.random.normal(k[5], (fan_out,), jnp.float32)
    return dict(w1=w1, b1=b1, w2=w2, b2=b2, wfc=wfc, bfc=bfc)


def prepare_params(p):
    """One-time refold of the PyTorch weights into the kernel layouts."""
    w1, b1, w2, b2 = p["w1"], p["b1"], p["w2"], p["b2"]

    # conv1 Toeplitz-lite RHS (24,128): row = 8*kh + wq (wq = ph + kw), col = 32*ph + cout
    w1t = jnp.zeros((24, 128), jnp.float32)
    for kh in range(3):
        for ph in range(4):
            for kw in range(3):
                w1t = w1t.at[8 * kh + ph + kw, 32 * ph:32 * ph + 32].set(w1[:, 0, kh, kw])
    b1t = jnp.tile(b1, 4).reshape(1, 128)

    # conv2 RHS (384,128): row = 32*(4*kh + g) + cin, col = 64*j + cout, with kw = g - j
    w2r = jnp.zeros((384, 128), jnp.float32)
    for kh in range(3):
        for g in range(4):
            for j in range(2):
                kw = g - j
                if 0 <= kw <= 2:
                    r0 = 32 * (4 * kh + g)
                    w2r = w2r.at[r0:r0 + 32, 64 * j:64 * j + 64].set(w2[:, :, kh, kw].T)
    b2t = jnp.tile(b2, 2).reshape(1, 128)

    # FC: fold the NCHW-flatten permutation + dead pad column; pad N 10 -> 128 (lane dense)
    w = p["wfc"].T.reshape(64, 7, 7, 10)               # [c, h, w, o]
    w = jnp.transpose(w, (1, 2, 0, 3))                 # [h, w, c, o]
    w = jnp.pad(w, ((0, 0), (0, 1), (0, 0), (0, 0)))   # dead col t=7 -> zero weight
    wfc = jnp.pad(w.reshape(7 * 8 * 64, 10), ((0, 0), (0, 118)))
    bfc = jnp.pad(p["bfc"], (0, 118)).reshape(1, 128)
    return dict(w1t=w1t, b1t=b1t, w2r=w2r, b2t=b2t, wfc=wfc, bfc=bfc)


def forward(x_nchw, kp):
    n = x_nchw.shape[0]
    B = B_MAX if n >= B_MAX else n
    n_pad = ((n + B - 1) // B) * B

    x = x_nchw.reshape(n, 28, 28)                      # C_in == 1
    if n_pad != n:
        x = jnp.pad(x, ((0, n_pad - n), (0, 0), (0, 0)))
    xp = jnp.pad(x, ((0, 0), (1, 1), (1, 7)))          # (n_pad, 30, 36): conv pad + lane tidy

    # Toeplitz-lite conv1 LHS: lhs1[b, h1, tq, 8*kh + wq] = xp[b, h1 + kh, 4*tq + wq]
    cols = []
    for kh in range(3):
        for wq in range(8):
            cols.append(xp[:, kh:kh + 28, wq:wq + 32:4])        # (n_pad, 28, 8)
    lhs1 = jnp.stack(cols, axis=-1)                             # (n_pad, 28, 8, 24)

    feat = _conv_stack(lhs1, kp["w1t"], kp["b1t"], kp["w2r"], kp["b2t"], B)  # (n_pad,7,8,64)
    flat = feat.reshape(n_pad, 7 * 8 * 64)             # free row-major HBM reshape -> (.,3584)
    tm = 256 if n_pad >= 256 else n_pad
    out = _fc(flat, kp["wfc"], kp["bfc"], tm)          # (n_pad, 128), lane-dense stores
    return out[:n, :10]


def reference_forward(x, p):
    """Pure-JAX reference matching the PyTorch module (NCHW, true f32 precision)."""
    dn = ("NCHW", "OIHW", "NCHW")
    hp = jax.lax.Precision.HIGHEST
    y = jax.lax.conv_general_dilated(x, p["w1"], (1, 1), ((1, 1), (1, 1)),
                                     dimension_numbers=dn, precision=hp)
    y = jax.nn.relu(y + p["b1"][None, :, None, None])
    y = jax.lax.reduce_window(y, -jnp.inf, jax.lax.max, (1, 1, 2, 2), (1, 1, 2, 2), "VALID")
    y = jax.lax.conv_general_dilated(y, p["w2"], (1, 1), ((1, 1), (1, 1)),
                                     dimension_numbers=dn, precision=hp)
    y = jax.nn.relu(y + p["b2"][None, :, None, None])
    y = jax.lax.reduce_window(y, -jnp.inf, jax.lax.max, (1, 1, 2, 2), (1, 1, 2, 2), "VALID")
    flat = y.reshape(y.shape[0], -1)                   # PyTorch NCHW flatten order
    return jnp.dot(flat, p["wfc"].T, precision=hp) + p["bfc"]


if __name__ == "__main__":
    key = jax.random.PRNGKey(0)
    kx, kx2, kp = jax.random.split(key, 3)
    # The fc layer requires 7*7*64 features, so the spatial size must be 28x28.
    params = init_params(kp)
    kernel_params = prepare_params(params)             # one-time weight refold

    fwd = jax.jit(forward)

    # small batch: single grid step (B == n)
    x = jax.random.normal(kx, (2, 1, 28, 28), jnp.float32)       # NCHW, like PyTorch
    out = jax.block_until_ready(fwd(x, kernel_params))
    assert out.shape == (2, 10) and out.dtype == jnp.float32
    ref = jax.block_until_ready(reference_forward(x, params))
    err = float(jnp.max(jnp.abs(out - ref)))
    assert jnp.allclose(out, ref, rtol=1e-3, atol=1e-3), f"mismatch (max abs err {err})"

    # batched path: 10 images -> padded to 16, 8 images per grid step, 2 parallel steps
    x2 = jax.random.normal(kx2, (10, 1, 28, 28), jnp.float32)
    out2 = jax.block_until_ready(fwd(x2, kernel_params))
    assert out2.shape == (10, 10)
    ref2 = jax.block_until_ready(reference_forward(x2, params))
    err2 = float(jnp.max(jnp.abs(out2 - ref2)))
    assert jnp.allclose(out2, ref2, rtol=1e-3, atol=1e-3), f"mismatch (max abs err {err2})"

    print("KERNEL_OK")
</pallas_src>

<mosaic_0001>
module attributes {stable_mosaic.version = 11 : i64} {
  func.func @_conv_stack_kernel(%arg0: i32, %arg1: memref<2x28x8x24xf32, #tpu.memory_space<vmem>>, %arg2: memref<24x128xf32, #tpu.memory_space<vmem>>, %arg3: memref<1x128xf32, #tpu.memory_space<vmem>>, %arg4: memref<384x128xf32, #tpu.memory_space<vmem>>, %arg5: memref<1x128xf32, #tpu.memory_space<vmem>>, %arg6: memref<2x7x8x64xf32, #tpu.memory_space<vmem>>) attributes {dimension_semantics = [#tpu.dimension_semantics<parallel>], iteration_bounds = array<i64: 1>, scalar_prefetch = 0 : i64, scratch_operands = 0 : i64, tpu.core_type = #tpu.core_type<tc>, window_params = [{transform_indices = @transform_0, window_bounds = array<i64: 2, 28, 8, 24>}, {pipeline_mode = #tpu.pipeline_mode<synchronous>, transform_indices = @transform_1, window_bounds = array<i64: 24, 128>}, {pipeline_mode = #tpu.pipeline_mode<synchronous>, transform_indices = @transform_2, window_bounds = array<i64: 1, 128>}, {pipeline_mode = #tpu.pipeline_mode<synchronous>, transform_indices = @transform_3, window_bounds = array<i64: 384, 128>}, {pipeline_mode = #tpu.pipeline_mode<synchronous>, transform_indices = @transform_4, window_bounds = array<i64: 1, 128>}, {transform_indices = @transform_5, window_bounds = array<i64: 2, 7, 8, 64>}]} {
    %c0 = arith.constant 0 : index
    %c0_0 = arith.constant 0 : index
    %c0_1 = arith.constant 0 : index
    %c0_2 = arith.constant 0 : index
    %0 = vector.load %arg1[%c0, %c0_0, %c0_1, %c0_2] : memref<2x28x8x24xf32, #tpu.memory_space<vmem>>, vector<2x28x8x24xf32>
    %1 = vector.shape_cast %0 : vector<2x28x8x24xf32> to vector<448x24xf32>
    %c0_3 = arith.constant 0 : index
    %c0_4 = arith.constant 0 : index
    %2 = vector.load %arg2[%c0_3, %c0_4] : memref<24x128xf32, #tpu.memory_space<vmem>>, vector<24x128xf32>
    %cst = arith.constant dense<0.000000e+00> : vector<448x128xf32>
    %3 = tpu.matmul %1, %2, %cst {dimension_numbers = #tpu.dot_dimension_numbers<[1], [0], [0], [1], [0, 0, 1, 1], [], []>} : vector<448x24xf32>, vector<24x128xf32>, vector<448x128xf32> -> vector<448x128xf32>
    %c0_5 = arith.constant 0 : index
    %c0_6 = arith.constant 0 : index
    %4 = vector.load %arg3[%c0_5, %c0_6] : memref<1x128xf32, #tpu.memory_space<vmem>>, vector<1x128xf32>
    %5 = vector.broadcast %4 : vector<1x128xf32> to vector<448x128xf32>
    %6 = arith.addf %3, %5 : vector<448x128xf32>
    %cst_7 = arith.constant 0.000000e+00 : f32
    %7 = vector.broadcast %cst_7 : f32 to vector<448x128xf32>
    %8 = arith.maximumf %6, %7 : vector<448x128xf32>
    %9 = vector.extract_strided_slice %8 {offsets = [0, 0], sizes = [448, 32], strides = [1, 1]} : vector<448x128xf32> to vector<448x32xf32>
    %10 = vector.extract_strided_slice %8 {offsets = [0, 32], sizes = [448, 32], strides = [1, 1]} : vector<448x128xf32> to vector<448x32xf32>
    %11 = arith.maximumf %9, %10 : vector<448x32xf32>
    %12 = vector.extract_strided_slice %8 {offsets = [0, 64], sizes = [448, 32], strides = [1, 1]} : vector<448x128xf32> to vector<448x32xf32>
    %13 = vector.extract_strided_slice %8 {offsets = [0, 96], sizes = [448, 32], strides = [1, 1]} : vector<448x128xf32> to vector<448x32xf32>
    %14 = arith.maximumf %12, %13 : vector<448x32xf32>
    %15 = tpu.iota {dimensions = array<i32: 2>} : vector<2x14x8x32xi32>
    %cst_8 = arith.constant 0.000000e+00 : f32
    %16 = vector.broadcast %cst_8 : f32 to vector<2x2x8x32xf32>
    %17 = vector.shape_cast %11 : vector<448x32xf32> to vector<2x14x2x8x32xf32>
    %cst_9 = arith.constant dense<0xFF800000> : vector<2x14x8x32xf32>
    %18 = vector.multi_reduction <maximumf>, %17, %cst_9 [2] : vector<2x14x2x8x32xf32> to vector<2x14x8x32xf32>
    %c7_i32 = arith.constant 7 : i32
    %19 = vector.broadcast %c7_i32 : i32 to vector<2x14x8x32xi32>
    %20 = arith.cmpi slt, %15, %19 : vector<2x14x8x32xi32>
    %cst_10 = arith.constant 0.000000e+00 : f32
    %21 = vector.broadcast %cst_10 : f32 to vector<2x14x8x32xf32>
    %22 = arith.select %20, %18, %21 : vector<2x14x8x32xi1>, vector<2x14x8x32xf32>
    %23 = tpu.concatenate %16, %22, %16 in 1 : vector<2x2x8x32xf32>, vector<2x14x8x32xf32>, vector<2x2x8x32xf32> -> vector<2x18x8x32xf32>
    %24 = vector.shape_cast %23 : vector<2x18x8x32xf32> to vector<2x144x32xf32>
    %25 = vector.shape_cast %14 : vector<448x32xf32> to vector<2x14x2x8x32xf32>
    %cst_11 = arith.constant dense<0xFF800000> : vector<2x14x8x32xf32>
    %26 = vector.multi_reduction <maximumf>, %25, %cst_11 [2] : vector<2x14x2x8x32xf32> to vector<2x14x8x32xf32>
    %c7_i32_12 = arith.constant 7 : i32
    %27 = vector.broadcast %c7_i32_12 : i32 to vector<2x14x8x32xi32>
    %28 = arith.cmpi slt, %15, %27 : vector<2x14x8x32xi32>
    %cst_13 = arith.constant 0.000000e+00 : f32
    %29 = vector.broadcast %cst_13 : f32 to vector<2x14x8x32xf32>
    %30 = arith.select %28, %26, %29 : vector<2x14x8x32xi1>, vector<2x14x8x32xf32>
    %31 = tpu.concatenate %16, %30, %16 in 1 : vector<2x2x8x32xf32>, vector<2x14x8x32xf32>, vector<2x2x8x32xf32> -> vector<2x18x8x32xf32>
    %32 = vector.shape_cast %31 : vector<2x18x8x32xf32> to vector<2x144x32xf32>
    %33 = vector.extract_strided_slice %32 {offsets = [0, 7, 0], sizes = [2, 112, 32], strides = [1, 1, 1]} : vector<2x144x32xf32> to vector<2x112x32xf32>
    %34 = vector.extract_strided_slice %24 {offsets = [0, 8, 0], sizes = [2, 112, 32], strides = [1, 1, 1]} : vector<2x144x32xf32> to vector<2x112x32xf32>
    %35 = vector.extract_strided_slice %32 {offsets = [0, 8, 0], sizes = [2, 112, 32], strides = [1, 1, 1]} : vector<2x144x32xf32> to vector<2x112x32xf32>
    %36 = vector.extract_strided_slice %24 {offsets = [0, 9, 0], sizes = [2, 112, 32], strides = [1, 1, 1]} : vector<2x144x32xf32> to vector<2x112x32xf32>
    %37 = vector.extract_strided_slice %32 {offsets = [0, 15, 0], sizes = [2, 112, 32], strides = [1, 1, 1]} : vector<2x144x32xf32> to vector<2x112x32xf32>
    %38 = vector.extract_strided_slice %24 {offsets = [0, 16, 0], sizes = [2, 112, 32], strides = [1, 1, 1]} : vector<2x144x32xf32> to vector<2x112x32xf32>
    %39 = vector.extract_strided_slice %32 {offsets = [0, 16, 0], sizes = [2, 112, 32], strides = [1, 1, 1]} : vector<2x144x32xf32> to vector<2x112x32xf32>
    %40 = vector.extract_strided_slice %24 {offsets = [0, 17, 0], sizes = [2, 112, 32], strides = [1, 1, 1]} : vector<2x144x32xf32> to vector<2x112x32xf32>
    %41 = vector.extract_strided_slice %32 {offsets = [0, 23, 0], sizes = [2, 112, 32], strides = [1, 1, 1]} : vector<2x144x32xf32> to vector<2x112x32xf32>
    %42 = vector.extract_strided_slice %24 {offsets = [0, 24, 0], sizes = [2, 112, 32], strides = [1, 1, 1]} : vector<2x144x32xf32> to vector<2x112x32xf32>
    %43 = vector.extract_strided_slice %32 {offsets = [0, 24, 0], sizes = [2, 112, 32], strides = [1, 1, 1]} : vector<2x144x32xf32> to vector<2x112x32xf32>
    %44 = vector.extract_strided_slice %24 {offsets = [0, 25, 0], sizes = [2, 112, 32], strides = [1, 1, 1]} : vector<2x144x32xf32> to vector<2x112x32xf32>
    %45 = tpu.concatenate %33, %34, %35, %36, %37, %38, %39, %40, %41, %42, %43, %44 in 2 : vector<2x112x32xf32>, vector<2x112x32xf32>, vector<2x112x32xf32>, vector<2x112x32xf32>, vector<2x112x32xf32>, vector<2x112x32xf32>, vector<2x112x32xf32>, vector<2x112x32xf32>, vector<2x112x32xf32>, vector<2x112x32xf32>, vector<2x112x32xf32>, vector<2x112x32xf32> -> vector<2x112x384xf32>
    %46 = vector.shape_cast %45 : vector<2x112x384xf32> to vector<224x384xf32>
    %c0_14 = arith.constant 0 : index
    %c0_15 = arith.constant 0 : index
    %47 = vector.load %arg4[%c0_14, %c0_15] : memref<384x128xf32, #tpu.memory_space<vmem>>, vector<384x128xf32>
    %cst_16 = arith.constant dense<0.000000e+00> : vector<224x128xf32>
    %48 = tpu.matmul %46, %47, %cst_16 {dimension_numbers = #tpu.dot_dimension_numbers<[1], [0], [0], [1], [0, 0, 1, 1], [], []>} : vector<224x384xf32>, vector<384x128xf32>, vector<224x128xf32> -> vector<224x128xf32>
    %c0_17 = arith.constant 0 : index
    %c0_18 = arith.constant 0 : index
    %49 = vector.load %arg5[%c0_17, %c0_18] : memref<1x128xf32, #tpu.memory_space<vmem>>, vector<1x128xf32>
    %50 = vector.broadcast %49 : vector<1x128xf32> to vector<224x128xf32>
    %51 = arith.addf %48, %50 : vector<224x128xf32>
    %cst_19 = arith.constant 0.000000e+00 : f32
    %52 = vector.broadcast %cst_19 : f32 to vector<224x128xf32>
    %53 = arith.maximumf %51, %52 : vector<224x128xf32>
    %54 = vector.extract_strided_slice %53 {offsets = [0, 0], sizes = [224, 64], strides = [1, 1]} : vector<224x128xf32> to vector<224x64xf32>
    %55 = vector.extract_strided_slice %53 {offsets = [0, 64], sizes = [224, 64], strides = [1, 1]} : vector<224x128xf32> to vector<224x64xf32>
    %56 = arith.maximumf %54, %55 : vector<224x64xf32>
    %57 = vector.shape_cast %56 : vector<224x64xf32> to vector<2x7x2x8x64xf32>
    %cst_20 = arith.constant dense<0xFF800000> : vector<2x7x8x64xf32>
    %58 = vector.multi_reduction <maximumf>, %57, %cst_20 [2] : vector<2x7x2x8x64xf32> to vector<2x7x8x64xf32>
    %c0_21 = arith.constant 0 : index
    %c0_22 = arith.constant 0 : index
    %c0_23 = arith.constant 0 : index
    %c0_24 = arith.constant 0 : index
    %59 = vector.load %arg6[%c0_21, %c0_22, %c0_23, %c0_24] : memref<2x7x8x64xf32, #tpu.memory_space<vmem>>, vector<2x7x8x64xf32>
    tpu.vector_store %arg6[%c0_21, %c0_22, %c0_23, %c0_24], %58 {strides = array<i32>} : memref<2x7x8x64xf32, #tpu.memory_space<vmem>>, vector<2x7x8x64xf32>,
    return
  }
  func.func @transform_0(%arg0: i32) -> (i32, i32, i32, i32) {
    %c0_i32 = arith.constant 0 : i32
    %c0_i32_0 = arith.constant 0 : i32
    %c0_i32_1 = arith.constant 0 : i32
    %c0_i32_2 = arith.constant 0 : i32
    return %arg0, %c0_i32, %c0_i32_0, %c0_i32_1 : i32, i32, i32, i32
  }
  func.func @transform_1(%arg0: i32) -> (i32, i32) {
    %c0_i32 = arith.constant 0 : i32
    %c0_i32_0 = arith.constant 0 : i32
    %c0_i32_1 = arith.constant 0 : i32
    return %c0_i32, %c0_i32_0 : i32, i32
  }
  func.func @transform_2(%arg0: i32) -> (i32, i32) {
    %c0_i32 = arith.constant 0 : i32
    %c0_i32_0 = arith.constant 0 : i32
    %c0_i32_1 = arith.constant 0 : i32
    return %c0_i32, %c0_i32_0 : i32, i32
  }
  func.func @transform_3(%arg0: i32) -> (i32, i32) {
    %c0_i32 = arith.constant 0 : i32
    %c0_i32_0 = arith.constant 0 : i32
    %c0_i32_1 = arith.constant 0 : i32
    return %c0_i32, %c0_i32_0 : i32, i32
  }
  func.func @transform_4(%arg0: i32) -> (i32, i32) {
    %c0_i32 = arith.constant 0 : i32
    %c0_i32_0 = arith.constant 0 : i32
    %c0_i32_1 = arith.constant 0 : i32
    return %c0_i32, %c0_i32_0 : i32, i32
  }
  func.func @transform_5(%arg0: i32) -> (i32, i32, i32, i32) {
    %c0_i32 = arith.constant 0 : i32
    %c0_i32_0 = arith.constant 0 : i32
    %c0_i32_1 = arith.constant 0 : i32
    %c0_i32_2 = arith.constant 0 : i32
    return %arg0, %c0_i32, %c0_i32_0, %c0_i32_1 : i32, i32, i32, i32
  }
}

module attributes {stable_mosaic.version = 11 : i64} {
  func.func @_fc_kernel(%arg0: i32, %arg1: memref<2x3584xf32, #tpu.memory_space<vmem>>, %arg2: memref<3584x128xf32, #tpu.memory_space<vmem>>, %arg3: memref<1x128xf32, #tpu.memory_space<vmem>>, %arg4: memref<2x128xf32, #tpu.memory_space<vmem>>) attributes {dimension_semantics = [#tpu.dimension_semantics<parallel>], iteration_bounds = array<i64: 1>, scalar_prefetch = 0 : i64, scratch_operands = 0 : i64, tpu.core_type = #tpu.core_type<tc>, window_params = [{transform_indices = @transform_0, window_bounds = array<i64: 2, 3584>}, {pipeline_mode = #tpu.pipeline_mode<synchronous>, transform_indices = @transform_1, window_bounds = array<i64: 3584, 128>}, {pipeline_mode = #tpu.pipeline_mode<synchronous>, transform_indices = @transform_2, window_bounds = array<i64: 1, 128>}, {transform_indices = @transform_3, window_bounds = array<i64: 2, 128>}]} {
    %c0 = arith.constant 0 : index
    %c0_0 = arith.constant 0 : index
    %0 = vector.load %arg1[%c0, %c0_0] : memref<2x3584xf32, #tpu.memory_space<vmem>>, vector<2x3584xf32>
    %c0_1 = arith.constant 0 : index
    %c0_2 = arith.constant 0 : index
    %1 = vector.load %arg2[%c0_1, %c0_2] : memref<3584x128xf32, #tpu.memory_space<vmem>>, vector<3584x128xf32>
    %cst = arith.constant dense<0.000000e+00> : vector<2x128xf32>
    %2 = tpu.matmul %0, %1, %cst {dimension_numbers = #tpu.dot_dimension_numbers<[1], [0], [0], [1], [0, 0, 1, 1], [], []>} : vector<2x3584xf32>, vector<3584x128xf32>, vector<2x128xf32> -> vector<2x128xf32>
    %c0_3 = arith.constant 0 : index
    %c0_4 = arith.constant 0 : index
    %3 = vector.load %arg3[%c0_3, %c0_4] : memref<1x128xf32, #tpu.memory_space<vmem>>, vector<1x128xf32>
    %4 = vector.broadcast %3 : vector<1x128xf32> to vector<2x128xf32>
    %5 = arith.addf %2, %4 : vector<2x128xf32>
    %c0_5 = arith.constant 0 : index
    %c0_6 = arith.constant 0 : index
    %6 = vector.load %arg4[%c0_5, %c0_6] : memref<2x128xf32, #tpu.memory_space<vmem>>, vector<2x128xf32>
    tpu.vector_store %arg4[%c0_5, %c0_6], %5 {strides = array<i32>} : memref<2x128xf32, #tpu.memory_space<vmem>>, vector<2x128xf32>,
    return
  }
  func.func @transform_0(%arg0: i32) -> (i32, i32) {
    %c0_i32 = arith.constant 0 : i32
    %c0_i32_0 = arith.constant 0 : i32
    return %arg0, %c0_i32 : i32, i32
  }
  func.func @transform_1(%arg0: i32) -> (i32, i32) {
    %c0_i32 = arith.constant 0 : i32
    %c0_i32_0 = arith.constant 0 : i32
    %c0_i32_1 = arith.constant 0 : i32
    return %c0_i32, %c0_i32_0 : i32, i32
  }
  func.func @transform_2(%arg0: i32) -> (i32, i32) {
    %c0_i32 = arith.constant 0 : i32
    %c0_i32_0 = arith.constant 0 : i32
    %c0_i32_1 = arith.constant 0 : i32
    return %c0_i32, %c0_i32_0 : i32, i32
  }
  func.func @transform_3(%arg0: i32) -> (i32, i32) {
    %c0_i32 = arith.constant 0 : i32
    %c0_i32_0 = arith.constant 0 : i32
    return %arg0, %c0_i32 : i32, i32
  }
}

</mosaic_0001>

<llo_original>
// kernel: forward.3
$region0: #{forward.3}
  #allocation0 [shape = 'u32[]', space=smem, size = 0x4, offset = 0x4, fixed_abs, tag = 'smem constant byte address 0x4 - core index']
  #allocation1 [shape = 'u32[144,128]{1,0:T(1,128)}', space=vmem, size = 0x12000, scoped, tag = 'internal scratch']
  %s0 = inlined_call_operand.vmem [shape: f32[2,3584], index: 0, kind: input, shape index: {}]
  %s1 = inlined_call_operand.vmem [shape: f32[3584,128], index: 1, kind: input, shape index: {}]
  %s2 = inlined_call_operand.vmem [shape: f32[1,128], index: 2, kind: input, shape index: {}]
  %s3 = inlined_call_operand.hbm [shape: f32[2,128], index: 3, kind: output, shape index: {}]
  %s4 = sld [smem:[#allocation0]]
  $region22: #{forward.3} parent=0
    _
  %s6 = ssub.s32 1, %s4
  %s7 = scalar_select 0, %s6, %s4
  $region1: #{forward.3} parent=0
    #allocation2 [shape = 'u8[1024]{0}', space=vmem, size = 0x400, scoped, tag = 'output window, operand 0, single buffered']
    #allocation3 [shape = 's32[1]{0}', space=sflag, size = 0x4, scoped, tag = 'scoped memory for forward.3']
    %8 = vsyncpa [#allocation3], 0
    // Predicated region
    $region2: #{forward.3} parent=1 // pred_check
      _
    $region3: #{forward.3} parent=1 // pred_check_branch
      %10 = sbr.rel (0) target = $region5
    $region4: #{forward.3} parent=1 // pred_region
      _
    $region5: #{forward.3} parent=1 // pred_fallthru
      _
    // Predicated region
    $region6: #{forward.3} parent=1 // pred_check
      _
    $region7: #{forward.3} parent=1 // pred_check_branch
      %12 = sbr.rel (0) target = $region9
    $region8: #{forward.3} parent=1 // pred_region
      _
    $region9: #{forward.3} parent=1 // pred_fallthru
      _
    // Predicated region
    $region10: #{forward.3} parent=1 // pred_check
      _
    $region11: #{forward.3} parent=1 // pred_check_branch
      %14 = sbr.rel (0) target = $region13
    $region12: #{forward.3} parent=1 // pred_region
      _
    $region13: #{forward.3} parent=1 // pred_fallthru
      _
    %v15 = vld [vmem:[%s0] sm:$0xff]
    %v16 = vld [vmem:[%s0 + $0x8] sm:$0xff]
    %v17 = vld [vmem:[%s0 + $0x10] sm:$0xff]
    %v18 = vld [vmem:[%s0 + $0x18] sm:$0xff]
    %v19 = vld [vmem:[%s0 + $0x20] sm:$0xff]
    %v20 = vld [vmem:[%s0 + $0x28] sm:$0xff]
    %v21 = vld [vmem:[%s0 + $0x30] sm:$0xff]
    %v22 = vld [vmem:[%s1] sm:$0xff]
    %v23 = vld [vmem:[%s1 + $0x8] sm:$0xff]
    %v24 = vld [vmem:[%s1 + $0x10] sm:$0xff]
    %v25 = vld [vmem:[%s1 + $0x18] sm:$0xff]
    %v26 = vld [vmem:[%s1 + $0x20] sm:$0xff]
    %v27 = vld [vmem:[%s1 + $0x28] sm:$0xff]
    %v28 = vld [vmem:[%s1 + $0x30] sm:$0xff]
    %v29 = vld [vmem:[%s1 + $0x38] sm:$0xff]
    %v30 = vld [vmem:[%s1 + $0x40] sm:$0xff]
    %v31 = vld [vmem:[%s1 + $0x48] sm:$0xff]
    %v32 = vld [vmem:[%s1 + $0x50] sm:$0xff]
    %v33 = vld [vmem:[%s1 + $0x58] sm:$0xff]
    %v34 = vld [vmem:[%s1 + $0x60] sm:$0xff]
    %v35 = vld [vmem:[%s1 + $0x68] sm:$0xff]
    %v36 = vld [vmem:[%s1 + $0x70] sm:$0xff]
    %v37 = vld [vmem:[%s1 + $0x78] sm:$0xff]
    %v38 = vld [vmem:[%s1 + $0x80] sm:$0xff]
    %v39 = vld [vmem:[%s1 + $0x88] sm:$0xff]
    %v40 = vld [vmem:[%s1 + $0x90] sm:$0xff]
    %v41 = vld [vmem:[%s1 + $0x98] sm:$0xff]
    %v42 = vld [vmem:[%s1 + $0xa0] sm:$0xff]
    %v43 = vld [vmem:[%s1 + $0xa8] sm:$0xff]
    %v44 = vld [vmem:[%s1 + $0xb0] sm:$0xff]
    %v45 = vld [vmem:[%s1 + $0xb8] sm:$0xff]
    %v46 = vld [vmem:[%s1 + $0xc0] sm:$0xff]
    %v47 = vld [vmem:[%s1 + $0xc8] sm:$0xff]
    %v48 = vld [vmem:[%s1 + $0xd0] sm:$0xff]
    %v49 = vld [vmem:[%s1 + $0xd8] sm:$0xff]
    %v50 = vld [vmem:[%s1 + $0xe0] sm:$0xff]
    %v51 = vld [vmem:[%s1 + $0xe8] sm:$0xff]
    %v52 = vld [vmem:[%s1 + $0xf0] sm:$0xff]
    %v53 = vld [vmem:[%s1 + $0xf8] sm:$0xff]
    %v54 = vld [vmem:[%s1 + $0x100] sm:$0xff]
    %v55 = vld [vmem:[%s1 + $0x108] sm:$0xff]
    %v56 = vld [vmem:[%s1 + $0x110] sm:$0xff]
    %v57 = vld [vmem:[%s1 + $0x118] sm:$0xff]
    %v58 = vld [vmem:[%s1 + $0x120] sm:$0xff]
    %v59 = vld [vmem:[%s1 + $0x128] sm:$0xff]
    %v60 = vld [vmem:[%s1 + $0x130] sm:$0xff]
    %v61 = vld [vmem:[%s1 + $0x138] sm:$0xff]
    %v62 = vld [vmem:[%s1 + $0x140] sm:$0xff]
    %v63 = vld [vmem:[%s1 + $0x148] sm:$0xff]
    %v64 = vld [vmem:[%s1 + $0x150] sm:$0xff]
    %v65 = vld [vmem:[%s1 + $0x158] sm:$0xff]
    %v66 = vld [vmem:[%s1 + $0x160] sm:$0xff]
    %v67 = vld [vmem:[%s1 + $0x168] sm:$0xff]
    %v68 = vld [vmem:[%s1 + $0x170] sm:$0xff]
    %v69 = vld [vmem:[%s1 + $0x178] sm:$0xff]
    %v70 = vld [vmem:[%s1 + $0x180] sm:$0xff]
    %v71 = vld [vmem:[%s1 + $0x188] sm:$0xff]
    %v72 = vld [vmem:[%s1 + $0x190] sm:$0xff]
    %v73 = vld [vmem:[%s1 + $0x198] sm:$0xff]
    %v74 = vld [vmem:[%s1 + $0x1a0] sm:$0xff]
    %v75 = vld [vmem:[%s1 + $0x1a8] sm:$0xff]
    %v76 = vld [vmem:[%s1 + $0x1b0] sm:$0xff]
    %v77 = vld [vmem:[%s1 + $0x1b8] sm:$0xff]
    %v78 = vld [vmem:[%s1 + $0x1c0] sm:$0xff]
    %v79 = vld [vmem:[%s1 + $0x1c8] sm:$0xff]
    %v80 = vld [vmem:[%s1 + $0x1d0] sm:$0xff]
    %v81 = vld [vmem:[%s1 + $0x1d8] sm:$0xff]
    %v82 = vld [vmem:[%s1 + $0x1e0] sm:$0xff]
    %v83 = vld [vmem:[%s1 + $0x1e8] sm:$0xff]
    %v84 = vld [vmem:[%s1 + $0x1f0] sm:$0xff]
    %v85 = vld [vmem:[%s1 + $0x1f8] sm:$0xff]
    %v86 = vld [vmem:[%s1 + $0x200] sm:$0xff]
    %v87 = vld [vmem:[%s1 + $0x208] sm:$0xff]
    %v88 = vld [vmem:[%s1 + $0x210] sm:$0xff]
    %v89 = vld [vmem:[%s1 + $0x218] sm:$0xff]
    %v90 = vld [vmem:[%s1 + $0x220] sm:$0xff]
    %v91 = vld [vmem:[%s1 + $0x228] sm:$0xff]
    %v92 = vld [vmem:[%s1 + $0x230] sm:$0xff]
    %v93 = vld [vmem:[%s1 + $0x238] sm:$0xff]
    %v94 = vld [vmem:[%s1 + $0x240] sm:$0xff]
    %v95 = vld [vmem:[%s1 + $0x248] sm:$0xff]
    %v96 = vld [vmem:[%s1 + $0x250] sm:$0xff]
    %v97 = vld [vmem:[%s1 + $0x258] sm:$0xff]
    %v98 = vld [vmem:[%s1 + $0x260] sm:$0xff]
    %v99 = vld [vmem:[%s1 + $0x268] sm:$0xff]
    %v100 = vld [vmem:[%s1 + $0x270] sm:$0xff]
    %v101 = vld [vmem:[%s1 + $0x278] sm:$0xff]
    %v102 = vld [vmem:[%s1 + $0x280] sm:$0xff]
    %v103 = vld [vmem:[%s1 + $0x288] sm:$0xff]
    %v104 = vld [vmem:[%s1 + $0x290] sm:$0xff]
    %v105 = vld [vmem:[%s1 + $0x298] sm:$0xff]
    %v106 = vld [vmem:[%s1 + $0x2a0] sm:$0xff]
    %v107 = vld [vmem:[%s1 + $0x2a8] sm:$0xff]
    %v108 = vld [vmem:[%s1 + $0x2b0] sm:$0xff]
    %v109 = vld [vmem:[%s1 + $0x2b8] sm:$0xff]
    %v110 = vld [vmem:[%s1 + $0x2c0] sm:$0xff]
    %v111 = vld [vmem:[%s1 + $0x2c8] sm:$0xff]
    %v112 = vld [vmem:[%s1 + $0x2d0] sm:$0xff]
    %v113 = vld [vmem:[%s1 + $0x2d8] sm:$0xff]
    %v114 = vld [vmem:[%s1 + $0x2e0] sm:$0xff]
    %v115 = vld [vmem:[%s1 + $0x2e8] sm:$0xff]
    %v116 = vld [vmem:[%s1 + $0x2f0] sm:$0xff]
    %v117 = vld [vmem:[%s1 + $0x2f8] sm:$0xff]
    %v118 = vld [vmem:[%s1 + $0x300] sm:$0xff]
    %v119 = vld [vmem:[%s1 + $0x308] sm:$0xff]
    %v120 = vld [vmem:[%s1 + $0x310] sm:$0xff]
    %v121 = vld [vmem:[%s1 + $0x318] sm:$0xff]
    %v122 = vld [vmem:[%s1 + $0x320] sm:$0xff]
    %v123 = vld [vmem:[%s1 + $0x328] sm:$0xff]
    %v124 = vld [vmem:[%s1 + $0x330] sm:$0xff]
    %v125 = vld [vmem:[%s1 + $0x338] sm:$0xff]
    %v126 = vld [vmem:[%s1 + $0x340] sm:$0xff]
    %v127 = vld [vmem:[%s1 + $0x348] sm:$0xff]
    %v128 = vld [vmem:[%s1 + $0x350] sm:$0xff]
    %v129 = vld [vmem:[%s1 + $0x358] sm:$0xff]
    %v130 = vld [vmem:[%s1 + $0x360] sm:$0xff]
    %v131 = vld [vmem:[%s1 + $0x368] sm:$0xff]
    %v132 = vld [vmem:[%s1 + $0x370] sm:$0xff]
    %v133 = vld [vmem:[%s1 + $0x378] sm:$0xff]
    %v134 = vld [vmem:[%s1 + $0x380] sm:$0xff]
    %v135 = vld [vmem:[%s1 + $0x388] sm:$0xff]
    %v136 = vld [vmem:[%s1 + $0x390] sm:$0xff]
    %v137 = vld [vmem:[%s1 + $0x398] sm:$0xff]
    %v138 = vld [vmem:[%s1 + $0x3a0] sm:$0xff]
    %v139 = vld [vmem:[%s1 + $0x3a8] sm:$0xff]
    %v140 = vld [vmem:[%s1 + $0x3b0] sm:$0xff]
    %v141 = vld [vmem:[%s1 + $0x3b8] sm:$0xff]
    %v142 = vld [vmem:[%s1 + $0x3c0] sm:$0xff]
    %v143 = vld [vmem:[%s1 + $0x3c8] sm:$0xff]
    %v144 = vld [vmem:[%s1 + $0x3d0] sm:$0xff]
    %v145 = vld [vmem:[%s1 + $0x3d8] sm:$0xff]
    %v146 = vld [vmem:[%s1 + $0x3e0] sm:$0xff]
    %v147 = vld [vmem:[%s1 + $0x3e8] sm:$0xff]
    %v148 = vld [vmem:[%s1 + $0x3f0] sm:$0xff]
    %v149 = vld [vmem:[%s1 + $0x3f8] sm:$0xff]
    %v150 = vld [vmem:[%s1 + $0x400] sm:$0xff]
    %v151 = vld [vmem:[%s1 + $0x408] sm:$0xff]
    %v152 = vld [vmem:[%s1 + $0x410] sm:$0xff]
    %v153 = vld [vmem:[%s1 + $0x418] sm:$0xff]
    %v154 = vld [vmem:[%s1 + $0x420] sm:$0xff]
    %v155 = vld [vmem:[%s1 + $0x428] sm:$0xff]
    %v156 = vld [vmem:[%s1 + $0x430] sm:$0xff]
    %v157 = vld [vmem:[%s1 + $0x438] sm:$0xff]
    %v158 = vld [vmem:[%s1 + $0x440] sm:$0xff]
    %v159 = vld [vmem:[%s1 + $0x448] sm:$0xff]
    %v160 = vld [vmem:[%s1 + $0x450] sm:$0xff]
    %v161 = vld [vmem:[%s1 + $0x458] sm:$0xff]
    %v162 = vld [vmem:[%s1 + $0x460] sm:$0xff]
    %v163 = vld [vmem:[%s1 + $0x468] sm:$0xff]
    %v164 = vld [vmem:[%s1 + $0x470] sm:$0xff]
    %v165 = vld [vmem:[%s1 + $0x478] sm:$0xff]
    %v166 = vld [vmem:[%s1 + $0x480] sm:$0xff]
    %v167 = vld [vmem:[%s1 + $0x488] sm:$0xff]
    %v168 = vld [vmem:[%s1 + $0x490] sm:$0xff]
    %v169 = vld [vmem:[%s1 + $0x498] sm:$0xff]
    %v170 = vld [vmem:[%s1 + $0x4a0] sm:$0xff]
    %v171 = vld [vmem:[%s1 + $0x4a8] sm:$0xff]
    %v172 = vld [vmem:[%s1 + $0x4b0] sm:$0xff]
    %v173 = vld [vmem:[%s1 + $0x4b8] sm:$0xff]
    %v174 = vld [vmem:[%s1 + $0x4c0] sm:$0xff]
    %v175 = vld [vmem:[%s1 + $0x4c8] sm:$0xff]
    %v176 = vld [vmem:[%s1 + $0x4d0] sm:$0xff]
    %v177 = vld [vmem:[%s1 + $0x4d8] sm:$0xff]
    %v178 = vld [vmem:[%s1 + $0x4e0] sm:$0xff]
    %v179 = vld [vmem:[%s1 + $0x4e8] sm:$0xff]
    %v180 = vld [vmem:[%s1 + $0x4f0] sm:$0xff]
    %v181 = vld [vmem:[%s1 + $0x4f8] sm:$0xff]
    %v182 = vld [vmem:[%s1 + $0x500] sm:$0xff]
    %v183 = vld [vmem:[%s1 + $0x508] sm:$0xff]
    %v184 = vld [vmem:[%s1 + $0x510] sm:$0xff]
    %v185 = vld [vmem:[%s1 + $0x518] sm:$0xff]
    %v186 = vld [vmem:[%s1 + $0x520] sm:$0xff]
    %v187 = vld [vmem:[%s1 + $0x528] sm:$0xff]
    %v188 = vld [vmem:[%s1 + $0x530] sm:$0xff]
    %v189 = vld [vmem:[%s1 + $0x538] sm:$0xff]
    %v190 = vld [vmem:[%s1 + $0x540] sm:$0xff]
    %v191 = vld [vmem:[%s1 + $0x548] sm:$0xff]
    %v192 = vld [vmem:[%s1 + $0x550] sm:$0xff]
    %v193 = vld [vmem:[%s1 + $0x558] sm:$0xff]
    %v194 = vld [vmem:[%s1 + $0x560] sm:$0xff]
    %v195 = vld [vmem:[%s1 + $0x568] sm:$0xff]
    %v196 = vld [vmem:[%s1 + $0x570] sm:$0xff]
    %v197 = vld [vmem:[%s1 + $0x578] sm:$0xff]
    %v198 = vld [vmem:[%s1 + $0x580] sm:$0xff]
    %v199 = vld [vmem:[%s1 + $0x588] sm:$0xff]
    %v200 = vld [vmem:[%s1 + $0x590] sm:$0xff]
    %v201 = vld [vmem:[%s1 + $0x598] sm:$0xff]
    %v202 = vld [vmem:[%s1 + $0x5a0] sm:$0xff]
    %v203 = vld [vmem:[%s1 + $0x5a8] sm:$0xff]
    %v204 = vld [vmem:[%s1 + $0x5b0] sm:$0xff]
    %v205 = vld [vmem:[%s1 + $0x5b8] sm:$0xff]
    %v206 = vld [vmem:[%s1 + $0x5c0] sm:$0xff]
    %v207 = vld [vmem:[%s1 + $0x5c8] sm:$0xff]
    %v208 = vld [vmem:[%s1 + $0x5d0] sm:$0xff]
    %v209 = vld [vmem:[%s1 + $0x5d8] sm:$0xff]
    %v210 = vld [vmem:[%s1 + $0x5e0] sm:$0xff]
    %v211 = vld [vmem:[%s1 + $0x5e8] sm:$0xff]
    %v212 = vld [vmem:[%s1 + $0x5f0] sm:$0xff]
    %v213 = vld [vmem:[%s1 + $0x5f8] sm:$0xff]
    %v214 = vld [vmem:[%s1 + $0x600] sm:$0xff]
    %v215 = vld [vmem:[%s1 + $0x608] sm:$0xff]
    %v216 = vld [vmem:[%s1 + $0x610] sm:$0xff]
    %v217 = vld [vmem:[%s1 + $0x618] sm:$0xff]
    %v218 = vld [vmem:[%s1 + $0x620] sm:$0xff]
    %v219 = vld [vmem:[%s1 + $0x628] sm:$0xff]
    %v220 = vld [vmem:[%s1 + $0x630] sm:$0xff]
    %v221 = vld [vmem:[%s1 + $0x638] sm:$0xff]
    %v222 = vld [vmem:[%s1 + $0x640] sm:$0xff]
    %v223 = vld [vmem:[%s1 + $0x648] sm:$0xff]
    %v224 = vld [vmem:[%s1 + $0x650] sm:$0xff]
    %v225 = vld [vmem:[%s1 + $0x658] sm:$0xff]
    %v226 = vld [vmem:[%s1 + $0x660] sm:$0xff]
    %v227 = vld [vmem:[%s1 + $0x668] sm:$0xff]
    %v228 = vld [vmem:[%s1 + $0x670] sm:$0xff]
    %v229 = vld [vmem:[%s1 + $0x678] sm:$0xff]
    %v230 = vld [vmem:[%s1 + $0x680] sm:$0xff]
    %v231 = vld [vmem:[%s1 + $0x688] sm:$0xff]
    %v232 = vld [vmem:[%s1 + $0x690] sm:$0xff]
    %v233 = vld [vmem:[%s1 + $0x698] sm:$0xff]
    %v234 = vld [vmem:[%s1 + $0x6a0] sm:$0xff]
    %v235 = vld [vmem:[%s1 + $0x6a8] sm:$0xff]
    %v236 = vld [vmem:[%s1 + $0x6b0] sm:$0xff]
    %v237 = vld [vmem:[%s1 + $0x6b8] sm:$0xff]
    %v238 = vld [vmem:[%s1 + $0x6c0] sm:$0xff]
    %v239 = vld [vmem:[%s1 + $0x6c8] sm:$0xff]
    %v240 = vld [vmem:[%s1 + $0x6d0] sm:$0xff]
    %v241 = vld [vmem:[%s1 + $0x6d8] sm:$0xff]
    %v242 = vld [vmem:[%s1 + $0x6e0] sm:$0xff]
    %v243 = vld [vmem:[%s1 + $0x6e8] sm:$0xff]
    %v244 = vld [vmem:[%s1 + $0x6f0] sm:$0xff]
    %v245 = vld [vmem:[%s1 + $0x6f8] sm:$0xff]
    %v246 = vld [vmem:[%s1 + $0x700] sm:$0xff]
    %v247 = vld [vmem:[%s1 + $0x708] sm:$0xff]
    %v248 = vld [vmem:[%s1 + $0x710] sm:$0xff]
    %v249 = vld [vmem:[%s1 + $0x718] sm:$0xff]
    %v250 = vld [vmem:[%s1 + $0x720] sm:$0xff]
    %v251 = vld [vmem:[%s1 + $0x728] sm:$0xff]
    %v252 = vld [vmem:[%s1 + $0x730] sm:$0xff]
    %v253 = vld [vmem:[%s1 + $0x738] sm:$0xff]
    %v254 = vld [vmem:[%s1 + $0x740] sm:$0xff]
    %v255 = vld [vmem:[%s1 + $0x748] sm:$0xff]
    %v256 = vld [vmem:[%s1 + $0x750] sm:$0xff]
    %v257 = vld [vmem:[%s1 + $0x758] sm:$0xff]
    %v258 = vld [vmem:[%s1 + $0x760] sm:$0xff]
    %v259 = vld [vmem:[%s1 + $0x768] sm:$0xff]
    %v260 = vld [vmem:[%s1 + $0x770] sm:$0xff]
    %v261 = vld [vmem:[%s1 + $0x778] sm:$0xff]
    %v262 = vld [vmem:[%s1 + $0x780] sm:$0xff]
    %v263 = vld [vmem:[%s1 + $0x788] sm:$0xff]
    %v264 = vld [vmem:[%s1 + $0x790] sm:$0xff]
    %v265 = vld [vmem:[%s1 + $0x798] sm:$0xff]
    %v266 = vld [vmem:[%s1 + $0x7a0] sm:$0xff]
    %v267 = vld [vmem:[%s1 + $0x7a8] sm:$0xff]
    %v268 = vld [vmem:[%s1 + $0x7b0] sm:$0xff]
    %v269 = vld [vmem:[%s1 + $0x7b8] sm:$0xff]
    %v270 = vld [vmem:[%s1 + $0x7c0] sm:$0xff]
    %v271 = vld [vmem:[%s1 + $0x7c8] sm:$0xff]
    %v272 = vld [vmem:[%s1 + $0x7d0] sm:$0xff]
    %v273 = vld [vmem:[%s1 + $0x7d8] sm:$0xff]
    %v274 = vld [vmem:[%s1 + $0x7e0] sm:$0xff]
    %v275 = vld [vmem:[%s1 + $0x7e8] sm:$0xff]
    %v276 = vld [vmem:[%s1 + $0x7f0] sm:$0xff]
    %v277 = vld [vmem:[%s1 + $0x7f8] sm:$0xff]
    %v278 = vld [vmem:[%s1 + $0x800] sm:$0xff]
    %v279 = vld [vmem:[%s1 + $0x808] sm:$0xff]
    %v280 = vld [vmem:[%s1 + $0x810] sm:$0xff]
    %v281 = vld [vmem:[%s1 + $0x818] sm:$0xff]
    %v282 = vld [vmem:[%s1 + $0x820] sm:$0xff]
    %v283 = vld [vmem:[%s1 + $0x828] sm:$0xff]
    %v284 = vld [vmem:[%s1 + $0x830] sm:$0xff]
    %v285 = vld [vmem:[%s1 + $0x838] sm:$0xff]
    %v286 = vld [vmem:[%s1 + $0x840] sm:$0xff]
    %v287 = vld [vmem:[%s1 + $0x848] sm:$0xff]
    %v288 = vld [vmem:[%s1 + $0x850] sm:$0xff]
    %v289 = vld [vmem:[%s1 + $0x858] sm:$0xff]
    %v290 = vld [vmem:[%s1 + $0x860] sm:$0xff]
    %v291 = vld [vmem:[%s1 + $0x868] sm:$0xff]
    %v292 = vld [vmem:[%s1 + $0x870] sm:$0xff]
    %v293 = vld [vmem:[%s1 + $0x878] sm:$0xff]
    %v294 = vld [vmem:[%s1 + $0x880] sm:$0xff]
    %v295 = vld [vmem:[%s1 + $0x888] sm:$0xff]
    %v296 = vld [vmem:[%s1 + $0x890] sm:$0xff]
    %v297 = vld [vmem:[%s1 + $0x898] sm:$0xff]
    %v298 = vld [vmem:[%s1 + $0x8a0] sm:$0xff]
    %v299 = vld [vmem:[%s1 + $0x8a8] sm:$0xff]
    %v300 = vld [vmem:[%s1 + $0x8b0] sm:$0xff]
    %v301 = vld [vmem:[%s1 + $0x8b8] sm:$0xff]
    %v302 = vld [vmem:[%s1 + $0x8c0] sm:$0xff]
    %v303 = vld [vmem:[%s1 + $0x8c8] sm:$0xff]
    %v304 = vld [vmem:[%s1 + $0x8d0] sm:$0xff]
    %v305 = vld [vmem:[%s1 + $0x8d8] sm:$0xff]
    %v306 = vld [vmem:[%s1 + $0x8e0] sm:$0xff]
    %v307 = vld [vmem:[%s1 + $0x8e8] sm:$0xff]
    %v308 = vld [vmem:[%s1 + $0x8f0] sm:$0xff]
    %v309 = vld [vmem:[%s1 + $0x8f8] sm:$0xff]
    %v310 = vld [vmem:[%s1 + $0x900] sm:$0xff]
    %v311 = vld [vmem:[%s1 + $0x908] sm:$0xff]
    %v312 = vld [vmem:[%s1 + $0x910] sm:$0xff]
    %v313 = vld [vmem:[%s1 + $0x918] sm:$0xff]
    %v314 = vld [vmem:[%s1 + $0x920] sm:$0xff]
    %v315 = vld [vmem:[%s1 + $0x928] sm:$0xff]
    %v316 = vld [vmem:[%s1 + $0x930] sm:$0xff]
    %v317 = vld [vmem:[%s1 + $0x938] sm:$0xff]
    %v318 = vld [vmem:[%s1 + $0x940] sm:$0xff]
    %v319 = vld [vmem:[%s1 + $0x948] sm:$0xff]
    %v320 = vld [vmem:[%s1 + $0x950] sm:$0xff]
    %v321 = vld [vmem:[%s1 + $0x958] sm:$0xff]
    %v322 = vld [vmem:[%s1 + $0x960] sm:$0xff]
    %v323 = vld [vmem:[%s1 + $0x968] sm:$0xff]
    %v324 = vld [vmem:[%s1 + $0x970] sm:$0xff]
    %v325 = vld [vmem:[%s1 + $0x978] sm:$0xff]
    %v326 = vld [vmem:[%s1 + $0x980] sm:$0xff]
    %v327 = vld [vmem:[%s1 + $0x988] sm:$0xff]
    %v328 = vld [vmem:[%s1 + $0x990] sm:$0xff]
    %v329 = vld [vmem:[%s1 + $0x998] sm:$0xff]
    %v330 = vld [vmem:[%s1 + $0x9a0] sm:$0xff]
    %v331 = vld [vmem:[%s1 + $0x9a8] sm:$0xff]
    %v332 = vld [vmem:[%s1 + $0x9b0] sm:$0xff]
    %v333 = vld [vmem:[%s1 + $0x9b8] sm:$0xff]
    %v334 = vld [vmem:[%s1 + $0x9c0] sm:$0xff]
    %v335 = vld [vmem:[%s1 + $0x9c8] sm:$0xff]
    %v336 = vld [vmem:[%s1 + $0x9d0] sm:$0xff]
    %v337 = vld [vmem:[%s1 + $0x9d8] sm:$0xff]
    %v338 = vld [vmem:[%s1 + $0x9e0] sm:$0xff]
    %v339 = vld [vmem:[%s1 + $0x9e8] sm:$0xff]
    %v340 = vld [vmem:[%s1 + $0x9f0] sm:$0xff]
    %v341 = vld [vmem:[%s1 + $0x9f8] sm:$0xff]
    %v342 = vld [vmem:[%s1 + $0xa00] sm:$0xff]
    %v343 = vld [vmem:[%s1 + $0xa08] sm:$0xff]
    %v344 = vld [vmem:[%s1 + $0xa10] sm:$0xff]
    %v345 = vld [vmem:[%s1 + $0xa18] sm:$0xff]
    %v346 = vld [vmem:[%s1 + $0xa20] sm:$0xff]
    %v347 = vld [vmem:[%s1 + $0xa28] sm:$0xff]
    %v348 = vld [vmem:[%s1 + $0xa30] sm:$0xff]
    %v349 = vld [vmem:[%s1 + $0xa38] sm:$0xff]
    %v350 = vld [vmem:[%s1 + $0xa40] sm:$0xff]
    %v351 = vld [vmem:[%s1 + $0xa48] sm:$0xff]
    %v352 = vld [vmem:[%s1 + $0xa50] sm:$0xff]
    %v353 = vld [vmem:[%s1 + $0xa58] sm:$0xff]
    %v354 = vld [vmem:[%s1 + $0xa60] sm:$0xff]
    %v355 = vld [vmem:[%s1 + $0xa68] sm:$0xff]
    %v356 = vld [vmem:[%s1 + $0xa70] sm:$0xff]
    %v357 = vld [vmem:[%s1 + $0xa78] sm:$0xff]
    %v358 = vld [vmem:[%s1 + $0xa80] sm:$0xff]
    %v359 = vld [vmem:[%s1 + $0xa88] sm:$0xff]
    %v360 = vld [vmem:[%s1 + $0xa90] sm:$0xff]
    %v361 = vld [vmem:[%s1 + $0xa98] sm:$0xff]
    %v362 = vld [vmem:[%s1 + $0xaa0] sm:$0xff]
    %v363 = vld [vmem:[%s1 + $0xaa8] sm:$0xff]
    %v364 = vld [vmem:[%s1 + $0xab0] sm:$0xff]
    %v365 = vld [vmem:[%s1 + $0xab8] sm:$0xff]
    %v366 = vld [vmem:[%s1 + $0xac0] sm:$0xff]
    %v367 = vld [vmem:[%s1 + $0xac8] sm:$0xff]
    %v368 = vld [vmem:[%s1 + $0xad0] sm:$0xff]
    %v369 = vld [vmem:[%s1 + $0xad8] sm:$0xff]
    %v370 = vld [vmem:[%s1 + $0xae0] sm:$0xff]
    %v371 = vld [vmem:[%s1 + $0xae8] sm:$0xff]
    %v372 = vld [vmem:[%s1 + $0xaf0] sm:$0xff]
    %v373 = vld [vmem:[%s1 + $0xaf8] sm:$0xff]
    %v374 = vld [vmem:[%s1 + $0xb00] sm:$0xff]
    %v375 = vld [vmem:[%s1 + $0xb08] sm:$0xff]
    %v376 = vld [vmem:[%s1 + $0xb10] sm:$0xff]
    %v377 = vld [vmem:[%s1 + $0xb18] sm:$0xff]
    %v378 = vld [vmem:[%s1 + $0xb20] sm:$0xff]
    %v379 = vld [vmem:[%s1 + $0xb28] sm:$0xff]
    %v380 = vld [vmem:[%s1 + $0xb30] sm:$0xff]
    %v381 = vld [vmem:[%s1 + $0xb38] sm:$0xff]
    %v382 = vld [vmem:[%s1 + $0xb40] sm:$0xff]
    %v383 = vld [vmem:[%s1 + $0xb48] sm:$0xff]
    %v384 = vld [vmem:[%s1 + $0xb50] sm:$0xff]
    %v385 = vld [vmem:[%s1 + $0xb58] sm:$0xff]
    %v386 = vld [vmem:[%s1 + $0xb60] sm:$0xff]
    %v387 = vld [vmem:[%s1 + $0xb68] sm:$0xff]
    %v388 = vld [vmem:[%s1 + $0xb70] sm:$0xff]
    %v389 = vld [vmem:[%s1 + $0xb78] sm:$0xff]
    %v390 = vld [vmem:[%s1 + $0xb80] sm:$0xff]
    %v391 = vld [vmem:[%s1 + $0xb88] sm:$0xff]
    %v392 = vld [vmem:[%s1 + $0xb90] sm:$0xff]
    %v393 = vld [vmem:[%s1 + $0xb98] sm:$0xff]
    %v394 = vld [vmem:[%s1 + $0xba0] sm:$0xff]
    %v395 = vld [vmem:[%s1 + $0xba8] sm:$0xff]
    %v396 = vld [vmem:[%s1 + $0xbb0] sm:$0xff]
    %v397 = vld [vmem:[%s1 + $0xbb8] sm:$0xff]
    %v398 = vld [vmem:[%s1 + $0xbc0] sm:$0xff]
    %v399 = vld [vmem:[%s1 + $0xbc8] sm:$0xff]
    %v400 = vld [vmem:[%s1 + $0xbd0] sm:$0xff]
    %v401 = vld [vmem:[%s1 + $0xbd8] sm:$0xff]
    %v402 = vld [vmem:[%s1 + $0xbe0] sm:$0xff]
    %v403 = vld [vmem:[%s1 + $0xbe8] sm:$0xff]
    %v404 = vld [vmem:[%s1 + $0xbf0] sm:$0xff]
    %v405 = vld [vmem:[%s1 + $0xbf8] sm:$0xff]
    %v406 = vld [vmem:[%s1 + $0xc00] sm:$0xff]
    %v407 = vld [vmem:[%s1 + $0xc08] sm:$0xff]
    %v408 = vld [vmem:[%s1 + $0xc10] sm:$0xff]
    %v409 = vld [vmem:[%s1 + $0xc18] sm:$0xff]
    %v410 = vld [vmem:[%s1 + $0xc20] sm:$0xff]
    %v411 = vld [vmem:[%s1 + $0xc28] sm:$0xff]
    %v412 = vld [vmem:[%s1 + $0xc30] sm:$0xff]
    %v413 = vld [vmem:[%s1 + $0xc38] sm:$0xff]
    %v414 = vld [vmem:[%s1 + $0xc40] sm:$0xff]
    %v415 = vld [vmem:[%s1 + $0xc48] sm:$0xff]
    %v416 = vld [vmem:[%s1 + $0xc50] sm:$0xff]
    %v417 = vld [vmem:[%s1 + $0xc58] sm:$0xff]
    %v418 = vld [vmem:[%s1 + $0xc60] sm:$0xff]
    %v419 = vld [vmem:[%s1 + $0xc68] sm:$0xff]
    %v420 = vld [vmem:[%s1 + $0xc70] sm:$0xff]
    %v421 = vld [vmem:[%s1 + $0xc78] sm:$0xff]
    %v422 = vld [vmem:[%s1 + $0xc80] sm:$0xff]
    %v423 = vld [vmem:[%s1 + $0xc88] sm:$0xff]
    %v424 = vld [vmem:[%s1 + $0xc90] sm:$0xff]
    %v425 = vld [vmem:[%s1 + $0xc98] sm:$0xff]
    %v426 = vld [vmem:[%s1 + $0xca0] sm:$0xff]
    %v427 = vld [vmem:[%s1 + $0xca8] sm:$0xff]
    %v428 = vld [vmem:[%s1 + $0xcb0] sm:$0xff]
    %v429 = vld [vmem:[%s1 + $0xcb8] sm:$0xff]
    %v430 = vld [vmem:[%s1 + $0xcc0] sm:$0xff]
    %v431 = vld [vmem:[%s1 + $0xcc8] sm:$0xff]
    %v432 = vld [vmem:[%s1 + $0xcd0] sm:$0xff]
    %v433 = vld [vmem:[%s1 + $0xcd8] sm:$0xff]
    %v434 = vld [vmem:[%s1 + $0xce0] sm:$0xff]
    %v435 = vld [vmem:[%s1 + $0xce8] sm:$0xff]
    %v436 = vld [vmem:[%s1 + $0xcf0] sm:$0xff]
    %v437 = vld [vmem:[%s1 + $0xcf8] sm:$0xff]
    %v438 = vld [vmem:[%s1 + $0xd00] sm:$0xff]
    %v439 = vld [vmem:[%s1 + $0xd08] sm:$0xff]
    %v440 = vld [vmem:[%s1 + $0xd10] sm:$0xff]
    %v441 = vld [vmem:[%s1 + $0xd18] sm:$0xff]
    %v442 = vld [vmem:[%s1 + $0xd20] sm:$0xff]
    %v443 = vld [vmem:[%s1 + $0xd28] sm:$0xff]
    %v444 = vld [vmem:[%s1 + $0xd30] sm:$0xff]
    %v445 = vld [vmem:[%s1 + $0xd38] sm:$0xff]
    %v446 = vld [vmem:[%s1 + $0xd40] sm:$0xff]
    %v447 = vld [vmem:[%s1 + $0xd48] sm:$0xff]
    %v448 = vld [vmem:[%s1 + $0xd50] sm:$0xff]
    %v449 = vld [vmem:[%s1 + $0xd58] sm:$0xff]
    %v450 = vld [vmem:[%s1 + $0xd60] sm:$0xff]
    %v451 = vld [vmem:[%s1 + $0xd68] sm:$0xff]
    %v452 = vld [vmem:[%s1 + $0xd70] sm:$0xff]
    %v453 = vld [vmem:[%s1 + $0xd78] sm:$0xff]
    %v454 = vld [vmem:[%s1 + $0xd80] sm:$0xff]
    %v455 = vld [vmem:[%s1 + $0xd88] sm:$0xff]
    %v456 = vld [vmem:[%s1 + $0xd90] sm:$0xff]
    %v457 = vld [vmem:[%s1 + $0xd98] sm:$0xff]
    %v458 = vld [vmem:[%s1 + $0xda0] sm:$0xff]
    %v459 = vld [vmem:[%s1 + $0xda8] sm:$0xff]
    %v460 = vld [vmem:[%s1 + $0xdb0] sm:$0xff]
    %v461 = vld [vmem:[%s1 + $0xdb8] sm:$0xff]
    %v462 = vld [vmem:[%s1 + $0xdc0] sm:$0xff]
    %v463 = vld [vmem:[%s1 + $0xdc8] sm:$0xff]
    %v464 = vld [vmem:[%s1 + $0xdd0] sm:$0xff]
    %v465 = vld [vmem:[%s1 + $0xdd8] sm:$0xff]
    %v466 = vld [vmem:[%s1 + $0xde0] sm:$0xff]
    %v467 = vld [vmem:[%s1 + $0xde8] sm:$0xff]
    %v468 = vld [vmem:[%s1 + $0xdf0] sm:$0xff]
    %v469 = vld [vmem:[%s1 + $0xdf8] sm:$0xff]
    %v470 = vld [vmem:[%s2] sm:$0x1]
    %v472 = vlaneseq
    %v473 = vshrl.u32 %v472, 7
    %v474 = vsub.s32 0, %v473
    %v475 = vrot.slane %v470, %v474
    %v484 = vcombine.high %v15, %v15
    %v486 = vunpack.c.l.s4 1983009808
    %v487 = vunpack.c.0.s8 %v486
    %v488 = vlaneseq
    %v489 = vshrl.u32 %v488, 7
    %v490 = vsub.s32 %v487, %v489
    %v491 = vrot.slane %v15, %v490
    %v493 = vunpack.c.l.s4 1983009808
    %v494 = vunpack.c.0.s8 %v493
    %v495 = vlaneseq
    %v496 = vshrl.u32 %v495, 7
    %v497 = vsub.s32 %v494, %v496
    %v498 = vrot.slane %v484, %v497
    %v499 = vcombine.high %v491, %v491
    %v500 = vcombine.high %v498, %v498
    %v501 = vcombine.high %v16, %v16
    %v503 = vunpack.c.l.s4 1983009808
    %v504 = vunpack.c.0.s8 %v503
    %v505 = vlaneseq
    %v506 = vshrl.u32 %v505, 7
    %v507 = vsub.s32 %v504, %v506
    %v508 = vrot.slane %v16, %v507
    %v510 = vunpack.c.l.s4 1983009808
    %v511 = vunpack.c.0.s8 %v510
    %v512 = vlaneseq
    %v513 = vshrl.u32 %v512, 7
    %v514 = vsub.s32 %v511, %v513
    %v515 = vrot.slane %v501, %v514
    %v516 = vcombine.high %v508, %v508
    %v517 = vcombine.high %v515, %v515
    %v518 = vcombine.high %v17, %v17
    %v520 = vunpack.c.l.s4 1983009808
    %v521 = vunpack.c.0.s8 %v520
    %v522 = vlaneseq
    %v523 = vshrl.u32 %v522, 7
    %v524 = vsub.s32 %v521, %v523
    %v525 = vrot.slane %v17, %v524
    %v527 = vunpack.c.l.s4 1983009808
    %v528 = vunpack.c.0.s8 %v527
    %v529 = vlaneseq
    %v530 = vshrl.u32 %v529, 7
    %v531 = vsub.s32 %v528, %v530
    %v532 = vrot.slane %v518, %v531
    %v533 = vcombine.high %v525, %v525
    %v534 = vcombine.high %v532, %v532
    %v535 = vcombine.high %v18, %v18
    %v537 = vunpack.c.l.s4 1983009808
    %v538 = vunpack.c.0.s8 %v537
    %v539 = vlaneseq
    %v540 = vshrl.u32 %v539, 7
    %v541 = vsub.s32 %v538, %v540
    %v542 = vrot.slane %v18, %v541
    %v544 = vunpack.c.l.s4 1983009808
    %v545 = vunpack.c.0.s8 %v544
    %v546 = vlaneseq
    %v547 = vshrl.u32 %v546, 7
    %v548 = vsub.s32 %v545, %v547
    %v549 = vrot.slane %v535, %v548
    %v550 = vcombine.high %v542, %v542
    %v551 = vcombine.high %v549, %v549
    %v552 = vcombine.high %v19, %v19
    %v554 = vunpack.c.l.s4 1983009808
    %v555 = vunpack.c.0.s8 %v554
    %v556 = vlaneseq
    %v557 = vshrl.u32 %v556, 7
    %v558 = vsub.s32 %v555, %v557
    %v559 = vrot.slane %v19, %v558
    %v561 = vunpack.c.l.s4 1983009808
    %v562 = vunpack.c.0.s8 %v561
    %v563 = vlaneseq
    %v564 = vshrl.u32 %v563, 7
    %v565 = vsub.s32 %v562, %v564
    %v566 = vrot.slane %v552, %v565
    %v567 = vcombine.high %v559, %v559
    %v568 = vcombine.high %v566, %v566
    %v569 = vcombine.high %v20, %v20
    %v571 = vunpack.c.l.s4 1983009808
    %v572 = vunpack.c.0.s8 %v571
    %v573 = vlaneseq
    %v574 = vshrl.u32 %v573, 7
    %v575 = vsub.s32 %v572, %v574
    %v576 = vrot.slane %v20, %v575
    %v578 = vunpack.c.l.s4 1983009808
    %v579 = vunpack.c.0.s8 %v578
    %v580 = vlaneseq
    %v581 = vshrl.u32 %v580, 7
    %v582 = vsub.s32 %v579, %v581
    %v583 = vrot.slane %v569, %v582
    %v584 = vcombine.high %v576, %v576
    %v585 = vcombine.high %v583, %v583
    %v586 = vcombine.high %v21, %v21
    %v588 = vunpack.c.l.s4 1983009808
    %v589 = vunpack.c.0.s8 %v588
    %v590 = vlaneseq
    %v591 = vshrl.u32 %v590, 7
    %v592 = vsub.s32 %v589, %v591
    %v593 = vrot.slane %v21, %v592
    %v595 = vunpack.c.l.s4 1983009808
    %v596 = vunpack.c.0.s8 %v595
    %v597 = vlaneseq
    %v598 = vshrl.u32 %v597, 7
    %v599 = vsub.s32 %v596, %v598
    %v600 = vrot.slane %v586, %v599
    %v601 = vcombine.high %v593, %v593
    %v602 = vcombine.high %v600, %v600
    %631 = vmatprep.subr.mxu0 0.0
    %632 = vmatpush1.msra.mxu0 %v22
    %633 = vmatprep.subr.mxu0 0.0
    %634 = vmatpush1.msra.mxu0 %v23
    %635 = vmatprep.subr.mxu0 0.0
    %636 = vmatpush1.msra.mxu0 %v24
    %637 = vmatprep.subr.mxu0 0.0
    %638 = vmatpush1.msra.mxu0 %v25
    %639 = vmatprep.subr.mxu0 0.0
    %640 = vmatpush1.msra.mxu0 %v26
    %641 = vmatprep.subr.mxu0 0.0
    %642 = vmatpush1.msra.mxu0 %v27
    %643 = vmatprep.subr.mxu0 0.0
    %644 = vmatpush1.msra.mxu0 %v28
    %645 = vmatprep.subr.mxu0 0.0
    %646 = vmatpush1.msra.mxu0 %v29
    %647 = vmatprep.subr.mxu0 0.0
    %648 = vmatpush1.msra.mxu0 %v30
    %649 = vmatprep.subr.mxu0 0.0
    %650 = vmatpush1.msra.mxu0 %v31
    %651 = vmatprep.subr.mxu0 0.0
    %652 = vmatpush1.msra.mxu0 %v32
    %653 = vmatprep.subr.mxu0 0.0
    %654 = vmatpush1.msra.mxu0 %v33
    %655 = vmatprep.subr.mxu0 0.0
    %656 = vmatpush1.msra.mxu0 %v34
    %657 = vmatprep.subr.mxu0 0.0
    %658 = vmatpush1.msra.mxu0 %v35
    %659 = vmatprep.subr.mxu0 0.0
    %660 = vmatpush1.msra.mxu0 %v36
    %661 = vmatprep.subr.mxu0 0.0
    %662 = vmatpush1.msra.mxu0 %v37
    %663 = vmatprep.subr.mxu0 0.0
    %664 = vmatpush1.msra.mxu0 %v38
    %665 = vmatprep.subr.mxu0 0.0
    %666 = vmatpush1.msra.mxu0 %v39
    %667 = vmatprep.subr.mxu0 0.0
    %668 = vmatpush1.msra.mxu0 %v40
    %669 = vmatprep.subr.mxu0 0.0
    %670 = vmatpush1.msra.mxu0 %v41
    %671 = vmatprep.subr.mxu0 0.0
    %672 = vmatpush1.msra.mxu0 %v42
    %673 = vmatprep.subr.mxu0 0.0
    %674 = vmatpush1.msra.mxu0 %v43
    %675 = vmatprep.subr.mxu0 0.0
    %676 = vmatpush1.msra.mxu0 %v44
    %677 = vmatprep.subr.mxu0 0.0
    %678 = vmatpush1.msra.mxu0 %v45
    %679 = vmatprep.subr.mxu0 0.0
    %680 = vmatpush1.msra.mxu0 %v46
    %681 = vmatprep.subr.mxu0 0.0
    %682 = vmatpush1.msra.mxu0 %v47
    %683 = vmatprep.subr.mxu0 0.0
    %684 = vmatpush1.msra.mxu0 %v48
    %685 = vmatprep.subr.mxu0 0.0
    %686 = vmatpush1.msra.mxu0 %v49
    %687 = vmatprep.subr.mxu0 0.0
    %688 = vmatpush1.msra.mxu0 %v50
    %689 = vmatprep.subr.mxu0 0.0
    %690 = vmatpush1.msra.mxu0 %v51
    %691 = vmatprep.subr.mxu0 0.0
    %692 = vmatpush1.msra.mxu0 %v52
    %693 = vmatprep.subr.mxu0 0.0
    %694 = vmatpush1.msra.mxu0 %v53
    %695 = vmatprep.mubr.f32.mxu0 %v499
    %696 = vmatmul.mubr.f32.gmra.mrb[0].mxu0 %v491
    %v697 = vpop.f32.mrb[0].mxu0
    %v698 = vadd.f32 %v475, %v697
    %v699 = vpop.f32.mrb[0].mxu0
    %700 = vdwg.mxu0
    %701 = vmatprep.subr.mxu0 0.0
    %702 = vmatpush1.msra.mxu0 %v54
    %703 = vmatprep.subr.mxu0 0.0
    %704 = vmatpush1.msra.mxu0 %v55
    %705 = vmatprep.subr.mxu0 0.0
    %706 = vmatpush1.msra.mxu0 %v56
    %707 = vmatprep.subr.mxu0 0.0
    %708 = vmatpush1.msra.mxu0 %v57
    %709 = vmatprep.subr.mxu0 0.0
    %710 = vmatpush1.msra.mxu0 %v58
    %711 = vmatprep.subr.mxu0 0.0
    %712 = vmatpush1.msra.mxu0 %v59
    %713 = vmatprep.subr.mxu0 0.0
    %714 = vmatpush1.msra.mxu0 %v60
    %715 = vmatprep.subr.mxu0 0.0
    %716 = vmatpush1.msra.mxu0 %v61
    %717 = vmatprep.subr.mxu0 0.0
    %718 = vmatpush1.msra.mxu0 %v62
    %719 = vmatprep.subr.mxu0 0.0
    %720 = vmatpush1.msra.mxu0 %v63
    %721 = vmatprep.subr.mxu0 0.0
    %722 = vmatpush1.msra.mxu0 %v64
    %723 = vmatprep.subr.mxu0 0.0
    %724 = vmatpush1.msra.mxu0 %v65
    %725 = vmatprep.subr.mxu0 0.0
    %726 = vmatpush1.msra.mxu0 %v66
    %727 = vmatprep.subr.mxu0 0.0
    %728 = vmatpush1.msra.mxu0 %v67
    %729 = vmatprep.subr.mxu0 0.0
    %730 = vmatpush1.msra.mxu0 %v68
    %731 = vmatprep.subr.mxu0 0.0
    %732 = vmatpush1.msra.mxu0 %v69
    %733 = vmatprep.subr.mxu0 0.0
    %734 = vmatpush1.msra.mxu0 %v70
    %735 = vmatprep.subr.mxu0 0.0
    %736 = vmatpush1.msra.mxu0 %v71
    %737 = vmatprep.subr.mxu0 0.0
    %738 = vmatpush1.msra.mxu0 %v72
    %739 = vmatprep.subr.mxu0 0.0
    %740 = vmatpush1.msra.mxu0 %v73
    %741 = vmatprep.subr.mxu0 0.0
    %742 = vmatpush1.msra.mxu0 %v74
    %743 = vmatprep.subr.mxu0 0.0
    %744 = vmatpush1.msra.mxu0 %v75
    %745 = vmatprep.subr.mxu0 0.0
    %746 = vmatpush1.msra.mxu0 %v76
    %747 = vmatprep.subr.mxu0 0.0
    %748 = vmatpush1.msra.mxu0 %v77
    %749 = vmatprep.subr.mxu0 0.0
    %750 = vmatpush1.msra.mxu0 %v78
    %751 = vmatprep.subr.mxu0 0.0
    %752 = vmatpush1.msra.mxu0 %v79
    %753 = vmatprep.subr.mxu0 0.0
    %754 = vmatpush1.msra.mxu0 %v80
    %755 = vmatprep.subr.mxu0 0.0
    %756 = vmatpush1.msra.mxu0 %v81
    %757 = vmatprep.subr.mxu0 0.0
    %758 = vmatpush1.msra.mxu0 %v82
    %759 = vmatprep.subr.mxu0 0.0
    %760 = vmatpush1.msra.mxu0 %v83
    %761 = vmatprep.subr.mxu0 0.0
    %762 = vmatpush1.msra.mxu0 %v84
    %763 = vmatprep.subr.mxu0 0.0
    %764 = vmatpush1.msra.mxu0 %v85
    %765 = vmatprep.mubr.f32.mxu0 %v500
    %766 = vmatmul.mubr.f32.gmra.mrb[0].mxu0 %v498
    %v767 = vpop.f32.mrb[0].mxu0
    %v768 = vadd.f32 %v698, %v767
    %v769 = vpop.f32.mrb[0].mxu0
    %770 = vdwg.mxu0
    %771 = vmatprep.subr.mxu0 0.0
    %772 = vmatpush1.msra.mxu0 %v86
    %773 = vmatprep.subr.mxu0 0.0
    %774 = vmatpush1.msra.mxu0 %v87
    %775 = vmatprep.subr.mxu0 0.0
    %776 = vmatpush1.msra.mxu0 %v88
    %777 = vmatprep.subr.mxu0 0.0
    %778 = vmatpush1.msra.mxu0 %v89
    %779 = vmatprep.subr.mxu0 0.0
    %780 = vmatpush1.msra.mxu0 %v90
    %781 = vmatprep.subr.mxu0 0.0
    %782 = vmatpush1.msra.mxu0 %v91
    %783 = vmatprep.subr.mxu0 0.0
    %784 = vmatpush1.msra.mxu0 %v92
    %785 = vmatprep.subr.mxu0 0.0
    %786 = vmatpush1.msra.mxu0 %v93
    %787 = vmatprep.subr.mxu0 0.0
    %788 = vmatpush1.msra.mxu0 %v94
    %789 = vmatprep.subr.mxu0 0.0
    %790 = vmatpush1.msra.mxu0 %v95
    %791 = vmatprep.subr.mxu0 0.0
    %792 = vmatpush1.msra.mxu0 %v96
    %793 = vmatprep.subr.mxu0 0.0
    %794 = vmatpush1.msra.mxu0 %v97
    %795 = vmatprep.subr.mxu0 0.0
    %796 = vmatpush1.msra.mxu0 %v98
    %797 = vmatprep.subr.mxu0 0.0
    %798 = vmatpush1.msra.mxu0 %v99
    %799 = vmatprep.subr.mxu0 0.0
    %800 = vmatpush1.msra.mxu0 %v100
    %801 = vmatprep.subr.mxu0 0.0
    %802 = vmatpush1.msra.mxu0 %v101
    %803 = vmatprep.subr.mxu0 0.0
    %804 = vmatpush1.msra.mxu0 %v102
    %805 = vmatprep.subr.mxu0 0.0
    %806 = vmatpush1.msra.mxu0 %v103
    %807 = vmatprep.subr.mxu0 0.0
    %808 = vmatpush1.msra.mxu0 %v104
    %809 = vmatprep.subr.mxu0 0.0
    %810 = vmatpush1.msra.mxu0 %v105
    %811 = vmatprep.subr.mxu0 0.0
    %812 = vmatpush1.msra.mxu0 %v106
    %813 = vmatprep.subr.mxu0 0.0
    %814 = vmatpush1.msra.mxu0 %v107
    %815 = vmatprep.subr.mxu0 0.0
    %816 = vmatpush1.msra.mxu0 %v108
    %817 = vmatprep.subr.mxu0 0.0
    %818 = vmatpush1.msra.mxu0 %v109
    %819 = vmatprep.subr.mxu0 0.0
    %820 = vmatpush1.msra.mxu0 %v110
    %821 = vmatprep.subr.mxu0 0.0
    %822 = vmatpush1.msra.mxu0 %v111
    %823 = vmatprep.subr.mxu0 0.0
    %824 = vmatpush1.msra.mxu0 %v112
    %825 = vmatprep.subr.mxu0 0.0
    %826 = vmatpush1.msra.mxu0 %v113
    %827 = vmatprep.subr.mxu0 0.0
    %828 = vmatpush1.msra.mxu0 %v114
    %829 = vmatprep.subr.mxu0 0.0
    %830 = vmatpush1.msra.mxu0 %v115
    %831 = vmatprep.subr.mxu0 0.0
    %832 = vmatpush1.msra.mxu0 %v116
    %833 = vmatprep.subr.mxu0 0.0
    %834 = vmatpush1.msra.mxu0 %v117
    %835 = vmatprep.mubr.f32.mxu0 %v516
    %836 = vmatmul.mubr.f32.gmra.mrb[0].mxu0 %v508
    %v837 = vpop.f32.mrb[0].mxu0
    %v838 = vadd.f32 %v768, %v837
    %v839 = vpop.f32.mrb[0].mxu0
    %840 = vdwg.mxu0
    %841 = vmatprep.subr.mxu0 0.0
    %842 = vmatpush1.msra.mxu0 %v118
    %843 = vmatprep.subr.mxu0 0.0
    %844 = vmatpush1.msra.mxu0 %v119
    %845 = vmatprep.subr.mxu0 0.0
    %846 = vmatpush1.msra.mxu0 %v120
    %847 = vmatprep.subr.mxu0 0.0
    %848 = vmatpush1.msra.mxu0 %v121
    %849 = vmatprep.subr.mxu0 0.0
    %850 = vmatpush1.msra.mxu0 %v122
    %851 = vmatprep.subr.mxu0 0.0
    %852 = vmatpush1.msra.mxu0 %v123
    %853 = vmatprep.subr.mxu0 0.0
    %854 = vmatpush1.msra.mxu0 %v124
    %855 = vmatprep.subr.mxu0 0.0
    %856 = vmatpush1.msra.mxu0 %v125
    %857 = vmatprep.subr.mxu0 0.0
    %858 = vmatpush1.msra.mxu0 %v126
    %859 = vmatprep.subr.mxu0 0.0
    %860 = vmatpush1.msra.mxu0 %v127
    %861 = vmatprep.subr.mxu0 0.0
    %862 = vmatpush1.msra.mxu0 %v128
    %863 = vmatprep.subr.mxu0 0.0
    %864 = vmatpush1.msra.mxu0 %v129
    %865 = vmatprep.subr.mxu0 0.0
    %866 = vmatpush1.msra.mxu0 %v130
    %867 = vmatprep.subr.mxu0 0.0
    %868 = vmatpush1.msra.mxu0 %v131
    %869 = vmatprep.subr.mxu0 0.0
    %870 = vmatpush1.msra.mxu0 %v132
    %871 = vmatprep.subr.mxu0 0.0
    %872 = vmatpush1.msra.mxu0 %v133
    %873 = vmatprep.subr.mxu0 0.0
    %874 = vmatpush1.msra.mxu0 %v134
    %875 = vmatprep.subr.mxu0 0.0
    %876 = vmatpush1.msra.mxu0 %v135
    %877 = vmatprep.subr.mxu0 0.0
    %878 = vmatpush1.msra.mxu0 %v136
    %879 = vmatprep.subr.mxu0 0.0
    %880 = vmatpush1.msra.mxu0 %v137
    %881 = vmatprep.subr.mxu0 0.0
    %882 = vmatpush1.msra.mxu0 %v138
    %883 = vmatprep.subr.mxu0 0.0
    %884 = vmatpush1.msra.mxu0 %v139
    %885 = vmatprep.subr.mxu0 0.0
    %886 = vmatpush1.msra.mxu0 %v140
    %887 = vmatprep.subr.mxu0 0.0
    %888 = vmatpush1.msra.mxu0 %v141
    %889 = vmatprep.subr.mxu0 0.0
    %890 = vmatpush1.msra.mxu0 %v142
    %891 = vmatprep.subr.mxu0 0.0
    %892 = vmatpush1.msra.mxu0 %v143
    %893 = vmatprep.subr.mxu0 0.0
    %894 = vmatpush1.msra.mxu0 %v144
    %895 = vmatprep.subr.mxu0 0.0
    %896 = vmatpush1.msra.mxu0 %v145
    %897 = vmatprep.subr.mxu0 0.0
    %898 = vmatpush1.msra.mxu0 %v146
    %899 = vmatprep.subr.mxu0 0.0
    %900 = vmatpush1.msra.mxu0 %v147
    %901 = vmatprep.subr.mxu0 0.0
    %902 = vmatpush1.msra.mxu0 %v148
    %903 = vmatprep.subr.mxu0 0.0
    %904 = vmatpush1.msra.mxu0 %v149
    %905 = vmatprep.mubr.f32.mxu0 %v517
    %906 = vmatmul.mubr.f32.gmra.mrb[0].mxu0 %v515
    %v907 = vpop.f32.mrb[0].mxu0
    %v908 = vadd.f32 %v838, %v907
    %v909 = vpop.f32.mrb[0].mxu0
    %910 = vdwg.mxu0
    %911 = vmatprep.subr.mxu0 0.0
    %912 = vmatpush1.msra.mxu0 %v150
    %913 = vmatprep.subr.mxu0 0.0
    %914 = vmatpush1.msra.mxu0 %v151
    %915 = vmatprep.subr.mxu0 0.0
    %916 = vmatpush1.msra.mxu0 %v152
    %917 = vmatprep.subr.mxu0 0.0
    %918 = vmatpush1.msra.mxu0 %v153
    %919 = vmatprep.subr.mxu0 0.0
    %920 = vmatpush1.msra.mxu0 %v154
    %921 = vmatprep.subr.mxu0 0.0
    %922 = vmatpush1.msra.mxu0 %v155
    %923 = vmatprep.subr.mxu0 0.0
    %924 = vmatpush1.msra.mxu0 %v156
    %925 = vmatprep.subr.mxu0 0.0
    %926 = vmatpush1.msra.mxu0 %v157
    %927 = vmatprep.subr.mxu0 0.0
    %928 = vmatpush1.msra.mxu0 %v158
    %929 = vmatprep.subr.mxu0 0.0
    %930 = vmatpush1.msra.mxu0 %v159
    %931 = vmatprep.subr.mxu0 0.0
    %932 = vmatpush1.msra.mxu0 %v160
    %933 = vmatprep.subr.mxu0 0.0
    %934 = vmatpush1.msra.mxu0 %v161
    %935 = vmatprep.subr.mxu0 0.0
    %936 = vmatpush1.msra.mxu0 %v162
    %937 = vmatprep.subr.mxu0 0.0
    %938 = vmatpush1.msra.mxu0 %v163
    %939 = vmatprep.subr.mxu0 0.0
    %940 = vmatpush1.msra.mxu0 %v164
    %941 = vmatprep.subr.mxu0 0.0
    %942 = vmatpush1.msra.mxu0 %v165
    %943 = vmatprep.subr.mxu0 0.0
    %944 = vmatpush1.msra.mxu0 %v166
    %945 = vmatprep.subr.mxu0 0.0
    %946 = vmatpush1.msra.mxu0 %v167
    %947 = vmatprep.subr.mxu0 0.0
    %948 = vmatpush1.msra.mxu0 %v168
    %949 = vmatprep.subr.mxu0 0.0
    %950 = vmatpush1.msra.mxu0 %v169
    %951 = vmatprep.subr.mxu0 0.0
    %952 = vmatpush1.msra.mxu0 %v170
    %953 = vmatprep.subr.mxu0 0.0
    %954 = vmatpush1.msra.mxu0 %v171
    %955 = vmatprep.subr.mxu0 0.0
    %956 = vmatpush1.msra.mxu0 %v172
    %957 = vmatprep.subr.mxu0 0.0
    %958 = vmatpush1.msra.mxu0 %v173
    %959 = vmatprep.subr.mxu0 0.0
    %960 = vmatpush1.msra.mxu0 %v174
    %961 = vmatprep.subr.mxu0 0.0
    %962 = vmatpush1.msra.mxu0 %v175
    %963 = vmatprep.subr.mxu0 0.0
    %964 = vmatpush1.msra.mxu0 %v176
    %965 = vmatprep.subr.mxu0 0.0
    %966 = vmatpush1.msra.mxu0 %v177
    %967 = vmatprep.subr.mxu0 0.0
    %968 = vmatpush1.msra.mxu0 %v178
    %969 = vmatprep.subr.mxu0 0.0
    %970 = vmatpush1.msra.mxu0 %v179
    %971 = vmatprep.subr.mxu0 0.0
    %972 = vmatpush1.msra.mxu0 %v180
    %973 = vmatprep.subr.mxu0 0.0
    %974 = vmatpush1.msra.mxu0 %v181
    %975 = vmatprep.mubr.f32.mxu0 %v533
    %976 = vmatmul.mubr.f32.gmra.mrb[0].mxu0 %v525
    %v977 = vpop.f32.mrb[0].mxu0
    %v978 = vadd.f32 %v908, %v977
    %v979 = vpop.f32.mrb[0].mxu0
    %980 = vdwg.mxu0
    %981 = vmatprep.subr.mxu0 0.0
    %982 = vmatpush1.msra.mxu0 %v182
    %983 = vmatprep.subr.mxu0 0.0
    %984 = vmatpush1.msra.mxu0 %v183
    %985 = vmatprep.subr.mxu0 0.0
    %986 = vmatpush1.msra.mxu0 %v184
    %987 = vmatprep.subr.mxu0 0.0
    %988 = vmatpush1.msra.mxu0 %v185
    %989 = vmatprep.subr.mxu0 0.0
    %990 = vmatpush1.msra.mxu0 %v186
    %991 = vmatprep.subr.mxu0 0.0
    %992 = vmatpush1.msra.mxu0 %v187
    %993 = vmatprep.subr.mxu0 0.0
    %994 = vmatpush1.msra.mxu0 %v188
    %995 = vmatprep.subr.mxu0 0.0
    %996 = vmatpush1.msra.mxu0 %v189
    %997 = vmatprep.subr.mxu0 0.0
    %998 = vmatpush1.msra.mxu0 %v190
    %999 = vmatprep.subr.mxu0 0.0
    %1000 = vmatpush1.msra.mxu0 %v191
    %1001 = vmatprep.subr.mxu0 0.0
    %1002 = vmatpush1.msra.mxu0 %v192
    %1003 = vmatprep.subr.mxu0 0.0
    %1004 = vmatpush1.msra.mxu0 %v193
    %1005 = vmatprep.subr.mxu0 0.0
    %1006 = vmatpush1.msra.mxu0 %v194
    %1007 = vmatprep.subr.mxu0 0.0
    %1008 = vmatpush1.msra.mxu0 %v195
    %1009 = vmatprep.subr.mxu0 0.0
    %1010 = vmatpush1.msra.mxu0 %v196
    %1011 = vmatprep.subr.mxu0 0.0
    %1012 = vmatpush1.msra.mxu0 %v197
    %1013 = vmatprep.subr.mxu0 0.0
    %1014 = vmatpush1.msra.mxu0 %v198
    %1015 = vmatprep.subr.mxu0 0.0
    %1016 = vmatpush1.msra.mxu0 %v199
    %1017 = vmatprep.subr.mxu0 0.0
    %1018 = vmatpush1.msra.mxu0 %v200
    %1019 = vmatprep.subr.mxu0 0.0
    %1020 = vmatpush1.msra.mxu0 %v201
    %1021 = vmatprep.subr.mxu0 0.0
    %1022 = vmatpush1.msra.mxu0 %v202
    %1023 = vmatprep.subr.mxu0 0.0
    %1024 = vmatpush1.msra.mxu0 %v203
    %1025 = vmatprep.subr.mxu0 0.0
    %1026 = vmatpush1.msra.mxu0 %v204
    %1027 = vmatprep.subr.mxu0 0.0
    %1028 = vmatpush1.msra.mxu0 %v205
    %1029 = vmatprep.subr.mxu0 0.0
    %1030 = vmatpush1.msra.mxu0 %v206
    %1031 = vmatprep.subr.mxu0 0.0
    %1032 = vmatpush1.msra.mxu0 %v207
    %1033 = vmatprep.subr.mxu0 0.0
    %1034 = vmatpush1.msra.mxu0 %v208
    %1035 = vmatprep.subr.mxu0 0.0
    %1036 = vmatpush1.msra.mxu0 %v209
    %1037 = vmatprep.subr.mxu0 0.0
    %1038 = vmatpush1.msra.mxu0 %v210
    %1039 = vmatprep.subr.mxu0 0.0
    %1040 = vmatpush1.msra.mxu0 %v211
    %1041 = vmatprep.subr.mxu0 0.0
    %1042 = vmatpush1.msra.mxu0 %v212
    %1043 = vmatprep.subr.mxu0 0.0
    %1044 = vmatpush1.msra.mxu0 %v213
    %1045 = vmatprep.mubr.f32.mxu0 %v534
    %1046 = vmatmul.mubr.f32.gmra.mrb[0].mxu0 %v532
    %v1047 = vpop.f32.mrb[0].mxu0
    %v1048 = vadd.f32 %v978, %v1047
    %v1049 = vpop.f32.mrb[0].mxu0
    %1050 = vdwg.mxu0
    %1051 = vmatprep.subr.mxu0 0.0
    %1052 = vmatpush1.msra.mxu0 %v214
    %1053 = vmatprep.subr.mxu0 0.0
    %1054 = vmatpush1.msra.mxu0 %v215
    %1055 = vmatprep.subr.mxu0 0.0
    %1056 = vmatpush1.msra.mxu0 %v216
    %1057 = vmatprep.subr.mxu0 0.0
    %1058 = vmatpush1.msra.mxu0 %v217
    %1059 = vmatprep.subr.mxu0 0.0
    %1060 = vmatpush1.msra.mxu0 %v218
    %1061 = vmatprep.subr.mxu0 0.0
    %1062 = vmatpush1.msra.mxu0 %v219
    %1063 = vmatprep.subr.mxu0 0.0
    %1064 = vmatpush1.msra.mxu0 %v220
    %1065 = vmatprep.subr.mxu0 0.0
    %1066 = vmatpush1.msra.mxu0 %v221
    %1067 = vmatprep.subr.mxu0 0.0
    %1068 = vmatpush1.msra.mxu0 %v222
    %1069 = vmatprep.subr.mxu0 0.0
    %1070 = vmatpush1.msra.mxu0 %v223
    %1071 = vmatprep.subr.mxu0 0.0
    %1072 = vmatpush1.msra.mxu0 %v224
    %1073 = vmatprep.subr.mxu0 0.0
    %1074 = vmatpush1.msra.mxu0 %v225
    %1075 = vmatprep.subr.mxu0 0.0
    %1076 = vmatpush1.msra.mxu0 %v226
    %1077 = vmatprep.subr.mxu0 0.0
    %1078 = vmatpush1.msra.mxu0 %v227
    %1079 = vmatprep.subr.mxu0 0.0
    %1080 = vmatpush1.msra.mxu0 %v228
    %1081 = vmatprep.subr.mxu0 0.0
    %1082 = vmatpush1.msra.mxu0 %v229
    %1083 = vmatprep.subr.mxu0 0.0
    %1084 = vmatpush1.msra.mxu0 %v230
    %1085 = vmatprep.subr.mxu0 0.0
    %1086 = vmatpush1.msra.mxu0 %v231
    %1087 = vmatprep.subr.mxu0 0.0
    %1088 = vmatpush1.msra.mxu0 %v232
    %1089 = vmatprep.subr.mxu0 0.0
    %1090 = vmatpush1.msra.mxu0 %v233
    %1091 = vmatprep.subr.mxu0 0.0
    %1092 = vmatpush1.msra.mxu0 %v234
    %1093 = vmatprep.subr.mxu0 0.0
    %1094 = vmatpush1.msra.mxu0 %v235
    %1095 = vmatprep.subr.mxu0 0.0
    %1096 = vmatpush1.msra.mxu0 %v236
    %1097 = vmatprep.subr.mxu0 0.0
    %1098 = vmatpush1.msra.mxu0 %v237
    %1099 = vmatprep.subr.mxu0 0.0
    %1100 = vmatpush1.msra.mxu0 %v238
    %1101 = vmatprep.subr.mxu0 0.0
    %1102 = vmatpush1.msra.mxu0 %v239
    %1103 = vmatprep.subr.mxu0 0.0
    %1104 = vmatpush1.msra.mxu0 %v240
    %1105 = vmatprep.subr.mxu0 0.0
    %1106 = vmatpush1.msra.mxu0 %v241
    %1107 = vmatprep.subr.mxu0 0.0
    %1108 = vmatpush1.msra.mxu0 %v242
    %1109 = vmatprep.subr.mxu0 0.0
    %1110 = vmatpush1.msra.mxu0 %v243
    %1111 = vmatprep.subr.mxu0 0.0
    %1112 = vmatpush1.msra.mxu0 %v244
    %1113 = vmatprep.subr.mxu0 0.0
    %1114 = vmatpush1.msra.mxu0 %v245
    %1115 = vmatprep.mubr.f32.mxu0 %v550
    %1116 = vmatmul.mubr.f32.gmra.mrb[0].mxu0 %v542
    %v1117 = vpop.f32.mrb[0].mxu0
    %v1118 = vadd.f32 %v1048, %v1117
    %v1119 = vpop.f32.mrb[0].mxu0
    %1120 = vdwg.mxu0
    %1121 = vmatprep.subr.mxu0 0.0
    %1122 = vmatpush1.msra.mxu0 %v246
    %1123 = vmatprep.subr.mxu0 0.0
    %1124 = vmatpush1.msra.mxu0 %v247
    %1125 = vmatprep.subr.mxu0 0.0
    %1126 = vmatpush1.msra.mxu0 %v248
    %1127 = vmatprep.subr.mxu0 0.0
    %1128 = vmatpush1.msra.mxu0 %v249
    %1129 = vmatprep.subr.mxu0 0.0
    %1130 = vmatpush1.msra.mxu0 %v250
    %1131 = vmatprep.subr.mxu0 0.0
    %1132 = vmatpush1.msra.mxu0 %v251
    %1133 = vmatprep.subr.mxu0 0.0
    %1134 = vmatpush1.msra.mxu0 %v252
    %1135 = vmatprep.subr.mxu0 0.0
    %1136 = vmatpush1.msra.mxu0 %v253
    %1137 = vmatprep.subr.mxu0 0.0
    %1138 = vmatpush1.msra.mxu0 %v254
    %1139 = vmatprep.subr.mxu0 0.0
    %1140 = vmatpush1.msra.mxu0 %v255
    %1141 = vmatprep.subr.mxu0 0.0
    %1142 = vmatpush1.msra.mxu0 %v256
    %1143 = vmatprep.subr.mxu0 0.0
    %1144 = vmatpush1.msra.mxu0 %v257
    %1145 = vmatprep.subr.mxu0 0.0
    %1146 = vmatpush1.msra.mxu0 %v258
    %1147 = vmatprep.subr.mxu0 0.0
    %1148 = vmatpush1.msra.mxu0 %v259
    %1149 = vmatprep.subr.mxu0 0.0
    %1150 = vmatpush1.msra.mxu0 %v260
    %1151 = vmatprep.subr.mxu0 0.0
    %1152 = vmatpush1.msra.mxu0 %v261
    %1153 = vmatprep.subr.mxu0 0.0
    %1154 = vmatpush1.msra.mxu0 %v262
    %1155 = vmatprep.subr.mxu0 0.0
    %1156 = vmatpush1.msra.mxu0 %v263
    %1157 = vmatprep.subr.mxu0 0.0
    %1158 = vmatpush1.msra.mxu0 %v264
    %1159 = vmatprep.subr.mxu0 0.0
    %1160 = vmatpush1.msra.mxu0 %v265
    %1161 = vmatprep.subr.mxu0 0.0
    %1162 = vmatpush1.msra.mxu0 %v266
    %1163 = vmatprep.subr.mxu0 0.0
    %1164 = vmatpush1.msra.mxu0 %v267
    %1165 = vmatprep.subr.mxu0 0.0
    %1166 = vmatpush1.msra.mxu0 %v268
    %1167 = vmatprep.subr.mxu0 0.0
    %1168 = vmatpush1.msra.mxu0 %v269
    %1169 = vmatprep.subr.mxu0 0.0
    %1170 = vmatpush1.msra.mxu0 %v270
    %1171 = vmatprep.subr.mxu0 0.0
    %1172 = vmatpush1.msra.mxu0 %v271
    %1173 = vmatprep.subr.mxu0 0.0
    %1174 = vmatpush1.msra.mxu0 %v272
    %1175 = vmatprep.subr.mxu0 0.0
    %1176 = vmatpush1.msra.mxu0 %v273
    %1177 = vmatprep.subr.mxu0 0.0
    %1178 = vmatpush1.msra.mxu0 %v274
    %1179 = vmatprep.subr.mxu0 0.0
    %1180 = vmatpush1.msra.mxu0 %v275
    %1181 = vmatprep.subr.mxu0 0.0
    %1182 = vmatpush1.msra.mxu0 %v276
    %1183 = vmatprep.subr.mxu0 0.0
    %1184 = vmatpush1.msra.mxu0 %v277
    %1185 = vmatprep.mubr.f32.mxu0 %v551
    %1186 = vmatmul.mubr.f32.gmra.mrb[0].mxu0 %v549
    %v1187 = vpop.f32.mrb[0].mxu0
    %v1188 = vadd.f32 %v1118, %v1187
    %v1189 = vpop.f32.mrb[0].mxu0
    %1190 = vdwg.mxu0
    %1191 = vmatprep.subr.mxu0 0.0
    %1192 = vmatpush1.msra.mxu0 %v278
    %1193 = vmatprep.subr.mxu0 0.0
    %1194 = vmatpush1.msra.mxu0 %v279
    %1195 = vmatprep.subr.mxu0 0.0
    %1196 = vmatpush1.msra.mxu0 %v280
    %1197 = vmatprep.subr.mxu0 0.0
    %1198 = vmatpush1.msra.mxu0 %v281
    %1199 = vmatprep.subr.mxu0 0.0
    %1200 = vmatpush1.msra.mxu0 %v282
    %1201 = vmatprep.subr.mxu0 0.0
    %1202 = vmatpush1.msra.mxu0 %v283
    %1203 = vmatprep.subr.mxu0 0.0
    %1204 = vmatpush1.msra.mxu0 %v284
    %1205 = vmatprep.subr.mxu0 0.0
    %1206 = vmatpush1.msra.mxu0 %v285
    %1207 = vmatprep.subr.mxu0 0.0
    %1208 = vmatpush1.msra.mxu0 %v286
    %1209 = vmatprep.subr.mxu0 0.0
    %1210 = vmatpush1.msra.mxu0 %v287
    %1211 = vmatprep.subr.mxu0 0.0
    %1212 = vmatpush1.msra.mxu0 %v288
    %1213 = vmatprep.subr.mxu0 0.0
    %1214 = vmatpush1.msra.mxu0 %v289
    %1215 = vmatprep.subr.mxu0 0.0
    %1216 = vmatpush1.msra.mxu0 %v290
    %1217 = vmatprep.subr.mxu0 0.0
    %1218 = vmatpush1.msra.mxu0 %v291
    %1219 = vmatprep.subr.mxu0 0.0
    %1220 = vmatpush1.msra.mxu0 %v292
    %1221 = vmatprep.subr.mxu0 0.0
    %1222 = vmatpush1.msra.mxu0 %v293
    %1223 = vmatprep.subr.mxu0 0.0
    %1224 = vmatpush1.msra.mxu0 %v294
    %1225 = vmatprep.subr.mxu0 0.0
    %1226 = vmatpush1.msra.mxu0 %v295
    %1227 = vmatprep.subr.mxu0 0.0
    %1228 = vmatpush1.msra.mxu0 %v296
    %1229 = vmatprep.subr.mxu0 0.0
    %1230 = vmatpush1.msra.mxu0 %v297
    %1231 = vmatprep.subr.mxu0 0.0
    %1232 = vmatpush1.msra.mxu0 %v298
    %1233 = vmatprep.subr.mxu0 0.0
    %1234 = vmatpush1.msra.mxu0 %v299
    %1235 = vmatprep.subr.mxu0 0.0
    %1236 = vmatpush1.msra.mxu0 %v300
    %1237 = vmatprep.subr.mxu0 0.0
    %1238 = vmatpush1.msra.mxu0 %v301
    %1239 = vmatprep.subr.mxu0 0.0
    %1240 = vmatpush1.msra.mxu0 %v302
    %1241 = vmatprep.subr.mxu0 0.0
    %1242 = vmatpush1.msra.mxu0 %v303
    %1243 = vmatprep.subr.mxu0 0.0
    %1244 = vmatpush1.msra.mxu0 %v304
    %1245 = vmatprep.subr.mxu0 0.0
    %1246 = vmatpush1.msra.mxu0 %v305
    %1247 = vmatprep.subr.mxu0 0.0
    %1248 = vmatpush1.msra.mxu0 %v306
    %1249 = vmatprep.subr.mxu0 0.0
    %1250 = vmatpush1.msra.mxu0 %v307
    %1251 = vmatprep.subr.mxu0 0.0
    %1252 = vmatpush1.msra.mxu0 %v308
    %1253 = vmatprep.subr.mxu0 0.0
    %1254 = vmatpush1.msra.mxu0 %v309
    %1255 = vmatprep.mubr.f32.mxu0 %v567
    %1256 = vmatmul.mubr.f32.gmra.mrb[0].mxu0 %v559
    %v1257 = vpop.f32.mrb[0].mxu0
    %v1258 = vadd.f32 %v1188, %v1257
    %v1259 = vpop.f32.mrb[0].mxu0
    %1260 = vdwg.mxu0
    %1261 = vmatprep.subr.mxu0 0.0
    %1262 = vmatpush1.msra.mxu0 %v310
    %1263 = vmatprep.subr.mxu0 0.0
    %1264 = vmatpush1.msra.mxu0 %v311
    %1265 = vmatprep.subr.mxu0 0.0
    %1266 = vmatpush1.msra.mxu0 %v312
    %1267 = vmatprep.subr.mxu0 0.0
    %1268 = vmatpush1.msra.mxu0 %v313
    %1269 = vmatprep.subr.mxu0 0.0
    %1270 = vmatpush1.msra.mxu0 %v314
    %1271 = vmatprep.subr.mxu0 0.0
    %1272 = vmatpush1.msra.mxu0 %v315
    %1273 = vmatprep.subr.mxu0 0.0
    %1274 = vmatpush1.msra.mxu0 %v316
    %1275 = vmatprep.subr.mxu0 0.0
    %1276 = vmatpush1.msra.mxu0 %v317
    %1277 = vmatprep.subr.mxu0 0.0
    %1278 = vmatpush1.msra.mxu0 %v318
    %1279 = vmatprep.subr.mxu0 0.0
    %1280 = vmatpush1.msra.mxu0 %v319
    %1281 = vmatprep.subr.mxu0 0.0
    %1282 = vmatpush1.msra.mxu0 %v320
    %1283 = vmatprep.subr.mxu0 0.0
    %1284 = vmatpush1.msra.mxu0 %v321
    %1285 = vmatprep.subr.mxu0 0.0
    %1286 = vmatpush1.msra.mxu0 %v322
    %1287 = vmatprep.subr.mxu0 0.0
    %1288 = vmatpush1.msra.mxu0 %v323
    %1289 = vmatprep.subr.mxu0 0.0
    %1290 = vmatpush1.msra.mxu0 %v324
    %1291 = vmatprep.subr.mxu0 0.0
    %1292 = vmatpush1.msra.mxu0 %v325
    %1293 = vmatprep.subr.mxu0 0.0
    %1294 = vmatpush1.msra.mxu0 %v326
    %1295 = vmatprep.subr.mxu0 0.0
    %1296 = vmatpush1.msra.mxu0 %v327
    %1297 = vmatprep.subr.mxu0 0.0
    %1298 = vmatpush1.msra.mxu0 %v328
    %1299 = vmatprep.subr.mxu0 0.0
    %1300 = vmatpush1.msra.mxu0 %v329
    %1301 = vmatprep.subr.mxu0 0.0
    %1302 = vmatpush1.msra.mxu0 %v330
    %1303 = vmatprep.subr.mxu0 0.0
    %1304 = vmatpush1.msra.mxu0 %v331
    %1305 = vmatprep.subr.mxu0 0.0
    %1306 = vmatpush1.msra.mxu0 %v332
    %1307 = vmatprep.subr.mxu0 0.0
    %1308 = vmatpush1.msra.mxu0 %v333
    %1309 = vmatprep.subr.mxu0 0.0
    %1310 = vmatpush1.msra.mxu0 %v334
    %1311 = vmatprep.subr.mxu0 0.0
    %1312 = vmatpush1.msra.mxu0 %v335
    %1313 = vmatprep.subr.mxu0 0.0
    %1314 = vmatpush1.msra.mxu0 %v336
    %1315 = vmatprep.subr.mxu0 0.0
    %1316 = vmatpush1.msra.mxu0 %v337
    %1317 = vmatprep.subr.mxu0 0.0
    %1318 = vmatpush1.msra.mxu0 %v338
    %1319 = vmatprep.subr.mxu0 0.0
    %1320 = vmatpush1.msra.mxu0 %v339
    %1321 = vmatprep.subr.mxu0 0.0
    %1322 = vmatpush1.msra.mxu0 %v340
    %1323 = vmatprep.subr.mxu0 0.0
    %1324 = vmatpush1.msra.mxu0 %v341
    %1325 = vmatprep.mubr.f32.mxu0 %v568
    %1326 = vmatmul.mubr.f32.gmra.mrb[0].mxu0 %v566
    %v1327 = vpop.f32.mrb[0].mxu0
    %v1328 = vadd.f32 %v1258, %v1327
    %v1329 = vpop.f32.mrb[0].mxu0
    %1330 = vdwg.mxu0
    %1331 = vmatprep.subr.mxu0 0.0
    %1332 = vmatpush1.msra.mxu0 %v342
    %1333 = vmatprep.subr.mxu0 0.0
    %1334 = vmatpush1.msra.mxu0 %v343
    %1335 = vmatprep.subr.mxu0 0.0
    %1336 = vmatpush1.msra.mxu0 %v344
    %1337 = vmatprep.subr.mxu0 0.0
    %1338 = vmatpush1.msra.mxu0 %v345
    %1339 = vmatprep.subr.mxu0 0.0
    %1340 = vmatpush1.msra.mxu0 %v346
    %1341 = vmatprep.subr.mxu0 0.0
    %1342 = vmatpush1.msra.mxu0 %v347
    %1343 = vmatprep.subr.mxu0 0.0
    %1344 = vmatpush1.msra.mxu0 %v348
    %1345 = vmatprep.subr.mxu0 0.0
    %1346 = vmatpush1.msra.mxu0 %v349
    %1347 = vmatprep.subr.mxu0 0.0
    %1348 = vmatpush1.msra.mxu0 %v350
    %1349 = vmatprep.subr.mxu0 0.0
    %1350 = vmatpush1.msra.mxu0 %v351
    %1351 = vmatprep.subr.mxu0 0.0
    %1352 = vmatpush1.msra.mxu0 %v352
    %1353 = vmatprep.subr.mxu0 0.0
    %1354 = vmatpush1.msra.mxu0 %v353
    %1355 = vmatprep.subr.mxu0 0.0
    %1356 = vmatpush1.msra.mxu0 %v354
    %1357 = vmatprep.subr.mxu0 0.0
    %1358 = vmatpush1.msra.mxu0 %v355
    %1359 = vmatprep.subr.mxu0 0.0
    %1360 = vmatpush1.msra.mxu0 %v356
    %1361 = vmatprep.subr.mxu0 0.0
    %1362 = vmatpush1.msra.mxu0 %v357
    %1363 = vmatprep.subr.mxu0 0.0
    %1364 = vmatpush1.msra.mxu0 %v358
    %1365 = vmatprep.subr.mxu0 0.0
    %1366 = vmatpush1.msra.mxu0 %v359
    %1367 = vmatprep.subr.mxu0 0.0
    %1368 = vmatpush1.msra.mxu0 %v360
    %1369 = vmatprep.subr.mxu0 0.0
    %1370 = vmatpush1.msra.mxu0 %v361
    %1371 = vmatprep.subr.mxu0 0.0
    %1372 = vmatpush1.msra.mxu0 %v362
    %1373 = vmatprep.subr.mxu0 0.0
    %1374 = vmatpush1.msra.mxu0 %v363
    %1375 = vmatprep.subr.mxu0 0.0
    %1376 = vmatpush1.msra.mxu0 %v364
    %1377 = vmatprep.subr.mxu0 0.0
    %1378 = vmatpush1.msra.mxu0 %v365
    %1379 = vmatprep.subr.mxu0 0.0
    %1380 = vmatpush1.msra.mxu0 %v366
    %1381 = vmatprep.subr.mxu0 0.0
    %1382 = vmatpush1.msra.mxu0 %v367
    %1383 = vmatprep.subr.mxu0 0.0
    %1384 = vmatpush1.msra.mxu0 %v368
    %1385 = vmatprep.subr.mxu0 0.0
    %1386 = vmatpush1.msra.mxu0 %v369
    %1387 = vmatprep.subr.mxu0 0.0
    %1388 = vmatpush1.msra.mxu0 %v370
    %1389 = vmatprep.subr.mxu0 0.0
    %1390 = vmatpush1.msra.mxu0 %v371
    %1391 = vmatprep.subr.mxu0 0.0
    %1392 = vmatpush1.msra.mxu0 %v372
    %1393 = vmatprep.subr.mxu0 0.0
    %1394 = vmatpush1.msra.mxu0 %v373
    %1395 = vmatprep.mubr.f32.mxu0 %v584
    %1396 = vmatmul.mubr.f32.gmra.mrb[0].mxu0 %v576
    %v1397 = vpop.f32.mrb[0].mxu0
    %v1398 = vadd.f32 %v1328, %v1397
    %v1399 = vpop.f32.mrb[0].mxu0
    %1400 = vdwg.mxu0
    %1401 = vmatprep.subr.mxu0 0.0
    %1402 = vmatpush1.msra.mxu0 %v374
    %1403 = vmatprep.subr.mxu0 0.0
    %1404 = vmatpush1.msra.mxu0 %v375
    %1405 = vmatprep.subr.mxu0 0.0
    %1406 = vmatpush1.msra.mxu0 %v376
    %1407 = vmatprep.subr.mxu0 0.0
    %1408 = vmatpush1.msra.mxu0 %v377
    %1409 = vmatprep.subr.mxu0 0.0
    %1410 = vmatpush1.msra.mxu0 %v378
    %1411 = vmatprep.subr.mxu0 0.0
    %1412 = vmatpush1.msra.mxu0 %v379
    %1413 = vmatprep.subr.mxu0 0.0
    %1414 = vmatpush1.msra.mxu0 %v380
    %1415 = vmatprep.subr.mxu0 0.0
    %1416 = vmatpush1.msra.mxu0 %v381
    %1417 = vmatprep.subr.mxu0 0.0
    %1418 = vmatpush1.msra.mxu0 %v382
    %1419 = vmatprep.subr.mxu0 0.0
    %1420 = vmatpush1.msra.mxu0 %v383
    %1421 = vmatprep.subr.mxu0 0.0
    %1422 = vmatpush1.msra.mxu0 %v384
    %1423 = vmatprep.subr.mxu0 0.0
    %1424 = vmatpush1.msra.mxu0 %v385
    %1425 = vmatprep.subr.mxu0 0.0
    %1426 = vmatpush1.msra.mxu0 %v386
    %1427 = vmatprep.subr.mxu0 0.0
    %1428 = vmatpush1.msra.mxu0 %v387
    %1429 = vmatprep.subr.mxu0 0.0
    %1430 = vmatpush1.msra.mxu0 %v388
    %1431 = vmatprep.subr.mxu0 0.0
    %1432 = vmatpush1.msra.mxu0 %v389
    %1433 = vmatprep.subr.mxu0 0.0
    %1434 = vmatpush1.msra.mxu0 %v390
    %1435 = vmatprep.subr.mxu0 0.0
    %1436 = vmatpush1.msra.mxu0 %v391
    %1437 = vmatprep.subr.mxu0 0.0
    %1438 = vmatpush1.msra.mxu0 %v392
    %1439 = vmatprep.subr.mxu0 0.0
    %1440 = vmatpush1.msra.mxu0 %v393
    %1441 = vmatprep.subr.mxu0 0.0
    %1442 = vmatpush1.msra.mxu0 %v394
    %1443 = vmatprep.subr.mxu0 0.0
    %1444 = vmatpush1.msra.mxu0 %v395
    %1445 = vmatprep.subr.mxu0 0.0
    %1446 = vmatpush1.msra.mxu0 %v396
    %1447 = vmatprep.subr.mxu0 0.0
    %1448 = vmatpush1.msra.mxu0 %v397
    %1449 = vmatprep.subr.mxu0 0.0
    %1450 = vmatpush1.msra.mxu0 %v398
    %1451 = vmatprep.subr.mxu0 0.0
    %1452 = vmatpush1.msra.mxu0 %v399
    %1453 = vmatprep.subr.mxu0 0.0
    %1454 = vmatpush1.msra.mxu0 %v400
    %1455 = vmatprep.subr.mxu0 0.0
    %1456 = vmatpush1.msra.mxu0 %v401
    %1457 = vmatprep.subr.mxu0 0.0
    %1458 = vmatpush1.msra.mxu0 %v402
    %1459 = vmatprep.subr.mxu0 0.0
    %1460 = vmatpush1.msra.mxu0 %v403
    %1461 = vmatprep.subr.mxu0 0.0
    %1462 = vmatpush1.msra.mxu0 %v404
    %1463 = vmatprep.subr.mxu0 0.0
    %1464 = vmatpush1.msra.mxu0 %v405
    %1465 = vmatprep.mubr.f32.mxu0 %v585
    %1466 = vmatmul.mubr.f32.gmra.mrb[0].mxu0 %v583
    %v1467 = vpop.f32.mrb[0].mxu0
    %v1468 = vadd.f32 %v1398, %v1467
    %v1469 = vpop.f32.mrb[0].mxu0
    %1470 = vdwg.mxu0
    %1471 = vmatprep.subr.mxu0 0.0
    %1472 = vmatpush1.msra.mxu0 %v406
    %1473 = vmatprep.subr.mxu0 0.0
    %1474 = vmatpush1.msra.mxu0 %v407
    %1475 = vmatprep.subr.mxu0 0.0
    %1476 = vmatpush1.msra.mxu0 %v408
    %1477 = vmatprep.subr.mxu0 0.0
    %1478 = vmatpush1.msra.mxu0 %v409
    %1479 = vmatprep.subr.mxu0 0.0
    %1480 = vmatpush1.msra.mxu0 %v410
    %1481 = vmatprep.subr.mxu0 0.0
    %1482 = vmatpush1.msra.mxu0 %v411
    %1483 = vmatprep.subr.mxu0 0.0
    %1484 = vmatpush1.msra.mxu0 %v412
    %1485 = vmatprep.subr.mxu0 0.0
    %1486 = vmatpush1.msra.mxu0 %v413
    %1487 = vmatprep.subr.mxu0 0.0
    %1488 = vmatpush1.msra.mxu0 %v414
    %1489 = vmatprep.subr.mxu0 0.0
    %1490 = vmatpush1.msra.mxu0 %v415
    %1491 = vmatprep.subr.mxu0 0.0
    %1492 = vmatpush1.msra.mxu0 %v416
    %1493 = vmatprep.subr.mxu0 0.0
    %1494 = vmatpush1.msra.mxu0 %v417
    %1495 = vmatprep.subr.mxu0 0.0
    %1496 = vmatpush1.msra.mxu0 %v418
    %1497 = vmatprep.subr.mxu0 0.0
    %1498 = vmatpush1.msra.mxu0 %v419
    %1499 = vmatprep.subr.mxu0 0.0
    %1500 = vmatpush1.msra.mxu0 %v420
    %1501 = vmatprep.subr.mxu0 0.0
    %1502 = vmatpush1.msra.mxu0 %v421
    %1503 = vmatprep.subr.mxu0 0.0
    %1504 = vmatpush1.msra.mxu0 %v422
    %1505 = vmatprep.subr.mxu0 0.0
    %1506 = vmatpush1.msra.mxu0 %v423
    %1507 = vmatprep.subr.mxu0 0.0
    %1508 = vmatpush1.msra.mxu0 %v424
    %1509 = vmatprep.subr.mxu0 0.0
    %1510 = vmatpush1.msra.mxu0 %v425
    %1511 = vmatprep.subr.mxu0 0.0
    %1512 = vmatpush1.msra.mxu0 %v426
    %1513 = vmatprep.subr.mxu0 0.0
    %1514 = vmatpush1.msra.mxu0 %v427
    %1515 = vmatprep.subr.mxu0 0.0
    %1516 = vmatpush1.msra.mxu0 %v428
    %1517 = vmatprep.subr.mxu0 0.0
    %1518 = vmatpush1.msra.mxu0 %v429
    %1519 = vmatprep.subr.mxu0 0.0
    %1520 = vmatpush1.msra.mxu0 %v430
    %1521 = vmatprep.subr.mxu0 0.0
    %1522 = vmatpush1.msra.mxu0 %v431
    %1523 = vmatprep.subr.mxu0 0.0
    %1524 = vmatpush1.msra.mxu0 %v432
    %1525 = vmatprep.subr.mxu0 0.0
    %1526 = vmatpush1.msra.mxu0 %v433
    %1527 = vmatprep.subr.mxu0 0.0
    %1528 = vmatpush1.msra.mxu0 %v434
    %1529 = vmatprep.subr.mxu0 0.0
    %1530 = vmatpush1.msra.mxu0 %v435
    %1531 = vmatprep.subr.mxu0 0.0
    %1532 = vmatpush1.msra.mxu0 %v436
    %1533 = vmatprep.subr.mxu0 0.0
    %1534 = vmatpush1.msra.mxu0 %v437
    %1535 = vmatprep.mubr.f32.mxu0 %v601
    %1536 = vmatmul.mubr.f32.gmra.mrb[0].mxu0 %v593
    %v1537 = vpop.f32.mrb[0].mxu0
    %v1538 = vadd.f32 %v1468, %v1537
    %v1539 = vpop.f32.mrb[0].mxu0
    %1540 = vdwg.mxu0
    %1541 = vmatprep.subr.mxu0 0.0
    %1542 = vmatpush1.msra.mxu0 %v438
    %1543 = vmatprep.subr.mxu0 0.0
    %1544 = vmatpush1.msra.mxu0 %v439
    %1545 = vmatprep.subr.mxu0 0.0
    %1546 = vmatpush1.msra.mxu0 %v440
    %1547 = vmatprep.subr.mxu0 0.0
    %1548 = vmatpush1.msra.mxu0 %v441
    %1549 = vmatprep.subr.mxu0 0.0
    %1550 = vmatpush1.msra.mxu0 %v442
    %1551 = vmatprep.subr.mxu0 0.0
    %1552 = vmatpush1.msra.mxu0 %v443
    %1553 = vmatprep.subr.mxu0 0.0
    %1554 = vmatpush1.msra.mxu0 %v444
    %1555 = vmatprep.subr.mxu0 0.0
    %1556 = vmatpush1.msra.mxu0 %v445
    %1557 = vmatprep.subr.mxu0 0.0
    %1558 = vmatpush1.msra.mxu0 %v446
    %1559 = vmatprep.subr.mxu0 0.0
    %1560 = vmatpush1.msra.mxu0 %v447
    %1561 = vmatprep.subr.mxu0 0.0
    %1562 = vmatpush1.msra.mxu0 %v448
    %1563 = vmatprep.subr.mxu0 0.0
    %1564 = vmatpush1.msra.mxu0 %v449
    %1565 = vmatprep.subr.mxu0 0.0
    %1566 = vmatpush1.msra.mxu0 %v450
    %1567 = vmatprep.subr.mxu0 0.0
    %1568 = vmatpush1.msra.mxu0 %v451
    %1569 = vmatprep.subr.mxu0 0.0
    %1570 = vmatpush1.msra.mxu0 %v452
    %1571 = vmatprep.subr.mxu0 0.0
    %1572 = vmatpush1.msra.mxu0 %v453
    %1573 = vmatprep.subr.mxu0 0.0
    %1574 = vmatpush1.msra.mxu0 %v454
    %1575 = vmatprep.subr.mxu0 0.0
    %1576 = vmatpush1.msra.mxu0 %v455
    %1577 = vmatprep.subr.mxu0 0.0
    %1578 = vmatpush1.msra.mxu0 %v456
    %1579 = vmatprep.subr.mxu0 0.0
    %1580 = vmatpush1.msra.mxu0 %v457
    %1581 = vmatprep.subr.mxu0 0.0
    %1582 = vmatpush1.msra.mxu0 %v458
    %1583 = vmatprep.subr.mxu0 0.0
    %1584 = vmatpush1.msra.mxu0 %v459
    %1585 = vmatprep.subr.mxu0 0.0
    %1586 = vmatpush1.msra.mxu0 %v460
    %1587 = vmatprep.subr.mxu0 0.0
    %1588 = vmatpush1.msra.mxu0 %v461
    %1589 = vmatprep.subr.mxu0 0.0
    %1590 = vmatpush1.msra.mxu0 %v462
    %1591 = vmatprep.subr.mxu0 0.0
    %1592 = vmatpush1.msra.mxu0 %v463
    %1593 = vmatprep.subr.mxu0 0.0
    %1594 = vmatpush1.msra.mxu0 %v464
    %1595 = vmatprep.subr.mxu0 0.0
    %1596 = vmatpush1.msra.mxu0 %v465
    %1597 = vmatprep.subr.mxu0 0.0
    %1598 = vmatpush1.msra.mxu0 %v466
    %1599 = vmatprep.subr.mxu0 0.0
    %1600 = vmatpush1.msra.mxu0 %v467
    %1601 = vmatprep.subr.mxu0 0.0
    %1602 = vmatpush1.msra.mxu0 %v468
    %1603 = vmatprep.subr.mxu0 0.0
    %1604 = vmatpush1.msra.mxu0 %v469
    %1605 = vmatprep.mubr.f32.mxu0 %v602
    %1606 = vmatmul.mubr.f32.gmra.mrb[0].mxu0 %v600
    %v1607 = vpop.f32.mrb[0].mxu0
    %v1608 = vadd.f32 %v1538, %v1607
    %v1609 = vpop.f32.mrb[0].mxu0
    %1610 = vdwg.mxu0
    %1611 = vst [vmem:[#allocation2] sm:$0x3] %v1608
    // Predicated region
    $region14: #{forward.3} parent=1 // pred_check
      _
    $region15: #{forward.3} parent=1 // pred_check_branch
      %1613 = sbr.rel (0) target = $region17
    $region16: #{forward.3} parent=1 // pred_region
      %s1615 = ssub.s32 32, 32
      %1616 = vsyncadd [#allocation3], %s1615
      %s1618 = sshll.u32 [#allocation2], 4
      %s1619 = int_to_ptr.vmem [resolvable:$true] %s1618
      %1621 = dma.vmem_to_hbm [thread:$0]  %s1619, 32, %s3, [#allocation3]
    $region17: #{forward.3} parent=1 // pred_fallthru
      _
    // Predicated region
    $region18: #{forward.3} parent=1 // pred_check
      _
    $region19: #{forward.3} parent=1 // pred_check_branch
      %1623 = sbr.rel (0) target = $region21
    $region20: #{forward.3} parent=1 // pred_region
      %1624 = dma.done [#allocation3], 32
    $region21: #{forward.3} parent=1 // pred_fallthru
      _
    %1625 = vsyncpa [#allocation3], 1

// kernel: forward.2
$region0: #{forward.2}
  #allocation0 [shape = 'u32[]', space=smem, size = 0x4, offset = 0x4, fixed_abs, tag = 'smem constant byte address 0x4 - core index']
  #allocation1 [shape = 'u32[144,128]{1,0:T(1,128)}', space=vmem, size = 0x12000, scoped, tag = 'internal scratch']
  %s0 = inlined_call_operand.vmem [shape: f32[2,28,8,24], index: 0, kind: input, shape index: {}]
  %s1 = inlined_call_operand.vmem [shape: f32[24,128], index: 1, kind: input, shape index: {}]
  %s2 = inlined_call_operand.vmem [shape: f32[1,128], index: 2, kind: input, shape index: {}]
  %s3 = inlined_call_operand.vmem [shape: f32[384,128], index: 3, kind: input, shape index: {}]
  %s4 = inlined_call_operand.vmem [shape: f32[1,128], index: 4, kind: input, shape index: {}]
  %s5 = inlined_call_operand.vmem [shape: f32[2,7,8,64], index: 5, kind: output, shape index: {}]
  %s6 = sld [smem:[#allocation0]]
  $region30: #{forward.2} parent=0
    _
  %s8 = ssub.s32 1, %s6
  %s9 = scalar_select 0, %s8, %s6
  // Predicated region
  $region2: #{forward.2} parent=0 // pred_check
    _
  $region3: #{forward.2} parent=0 // pred_check_branch
    %11 = sbr.rel (0) target = $region5
  $region4: #{forward.2} parent=0 // pred_region
    _
  $region5: #{forward.2} parent=0 // pred_fallthru
    _
  // Predicated region
  $region6: #{forward.2} parent=0 // pred_check
    _
  $region7: #{forward.2} parent=0 // pred_check_branch
    %13 = sbr.rel (0) target = $region9
  $region8: #{forward.2} parent=0 // pred_region
    _
  $region9: #{forward.2} parent=0 // pred_fallthru
    _
  // Predicated region
  $region10: #{forward.2} parent=0 // pred_check
    _
  $region11: #{forward.2} parent=0 // pred_check_branch
    %15 = sbr.rel (0) target = $region13
  $region12: #{forward.2} parent=0 // pred_region
    _
  $region13: #{forward.2} parent=0 // pred_fallthru
    _
  // Predicated region
  $region14: #{forward.2} parent=0 // pred_check
    _
  $region15: #{forward.2} parent=0 // pred_check_branch
    %17 = sbr.rel (0) target = $region17
  $region16: #{forward.2} parent=0 // pred_region
    _
  $region17: #{forward.2} parent=0 // pred_fallthru
    _
  // Predicated region
  $region18: #{forward.2} parent=0 // pred_check
    _
  $region19: #{forward.2} parent=0 // pred_check_branch
    %19 = sbr.rel (0) target = $region21
  $region20: #{forward.2} parent=0 // pred_region
    _
  $region21: #{forward.2} parent=0 // pred_fallthru
    _
  %v20 = vld [vmem:[%s0] sm:$0xff]
  %v21 = vld [vmem:[%s0 + $0x8] sm:$0xff]
  %v22 = vld [vmem:[%s0 + $0x10] sm:$0xff]
  %v23 = vld [vmem:[%s0 + $0x18] sm:$0xff]
  %v24 = vld [vmem:[%s0 + $0x20] sm:$0xff]
  %v25 = vld [vmem:[%s0 + $0x28] sm:$0xff]
  %v26 = vld [vmem:[%s0 + $0x30] sm:$0xff]
  %v27 = vld [vmem:[%s0 + $0x38] sm:$0xff]
  %v28 = vld [vmem:[%s0 + $0x40] sm:$0xff]
  %v29 = vld [vmem:[%s0 + $0x48] sm:$0xff]
  %v30 = vld [vmem:[%s0 + $0x50] sm:$0xff]
  %v31 = vld [vmem:[%s0 + $0x58] sm:$0xff]
  %v32 = vld [vmem:[%s0 + $0x60] sm:$0xff]
  %v33 = vld [vmem:[%s0 + $0x68] sm:$0xff]
  %v34 = vld [vmem:[%s0 + $0x70] sm:$0xff]
  %v35 = vld [vmem:[%s0 + $0x78] sm:$0xff]
  %v36 = vld [vmem:[%s0 + $0x80] sm:$0xff]
  %v37 = vld [vmem:[%s0 + $0x88] sm:$0xff]
  %v38 = vld [vmem:[%s0 + $0x90] sm:$0xff]
  %v39 = vld [vmem:[%s0 + $0x98] sm:$0xff]
  %v40 = vld [vmem:[%s0 + $0xa0] sm:$0xff]
  %v41 = vld [vmem:[%s0 + $0xa8] sm:$0xff]
  %v42 = vld [vmem:[%s0 + $0xb0] sm:$0xff]
  %v43 = vld [vmem:[%s0 + $0xb8] sm:$0xff]
  %v44 = vld [vmem:[%s0 + $0xc0] sm:$0xff]
  %v45 = vld [vmem:[%s0 + $0xc8] sm:$0xff]
  %v46 = vld [vmem:[%s0 + $0xd0] sm:$0xff]
  %v47 = vld [vmem:[%s0 + $0xd8] sm:$0xff]
  %v48 = vld [vmem:[%s0 + $0xe0] sm:$0xff]
  %v49 = vld [vmem:[%s0 + $0xe8] sm:$0xff]
  %v50 = vld [vmem:[%s0 + $0xf0] sm:$0xff]
  %v51 = vld [vmem:[%s0 + $0xf8] sm:$0xff]
  %v52 = vld [vmem:[%s0 + $0x100] sm:$0xff]
  %v53 = vld [vmem:[%s0 + $0x108] sm:$0xff]
  %v54 = vld [vmem:[%s0 + $0x110] sm:$0xff]
  %v55 = vld [vmem:[%s0 + $0x118] sm:$0xff]
  %v56 = vld [vmem:[%s0 + $0x120] sm:$0xff]
  %v57 = vld [vmem:[%s0 + $0x128] sm:$0xff]
  %v58 = vld [vmem:[%s0 + $0x130] sm:$0xff]
  %v59 = vld [vmem:[%s0 + $0x138] sm:$0xff]
  %v60 = vld [vmem:[%s0 + $0x140] sm:$0xff]
  %v61 = vld [vmem:[%s0 + $0x148] sm:$0xff]
  %v62 = vld [vmem:[%s0 + $0x150] sm:$0xff]
  %v63 = vld [vmem:[%s0 + $0x158] sm:$0xff]
  %v64 = vld [vmem:[%s0 + $0x160] sm:$0xff]
  %v65 = vld [vmem:[%s0 + $0x168] sm:$0xff]
  %v66 = vld [vmem:[%s0 + $0x170] sm:$0xff]
  %v67 = vld [vmem:[%s0 + $0x178] sm:$0xff]
  %v68 = vld [vmem:[%s0 + $0x180] sm:$0xff]
  %v69 = vld [vmem:[%s0 + $0x188] sm:$0xff]
  %v70 = vld [vmem:[%s0 + $0x190] sm:$0xff]
  %v71 = vld [vmem:[%s0 + $0x198] sm:$0xff]
  %v72 = vld [vmem:[%s0 + $0x1a0] sm:$0xff]
  %v73 = vld [vmem:[%s0 + $0x1a8] sm:$0xff]
  %v74 = vld [vmem:[%s0 + $0x1b0] sm:$0xff]
  %v75 = vld [vmem:[%s0 + $0x1b8] sm:$0xff]
  %v76 = vld [vmem:[%s1] sm:$0xff]
  %v77 = vld [vmem:[%s1 + $0x8] sm:$0xff]
  %v78 = vld [vmem:[%s1 + $0x10] sm:$0xff]
  %v79 = vld [vmem:[%s2] sm:$0x1]
  %v81 = vlaneseq
  %v82 = vshrl.u32 %v81, 7
  %v83 = vsub.s32 0, %v82
  %v84 = vrot.slane %v79, %v83
  %vm86 = vcmask 195584
  %v88 = vsel %vm86, %v20, 0
  %v91 = vsel %vm86, %v21, 0
  %v94 = vsel %vm86, %v22, 0
  %v97 = vsel %vm86, %v23, 0
  %v100 = vsel %vm86, %v24, 0
  %v103 = vsel %vm86, %v25, 0
  %v106 = vsel %vm86, %v26, 0
  %v109 = vsel %vm86, %v27, 0
  %v112 = vsel %vm86, %v28, 0
  %v115 = vsel %vm86, %v29, 0
  %v118 = vsel %vm86, %v30, 0
  %v121 = vsel %vm86, %v31, 0
  %v124 = vsel %vm86, %v32, 0
  %v127 = vsel %vm86, %v33, 0
  %v130 = vsel %vm86, %v34, 0
  %v133 = vsel %vm86, %v35, 0
  %v136 = vsel %vm86, %v36, 0
  %v139 = vsel %vm86, %v37, 0
  %v142 = vsel %vm86, %v38, 0
  %v145 = vsel %vm86, %v39, 0
  %v148 = vsel %vm86, %v40, 0
  %v151 = vsel %vm86, %v41, 0
  %v154 = vsel %vm86, %v42, 0
  %v157 = vsel %vm86, %v43, 0
  %v160 = vsel %vm86, %v44, 0
  %v163 = vsel %vm86, %v45, 0
  %v166 = vsel %vm86, %v46, 0
  %v169 = vsel %vm86, %v47, 0
  %v172 = vsel %vm86, %v48, 0
  %v175 = vsel %vm86, %v49, 0
  %v178 = vsel %vm86, %v50, 0
  %v181 = vsel %vm86, %v51, 0
  %v184 = vsel %vm86, %v52, 0
  %v187 = vsel %vm86, %v53, 0
  %v190 = vsel %vm86, %v54, 0
  %v193 = vsel %vm86, %v55, 0
  %v196 = vsel %vm86, %v56, 0
  %v199 = vsel %vm86, %v57, 0
  %v202 = vsel %vm86, %v58, 0
  %v205 = vsel %vm86, %v59, 0
  %v208 = vsel %vm86, %v60, 0
  %v211 = vsel %vm86, %v61, 0
  %v214 = vsel %vm86, %v62, 0
  %v217 = vsel %vm86, %v63, 0
  %v220 = vsel %vm86, %v64, 0
  %v223 = vsel %vm86, %v65, 0
  %v226 = vsel %vm86, %v66, 0
  %v229 = vsel %vm86, %v67, 0
  %v232 = vsel %vm86, %v68, 0
  %v235 = vsel %vm86, %v69, 0
  %v238 = vsel %vm86, %v70, 0
  %v241 = vsel %vm86, %v71, 0
  %v244 = vsel %vm86, %v72, 0
  %v247 = vsel %vm86, %v73, 0
  %v250 = vsel %vm86, %v74, 0
  %v253 = vsel %vm86, %v75, 0
  %255 = vmatprep.subr.mxu0 0.0
  %256 = vmatpush1.msra.mxu0 %v76
  %257 = vmatprep.subr.mxu0 0.0
  %258 = vmatpush1.msra.mxu0 %v77
  %259 = vmatprep.subr.mxu0 0.0
  %260 = vmatpush1.msra.mxu0 %v78
  %261 = vmatprep.subr.mxu0 0.0
  %262 = vmatpush1.msra.mxu0 0.0
  %263 = vmatprep.subr.mxu0 0.0
  %264 = vmatpush1.msra.mxu0 0.0
  %265 = vmatprep.subr.mxu0 0.0
  %266 = vmatpush1.msra.mxu0 0.0
  %267 = vmatprep.subr.mxu0 0.0
  %268 = vmatpush1.msra.mxu0 0.0
  %269 = vmatprep.subr.mxu0 0.0
  %270 = vmatpush1.msra.mxu0 0.0
  %271 = vmatprep.subr.mxu0 0.0
  %272 = vmatpush1.msra.mxu0 0.0
  %273 = vmatprep.subr.mxu0 0.0
  %274 = vmatpush1.msra.mxu0 0.0
  %275 = vmatprep.subr.mxu0 0.0
  %276 = vmatpush1.msra.mxu0 0.0
  %277 = vmatprep.subr.mxu0 0.0
  %278 = vmatpush1.msra.mxu0 0.0
  %279 = vmatprep.subr.mxu0 0.0
  %280 = vmatpush1.msra.mxu0 0.0
  %281 = vmatprep.subr.mxu0 0.0
  %282 = vmatpush1.msra.mxu0 0.0
  %283 = vmatprep.subr.mxu0 0.0
  %284 = vmatpush1.msra.mxu0 0.0
  %285 = vmatprep.subr.mxu0 0.0
  %286 = vmatpush1.msra.mxu0 0.0
  %287 = vmatprep.subr.mxu0 0.0
  %288 = vmatpush1.msra.mxu0 0.0
  %289 = vmatprep.subr.mxu0 0.0
  %290 = vmatpush1.msra.mxu0 0.0
  %291 = vmatprep.subr.mxu0 0.0
  %292 = vmatpush1.msra.mxu0 0.0
  %293 = vmatprep.subr.mxu0 0.0
  %294 = vmatpush1.msra.mxu0 0.0
  %295 = vmatprep.subr.mxu0 0.0
  %296 = vmatpush1.msra.mxu0 0.0
  %297 = vmatprep.subr.mxu0 0.0
  %298 = vmatpush1.msra.mxu0 0.0
  %299 = vmatprep.subr.mxu0 0.0
  %300 = vmatpush1.msra.mxu0 0.0
  %301 = vmatprep.subr.mxu0 0.0
  %302 = vmatpush1.msra.mxu0 0.0
  %303 = vmatprep.subr.mxu0 0.0
  %304 = vmatpush1.msra.mxu0 0.0
  %305 = vmatprep.subr.mxu0 0.0
  %306 = vmatpush1.msra.mxu0 0.0
  %307 = vmatprep.subr.mxu0 0.0
  %308 = vmatpush1.msra.mxu0 0.0
  %309 = vmatprep.subr.mxu0 0.0
  %310 = vmatpush1.msra.mxu0 0.0
  %311 = vmatprep.subr.mxu0 0.0
  %312 = vmatpush1.msra.mxu0 0.0
  %313 = vmatprep.subr.mxu0 0.0
  %314 = vmatpush1.msra.mxu0 0.0
  %315 = vmatprep.subr.mxu0 0.0
  %316 = vmatpush1.msra.mxu0 0.0
  %317 = vmatprep.subr.mxu0 0.0
  %318 = vmatpush1.msra.mxu0 0.0
  %319 = vmatprep.mubr.f32.mxu0 0.0
  %320 = vmatmul.mubr.f32.gmra.mrb[0].mxu0 %v88
  %v321 = vpop.f32.mrb[0].mxu0
  %v322 = vadd.f32 %v84, %v321
  %v323 = vpop.f32.mrb[0].mxu0
  %324 = vmatprep.mubr.f32.mxu0 0.0
  %325 = vmatmul.mubr.f32.gmra.mrb[0].mxu0 %v91
  %v326 = vpop.f32.mrb[0].mxu0
  %v327 = vadd.f32 %v84, %v326
  %v328 = vpop.f32.mrb[0].mxu0
  %329 = vmatprep.mubr.f32.mxu0 0.0
  %330 = vmatmul.mubr.f32.gmra.mrb[0].mxu0 %v94
  %v331 = vpop.f32.mrb[0].mxu0
  %v332 = vadd.f32 %v84, %v331
  %v333 = vpop.f32.mrb[0].mxu0
  %334 = vmatprep.mubr.f32.mxu0 0.0
  %335 = vmatmul.mubr.f32.gmra.mrb[0].mxu0 %v97
  %v336 = vpop.f32.mrb[0].mxu0
  %v337 = vadd.f32 %v84, %v336
  %v338 = vpop.f32.mrb[0].mxu0
  %339 = vmatprep.mubr.f32.mxu0 0.0
  %340 = vmatmul.mubr.f32.gmra.mrb[0].mxu0 %v100
  %v341 = vpop.f32.mrb[0].mxu0
  %v342 = vadd.f32 %v84, %v341
  %v343 = vpop.f32.mrb[0].mxu0
  %344 = vmatprep.mubr.f32.mxu0 0.0
  %345 = vmatmul.mubr.f32.gmra.mrb[0].mxu0 %v103
  %v346 = vpop.f32.mrb[0].mxu0
  %v347 = vadd.f32 %v84, %v346
  %v348 = vpop.f32.mrb[0].mxu0
  %349 = vmatprep.mubr.f32.mxu0 0.0
  %350 = vmatmul.mubr.f32.gmra.mrb[0].mxu0 %v106
  %v351 = vpop.f32.mrb[0].mxu0
  %v352 = vadd.f32 %v84, %v351
  %v353 = vpop.f32.mrb[0].mxu0
  %354 = vmatprep.mubr.f32.mxu0 0.0
  %355 = vmatmul.mubr.f32.gmra.mrb[0].mxu0 %v109
  %v356 = vpop.f32.mrb[0].mxu0
  %v357 = vadd.f32 %v84, %v356
  %v358 = vpop.f32.mrb[0].mxu0
  %359 = vmatprep.mubr.f32.mxu0 0.0
  %360 = vmatmul.mubr.f32.gmra.mrb[0].mxu0 %v112
  %v361 = vpop.f32.mrb[0].mxu0
  %v362 = vadd.f32 %v84, %v361
  %v363 = vpop.f32.mrb[0].mxu0
  %364 = vmatprep.mubr.f32.mxu0 0.0
  %365 = vmatmul.mubr.f32.gmra.mrb[0].mxu0 %v115
  %v366 = vpop.f32.mrb[0].mxu0
  %v367 = vadd.f32 %v84, %v366
  %v368 = vpop.f32.mrb[0].mxu0
  %369 = vmatprep.mubr.f32.mxu0 0.0
  %370 = vmatmul.mubr.f32.gmra.mrb[0].mxu0 %v118
  %v371 = vpop.f32.mrb[0].mxu0
  %v372 = vadd.f32 %v84, %v371
  %v373 = vpop.f32.mrb[0].mxu0
  %374 = vmatprep.mubr.f32.mxu0 0.0
  %375 = vmatmul.mubr.f32.gmra.mrb[0].mxu0 %v121
  %v376 = vpop.f32.mrb[0].mxu0
  %v377 = vadd.f32 %v84, %v376
  %v378 = vpop.f32.mrb[0].mxu0
  %379 = vmatprep.mubr.f32.mxu0 0.0
  %380 = vmatmul.mubr.f32.gmra.mrb[0].mxu0 %v124
  %v381 = vpop.f32.mrb[0].mxu0
  %v382 = vadd.f32 %v84, %v381
  %v383 = vpop.f32.mrb[0].mxu0
  %384 = vmatprep.mubr.f32.mxu0 0.0
  %385 = vmatmul.mubr.f32.gmra.mrb[0].mxu0 %v127
  %v386 = vpop.f32.mrb[0].mxu0
  %v387 = vadd.f32 %v84, %v386
  %v388 = vpop.f32.mrb[0].mxu0
  %389 = vmatprep.mubr.f32.mxu0 0.0
  %390 = vmatmul.mubr.f32.gmra.mrb[0].mxu0 %v130
  %v391 = vpop.f32.mrb[0].mxu0
  %v392 = vadd.f32 %v84, %v391
  %v393 = vpop.f32.mrb[0].mxu0
  %394 = vmatprep.mubr.f32.mxu0 0.0
  %395 = vmatmul.mubr.f32.gmra.mrb[0].mxu0 %v133
  %v396 = vpop.f32.mrb[0].mxu0
  %v397 = vadd.f32 %v84, %v396
  %v398 = vpop.f32.mrb[0].mxu0
  %399 = vmatprep.mubr.f32.mxu0 0.0
  %400 = vmatmul.mubr.f32.gmra.mrb[0].mxu0 %v136
  %v401 = vpop.f32.mrb[0].mxu0
  %v402 = vadd.f32 %v84, %v401
  %v403 = vpop.f32.mrb[0].mxu0
  %404 = vmatprep.mubr.f32.mxu0 0.0
  %405 = vmatmul.mubr.f32.gmra.mrb[0].mxu0 %v139
  %v406 = vpop.f32.mrb[0].mxu0
  %v407 = vadd.f32 %v84, %v406
  %v408 = vpop.f32.mrb[0].mxu0
  %409 = vmatprep.mubr.f32.mxu0 0.0
  %410 = vmatmul.mubr.f32.gmra.mrb[0].mxu0 %v142
  %v411 = vpop.f32.mrb[0].mxu0
  %v412 = vadd.f32 %v84, %v411
  %v413 = vpop.f32.mrb[0].mxu0
  %414 = vmatprep.mubr.f32.mxu0 0.0
  %415 = vmatmul.mubr.f32.gmra.mrb[0].mxu0 %v145
  %v416 = vpop.f32.mrb[0].mxu0
  %v417 = vadd.f32 %v84, %v416
  %v418 = vpop.f32.mrb[0].mxu0
  %419 = vmatprep.mubr.f32.mxu0 0.0
  %420 = vmatmul.mubr.f32.gmra.mrb[0].mxu0 %v148
  %v421 = vpop.f32.mrb[0].mxu0
  %v422 = vadd.f32 %v84, %v421
  %v423 = vpop.f32.mrb[0].mxu0
  %424 = vmatprep.mubr.f32.mxu0 0.0
  %425 = vmatmul.mubr.f32.gmra.mrb[0].mxu0 %v151
  %v426 = vpop.f32.mrb[0].mxu0
  %v427 = vadd.f32 %v84, %v426
  %v428 = vpop.f32.mrb[0].mxu0
  %429 = vmatprep.mubr.f32.mxu0 0.0
  %430 = vmatmul.mubr.f32.gmra.mrb[0].mxu0 %v154
  %v431 = vpop.f32.mrb[0].mxu0
  %v432 = vadd.f32 %v84, %v431
  %v433 = vpop.f32.mrb[0].mxu0
  %434 = vmatprep.mubr.f32.mxu0 0.0
  %435 = vmatmul.mubr.f32.gmra.mrb[0].mxu0 %v157
  %v436 = vpop.f32.mrb[0].mxu0
  %v437 = vadd.f32 %v84, %v436
  %v438 = vpop.f32.mrb[0].mxu0
  %439 = vmatprep.mubr.f32.mxu0 0.0
  %440 = vmatmul.mubr.f32.gmra.mrb[0].mxu0 %v160
  %v441 = vpop.f32.mrb[0].mxu0
  %v442 = vadd.f32 %v84, %v441
  %v443 = vpop.f32.mrb[0].mxu0
  %444 = vmatprep.mubr.f32.mxu0 0.0
  %445 = vmatmul.mubr.f32.gmra.mrb[0].mxu0 %v163
  %v446 = vpop.f32.mrb[0].mxu0
  %v447 = vadd.f32 %v84, %v446
  %v448 = vpop.f32.mrb[0].mxu0
  %449 = vmatprep.mubr.f32.mxu0 0.0
  %450 = vmatmul.mubr.f32.gmra.mrb[0].mxu0 %v166
  %v451 = vpop.f32.mrb[0].mxu0
  %v452 = vadd.f32 %v84, %v451
  %v453 = vpop.f32.mrb[0].mxu0
  %454 = vmatprep.mubr.f32.mxu0 0.0
  %455 = vmatmul.mubr.f32.gmra.mrb[0].mxu0 %v169
  %v456 = vpop.f32.mrb[0].mxu0
  %v457 = vadd.f32 %v84, %v456
  %v458 = vpop.f32.mrb[0].mxu0
  %459 = vmatprep.mubr.f32.mxu0 0.0
  %460 = vmatmul.mubr.f32.gmra.mrb[0].mxu0 %v172
  %v461 = vpop.f32.mrb[0].mxu0
  %v462 = vadd.f32 %v84, %v461
  %v463 = vpop.f32.mrb[0].mxu0
  %464 = vmatprep.mubr.f32.mxu0 0.0
  %465 = vmatmul.mubr.f32.gmra.mrb[0].mxu0 %v175
  %v466 = vpop.f32.mrb[0].mxu0
  %v467 = vadd.f32 %v84, %v466
  %v468 = vpop.f32.mrb[0].mxu0
  %469 = vmatprep.mubr.f32.mxu0 0.0
  %470 = vmatmul.mubr.f32.gmra.mrb[0].mxu0 %v178
  %v471 = vpop.f32.mrb[0].mxu0
  %v472 = vadd.f32 %v84, %v471
  %v473 = vpop.f32.mrb[0].mxu0
  %474 = vmatprep.mubr.f32.mxu0 0.0
  %475 = vmatmul.mubr.f32.gmra.mrb[0].mxu0 %v181
  %v476 = vpop.f32.mrb[0].mxu0
  %v477 = vadd.f32 %v84, %v476
  %v478 = vpop.f32.mrb[0].mxu0
  %479 = vmatprep.mubr.f32.mxu0 0.0
  %480 = vmatmul.mubr.f32.gmra.mrb[0].mxu0 %v184
  %v481 = vpop.f32.mrb[0].mxu0
  %v482 = vadd.f32 %v84, %v481
  %v483 = vpop.f32.mrb[0].mxu0
  %484 = vmatprep.mubr.f32.mxu0 0.0
  %485 = vmatmul.mubr.f32.gmra.mrb[0].mxu0 %v187
  %v486 = vpop.f32.mrb[0].mxu0
  %v487 = vadd.f32 %v84, %v486
  %v488 = vpop.f32.mrb[0].mxu0
  %489 = vmatprep.mubr.f32.mxu0 0.0
  %490 = vmatmul.mubr.f32.gmra.mrb[0].mxu0 %v190
  %v491 = vpop.f32.mrb[0].mxu0
  %v492 = vadd.f32 %v84, %v491
  %v493 = vpop.f32.mrb[0].mxu0
  %494 = vmatprep.mubr.f32.mxu0 0.0
  %495 = vmatmul.mubr.f32.gmra.mrb[0].mxu0 %v193
  %v496 = vpop.f32.mrb[0].mxu0
  %v497 = vadd.f32 %v84, %v496
  %v498 = vpop.f32.mrb[0].mxu0
  %499 = vmatprep.mubr.f32.mxu0 0.0
  %500 = vmatmul.mubr.f32.gmra.mrb[0].mxu0 %v196
  %v501 = vpop.f32.mrb[0].mxu0
  %v502 = vadd.f32 %v84, %v501
  %v503 = vpop.f32.mrb[0].mxu0
  %504 = vmatprep.mubr.f32.mxu0 0.0
  %505 = vmatmul.mubr.f32.gmra.mrb[0].mxu0 %v199
  %v506 = vpop.f32.mrb[0].mxu0
  %v507 = vadd.f32 %v84, %v506
  %v508 = vpop.f32.mrb[0].mxu0
  %509 = vmatprep.mubr.f32.mxu0 0.0
  %510 = vmatmul.mubr.f32.gmra.mrb[0].mxu0 %v202
  %v511 = vpop.f32.mrb[0].mxu0
  %v512 = vadd.f32 %v84, %v511
  %v513 = vpop.f32.mrb[0].mxu0
  %514 = vmatprep.mubr.f32.mxu0 0.0
  %515 = vmatmul.mubr.f32.gmra.mrb[0].mxu0 %v205
  %v516 = vpop.f32.mrb[0].mxu0
  %v517 = vadd.f32 %v84, %v516
  %v518 = vpop.f32.mrb[0].mxu0
  %519 = vmatprep.mubr.f32.mxu0 0.0
  %520 = vmatmul.mubr.f32.gmra.mrb[0].mxu0 %v208
  %v521 = vpop.f32.mrb[0].mxu0
  %v522 = vadd.f32 %v84, %v521
  %v523 = vpop.f32.mrb[0].mxu0
  %524 = vmatprep.mubr.f32.mxu0 0.0
  %525 = vmatmul.mubr.f32.gmra.mrb[0].mxu0 %v211
  %v526 = vpop.f32.mrb[0].mxu0
  %v527 = vadd.f32 %v84, %v526
  %v528 = vpop.f32.mrb[0].mxu0
  %529 = vmatprep.mubr.f32.mxu0 0.0
  %530 = vmatmul.mubr.f32.gmra.mrb[0].mxu0 %v214
  %v531 = vpop.f32.mrb[0].mxu0
  %v532 = vadd.f32 %v84, %v531
  %v533 = vpop.f32.mrb[0].mxu0
  %534 = vmatprep.mubr.f32.mxu0 0.0
  %535 = vmatmul.mubr.f32.gmra.mrb[0].mxu0 %v217
  %v536 = vpop.f32.mrb[0].mxu0
  %v537 = vadd.f32 %v84, %v536
  %v538 = vpop.f32.mrb[0].mxu0
  %539 = vmatprep.mubr.f32.mxu0 0.0
  %540 = vmatmul.mubr.f32.gmra.mrb[0].mxu0 %v220
  %v541 = vpop.f32.mrb[0].mxu0
  %v542 = vadd.f32 %v84, %v541
  %v543 = vpop.f32.mrb[0].mxu0
  %544 = vmatprep.mubr.f32.mxu0 0.0
  %545 = vmatmul.mubr.f32.gmra.mrb[0].mxu0 %v223
  %v546 = vpop.f32.mrb[0].mxu0
  %v547 = vadd.f32 %v84, %v546
  %v548 = vpop.f32.mrb[0].mxu0
  %549 = vmatprep.mubr.f32.mxu0 0.0
  %550 = vmatmul.mubr.f32.gmra.mrb[0].mxu0 %v226
  %v551 = vpop.f32.mrb[0].mxu0
  %v552 = vadd.f32 %v84, %v551
  %v553 = vpop.f32.mrb[0].mxu0
  %554 = vmatprep.mubr.f32.mxu0 0.0
  %555 = vmatmul.mubr.f32.gmra.mrb[0].mxu0 %v229
  %v556 = vpop.f32.mrb[0].mxu0
  %v557 = vadd.f32 %v84, %v556
  %v558 = vpop.f32.mrb[0].mxu0
  %559 = vmatprep.mubr.f32.mxu0 0.0
  %560 = vmatmul.mubr.f32.gmra.mrb[0].mxu0 %v232
  %v561 = vpop.f32.mrb[0].mxu0
  %v562 = vadd.f32 %v84, %v561
  %v563 = vpop.f32.mrb[0].mxu0
  %564 = vmatprep.mubr.f32.mxu0 0.0
  %565 = vmatmul.mubr.f32.gmra.mrb[0].mxu0 %v235
  %v566 = vpop.f32.mrb[0].mxu0
  %v567 = vadd.f32 %v84, %v566
  %v568 = vpop.f32.mrb[0].mxu0
  %569 = vmatprep.mubr.f32.mxu0 0.0
  %570 = vmatmul.mubr.f32.gmra.mrb[0].mxu0 %v238
  %v571 = vpop.f32.mrb[0].mxu0
  %v572 = vadd.f32 %v84, %v571
  %v573 = vpop.f32.mrb[0].mxu0
  %574 = vmatprep.mubr.f32.mxu0 0.0
  %575 = vmatmul.mubr.f32.gmra.mrb[0].mxu0 %v241
  %v576 = vpop.f32.mrb[0].mxu0
  %v577 = vadd.f32 %v84, %v576
  %v578 = vpop.f32.mrb[0].mxu0
  %579 = vmatprep.mubr.f32.mxu0 0.0
  %580 = vmatmul.mubr.f32.gmra.mrb[0].mxu0 %v244
  %v581 = vpop.f32.mrb[0].mxu0
  %v582 = vadd.f32 %v84, %v581
  %v583 = vpop.f32.mrb[0].mxu0
  %584 = vmatprep.mubr.f32.mxu0 0.0
  %585 = vmatmul.mubr.f32.gmra.mrb[0].mxu0 %v247
  %v586 = vpop.f32.mrb[0].mxu0
  %v587 = vadd.f32 %v84, %v586
  %v588 = vpop.f32.mrb[0].mxu0
  %589 = vmatprep.mubr.f32.mxu0 0.0
  %590 = vmatmul.mubr.f32.gmra.mrb[0].mxu0 %v250
  %v591 = vpop.f32.mrb[0].mxu0
  %v592 = vadd.f32 %v84, %v591
  %v593 = vpop.f32.mrb[0].mxu0
  %594 = vmatprep.mubr.f32.mxu0 0.0
  %595 = vmatmul.mubr.f32.gmra.mrb[0].mxu0 %v253
  %v596 = vpop.f32.mrb[0].mxu0
  %v597 = vadd.f32 %v84, %v596
  %v598 = vpop.f32.mrb[0].mxu0
  %599 = vdwg.mxu0
  %v600 = vmax.f32 %v322, 0.0
  %v601 = vmax.f32 %v327, 0.0
  %v602 = vmax.f32 %v332, 0.0
  %v603 = vmax.f32 %v337, 0.0
  %v604 = vmax.f32 %v342, 0.0
  %v605 = vmax.f32 %v347, 0.0
  %v606 = vmax.f32 %v352, 0.0
  %v607 = vmax.f32 %v357, 0.0
  %v608 = vmax.f32 %v362, 0.0
  %v609 = vmax.f32 %v367, 0.0
  %v610 = vmax.f32 %v372, 0.0
  %v611 = vmax.f32 %v377, 0.0
  %v612 = vmax.f32 %v382, 0.0
  %v613 = vmax.f32 %v387, 0.0
  %v614 = vmax.f32 %v392, 0.0
  %v615 = vmax.f32 %v397, 0.0
  %v616 = vmax.f32 %v402, 0.0
  %v617 = vmax.f32 %v407, 0.0
  %v618 = vmax.f32 %v412, 0.0
  %v619 = vmax.f32 %v417, 0.0
  %v620 = vmax.f32 %v422, 0.0
  %v621 = vmax.f32 %v427, 0.0
  %v622 = vmax.f32 %v432, 0.0
  %v623 = vmax.f32 %v437, 0.0
  %v624 = vmax.f32 %v442, 0.0
  %v625 = vmax.f32 %v447, 0.0
  %v626 = vmax.f32 %v452, 0.0
  %v627 = vmax.f32 %v457, 0.0
  %v628 = vmax.f32 %v462, 0.0
  %v629 = vmax.f32 %v467, 0.0
  %v630 = vmax.f32 %v472, 0.0
  %v631 = vmax.f32 %v477, 0.0
  %v632 = vmax.f32 %v482, 0.0
  %v633 = vmax.f32 %v487, 0.0
  %v634 = vmax.f32 %v492, 0.0
  %v635 = vmax.f32 %v497, 0.0
  %v636 = vmax.f32 %v502, 0.0
  %v637 = vmax.f32 %v507, 0.0
  %v638 = vmax.f32 %v512, 0.0
  %v639 = vmax.f32 %v517, 0.0
  %v640 = vmax.f32 %v522, 0.0
  %v641 = vmax.f32 %v527, 0.0
  %v642 = vmax.f32 %v532, 0.0
  %v643 = vmax.f32 %v537, 0.0
  %v644 = vmax.f32 %v542, 0.0
  %v645 = vmax.f32 %v547, 0.0
  %v646 = vmax.f32 %v552, 0.0
  %v647 = vmax.f32 %v557, 0.0
  %v648 = vmax.f32 %v562, 0.0
  %v649 = vmax.f32 %v567, 0.0
  %v650 = vmax.f32 %v572, 0.0
  %v651 = vmax.f32 %v577, 0.0
  %v652 = vmax.f32 %v582, 0.0
  %v653 = vmax.f32 %v587, 0.0
  %v654 = vmax.f32 %v592, 0.0
  %v655 = vmax.f32 %v597, 0.0
  %712 = vrot.lane.b32.xlu0 %v600, 96
  %v713 = vpop.permute.xlu0 %712
  %714 = vrot.lane.b32.xlu0 %v601, 96
  %v715 = vpop.permute.xlu0 %714
  %716 = vrot.lane.b32.xlu0 %v602, 96
  %v717 = vpop.permute.xlu0 %716
  %718 = vrot.lane.b32.xlu0 %v603, 96
  %v719 = vpop.permute.xlu0 %718
  %720 = vrot.lane.b32.xlu0 %v604, 96
  %v721 = vpop.permute.xlu0 %720
  %722 = vrot.lane.b32.xlu0 %v605, 96
  %v723 = vpop.permute.xlu0 %722
  %724 = vrot.lane.b32.xlu0 %v606, 96
  %v725 = vpop.permute.xlu0 %724
  %726 = vrot.lane.b32.xlu0 %v607, 96
  %v727 = vpop.permute.xlu0 %726
  %728 = vrot.lane.b32.xlu0 %v608, 96
  %v729 = vpop.permute.xlu0 %728
  %730 = vrot.lane.b32.xlu0 %v609, 96
  %v731 = vpop.permute.xlu0 %730
  %732 = vrot.lane.b32.xlu0 %v610, 96
  %v733 = vpop.permute.xlu0 %732
  %734 = vrot.lane.b32.xlu0 %v611, 96
  %v735 = vpop.permute.xlu0 %734
  %736 = vrot.lane.b32.xlu0 %v612, 96
  %v737 = vpop.permute.xlu0 %736
  %738 = vrot.lane.b32.xlu0 %v613, 96
  %v739 = vpop.permute.xlu0 %738
  %740 = vrot.lane.b32.xlu0 %v614, 96
  %v741 = vpop.permute.xlu0 %740
  %742 = vrot.lane.b32.xlu0 %v615, 96
  %v743 = vpop.permute.xlu0 %742
  %744 = vrot.lane.b32.xlu0 %v616, 96
  %v745 = vpop.permute.xlu0 %744
  %746 = vrot.lane.b32.xlu0 %v617, 96
  %v747 = vpop.permute.xlu0 %746
  %748 = vrot.lane.b32.xlu0 %v618, 96
  %v749 = vpop.permute.xlu0 %748
  %750 = vrot.lane.b32.xlu0 %v619, 96
  %v751 = vpop.permute.xlu0 %750
  %752 = vrot.lane.b32.xlu0 %v620, 96
  %v753 = vpop.permute.xlu0 %752
  %754 = vrot.lane.b32.xlu0 %v621, 96
  %v755 = vpop.permute.xlu0 %754
  %756 = vrot.lane.b32.xlu0 %v622, 96
  %v757 = vpop.permute.xlu0 %756
  %758 = vrot.lane.b32.xlu0 %v623, 96
  %v759 = vpop.permute.xlu0 %758
  %760 = vrot.lane.b32.xlu0 %v624, 96
  %v761 = vpop.permute.xlu0 %760
  %762 = vrot.lane.b32.xlu0 %v625, 96
  %v763 = vpop.permute.xlu0 %762
  %764 = vrot.lane.b32.xlu0 %v626, 96
  %v765 = vpop.permute.xlu0 %764
  %766 = vrot.lane.b32.xlu0 %v627, 96
  %v767 = vpop.permute.xlu0 %766
  %768 = vrot.lane.b32.xlu0 %v628, 96
  %v769 = vpop.permute.xlu0 %768
  %770 = vrot.lane.b32.xlu0 %v629, 96
  %v771 = vpop.permute.xlu0 %770
  %772 = vrot.lane.b32.xlu0 %v630, 96
  %v773 = vpop.permute.xlu0 %772
  %774 = vrot.lane.b32.xlu0 %v631, 96
  %v775 = vpop.permute.xlu0 %774
  %776 = vrot.lane.b32.xlu0 %v632, 96
  %v777 = vpop.permute.xlu0 %776
  %778 = vrot.lane.b32.xlu0 %v633, 96
  %v779 = vpop.permute.xlu0 %778
  %780 = vrot.lane.b32.xlu0 %v634, 96
  %v781 = vpop.permute.xlu0 %780
  %782 = vrot.lane.b32.xlu0 %v635, 96
  %v783 = vpop.permute.xlu0 %782
  %784 = vrot.lane.b32.xlu0 %v636, 96
  %v785 = vpop.permute.xlu0 %784
  %786 = vrot.lane.b32.xlu0 %v637, 96
  %v787 = vpop.permute.xlu0 %786
  %788 = vrot.lane.b32.xlu0 %v638, 96
  %v789 = vpop.permute.xlu0 %788
  %790 = vrot.lane.b32.xlu0 %v639, 96
  %v791 = vpop.permute.xlu0 %790
  %792 = vrot.lane.b32.xlu0 %v640, 96
  %v793 = vpop.permute.xlu0 %792
  %794 = vrot.lane.b32.xlu0 %v641, 96
  %v795 = vpop.permute.xlu0 %794
  %796 = vrot.lane.b32.xlu0 %v642, 96
  %v797 = vpop.permute.xlu0 %796
  %798 = vrot.lane.b32.xlu0 %v643, 96
  %v799 = vpop.permute.xlu0 %798
  %800 = vrot.lane.b32.xlu0 %v644, 96
  %v801 = vpop.permute.xlu0 %800
  %802 = vrot.lane.b32.xlu0 %v645, 96
  %v803 = vpop.permute.xlu0 %802
  %804 = vrot.lane.b32.xlu0 %v646, 96
  %v805 = vpop.permute.xlu0 %804
  %806 = vrot.lane.b32.xlu0 %v647, 96
  %v807 = vpop.permute.xlu0 %806
  %808 = vrot.lane.b32.xlu0 %v648, 96
  %v809 = vpop.permute.xlu0 %808
  %810 = vrot.lane.b32.xlu0 %v649, 96
  %v811 = vpop.permute.xlu0 %810
  %812 = vrot.lane.b32.xlu0 %v650, 96
  %v813 = vpop.permute.xlu0 %812
  %814 = vrot.lane.b32.xlu0 %v651, 96
  %v815 = vpop.permute.xlu0 %814
  %816 = vrot.lane.b32.xlu0 %v652, 96
  %v817 = vpop.permute.xlu0 %816
  %818 = vrot.lane.b32.xlu0 %v653, 96
  %v819 = vpop.permute.xlu0 %818
  %820 = vrot.lane.b32.xlu0 %v654, 96
  %v821 = vpop.permute.xlu0 %820
  %822 = vrot.lane.b32.xlu0 %v655, 96
  %v823 = vpop.permute.xlu0 %822
  %v880 = vmax.f32 %v600, %v713
  %v881 = vmax.f32 %v601, %v715
  %v882 = vmax.f32 %v602, %v717
  %v883 = vmax.f32 %v603, %v719
  %v884 = vmax.f32 %v604, %v721
  %v885 = vmax.f32 %v605, %v723
  %v886 = vmax.f32 %v606, %v725
  %v887 = vmax.f32 %v607, %v727
  %v888 = vmax.f32 %v608, %v729
  %v889 = vmax.f32 %v609, %v731
  %v890 = vmax.f32 %v610, %v733
  %v891 = vmax.f32 %v611, %v735
  %v892 = vmax.f32 %v612, %v737
  %v893 = vmax.f32 %v613, %v739
  %v894 = vmax.f32 %v614, %v741
  %v895 = vmax.f32 %v615, %v743
  %v896 = vmax.f32 %v616, %v745
  %v897 = vmax.f32 %v617, %v747
  %v898 = vmax.f32 %v618, %v749
  %v899 = vmax.f32 %v619, %v751
  %v900 = vmax.f32 %v620, %v753
  %v901 = vmax.f32 %v621, %v755
  %v902 = vmax.f32 %v622, %v757
  %v903 = vmax.f32 %v623, %v759
  %v904 = vmax.f32 %v624, %v761
  %v905 = vmax.f32 %v625, %v763
  %v906 = vmax.f32 %v626, %v765
  %v907 = vmax.f32 %v627, %v767
  %v908 = vmax.f32 %v628, %v769
  %v909 = vmax.f32 %v629, %v771
  %v910 = vmax.f32 %v630, %v773
  %v911 = vmax.f32 %v631, %v775
  %v912 = vmax.f32 %v632, %v777
  %v913 = vmax.f32 %v633, %v779
  %v914 = vmax.f32 %v634, %v781
  %v915 = vmax.f32 %v635, %v783
  %v916 = vmax.f32 %v636, %v785
  %v917 = vmax.f32 %v637, %v787
  %v918 = vmax.f32 %v638, %v789
  %v919 = vmax.f32 %v639, %v791
  %v920 = vmax.f32 %v640, %v793
  %v921 = vmax.f32 %v641, %v795
  %v922 = vmax.f32 %v642, %v797
  %v923 = vmax.f32 %v643, %v799
  %v924 = vmax.f32 %v644, %v801
  %v925 = vmax.f32 %v645, %v803
  %v926 = vmax.f32 %v646, %v805
  %v927 = vmax.f32 %v647, %v807
  %v928 = vmax.f32 %v648, %v809
  %v929 = vmax.f32 %v649, %v811
  %v930 = vmax.f32 %v650, %v813
  %v931 = vmax.f32 %v651, %v815
  %v932 = vmax.f32 %v652, %v817
  %v933 = vmax.f32 %v653, %v819
  %v934 = vmax.f32 %v654, %v821
  %v935 = vmax.f32 %v655, %v823
  %v936 = vlaneseq
  %v937 = vshrl.u32 %v936, 7
  %vm938 = vcmask 261120
  %v939 = vsel %vm938, %v880, -inf
  %v940 = vsel %vm938, %v881, -inf
  %v941 = vmax.f32 %v939, %v940
  %v942 = vsel %vm938, %v882, -inf
  %v943 = vsel %vm938, %v883, -inf
  %v944 = vmax.f32 %v942, %v943
  %v945 = vsel %vm938, %v884, -inf
  %v946 = vsel %vm938, %v885, -inf
  %v947 = vmax.f32 %v945, %v946
  %v948 = vsel %vm938, %v886, -inf
  %v949 = vsel %vm938, %v887, -inf
  %v950 = vmax.f32 %v948, %v949
  %v951 = vsel %vm938, %v888, -inf
  %v952 = vsel %vm938, %v889, -inf
  %v953 = vmax.f32 %v951, %v952
  %v954 = vsel %vm938, %v890, -inf
  %v955 = vsel %vm938, %v891, -inf
  %v956 = vmax.f32 %v954, %v955
  %v957 = vsel %vm938, %v892, -inf
  %v958 = vsel %vm938, %v893, -inf
  %v959 = vmax.f32 %v957, %v958
  %v960 = vsel %vm938, %v894, -inf
  %v961 = vsel %vm938, %v895, -inf
  %v962 = vmax.f32 %v960, %v961
  %v963 = vsel %vm938, %v896, -inf
  %v964 = vsel %vm938, %v897, -inf
  %v965 = vmax.f32 %v963, %v964
  %v966 = vsel %vm938, %v898, -inf
  %v967 = vsel %vm938, %v899, -inf
  %v968 = vmax.f32 %v966, %v967
  %v969 = vsel %vm938, %v900, -inf
  %v970 = vsel %vm938, %v901, -inf
  %v971 = vmax.f32 %v969, %v970
  %v972 = vsel %vm938, %v902, -inf
  %v973 = vsel %vm938, %v903, -inf
  %v974 = vmax.f32 %v972, %v973
  %v975 = vsel %vm938, %v904, -inf
  %v976 = vsel %vm938, %v905, -inf
  %v977 = vmax.f32 %v975, %v976
  %v978 = vsel %vm938, %v906, -inf
  %v979 = vsel %vm938, %v907, -inf
  %v980 = vmax.f32 %v978, %v979
  %v981 = vsel %vm938, %v908, -inf
  %v982 = vsel %vm938, %v909, -inf
  %v983 = vmax.f32 %v981, %v982
  %v984 = vsel %vm938, %v910, -inf
  %v985 = vsel %vm938, %v911, -inf
  %v986 = vmax.f32 %v984, %v985
  %v987 = vsel %vm938, %v912, -inf
  %v988 = vsel %vm938, %v913, -inf
  %v989 = vmax.f32 %v987, %v988
  %v990 = vsel %vm938, %v914, -inf
  %v991 = vsel %vm938, %v915, -inf
  %v992 = vmax.f32 %v990, %v991
  %v993 = vsel %vm938, %v916, -inf
  %v994 = vsel %vm938, %v917, -inf
  %v995 = vmax.f32 %v993, %v994
  %v996 = vsel %vm938, %v918, -inf
  %v997 = vsel %vm938, %v919, -inf
  %v998 = vmax.f32 %v996, %v997
  %v999 = vsel %vm938, %v920, -inf
  %v1000 = vsel %vm938, %v921, -inf
  %v1001 = vmax.f32 %v999, %v1000
  %v1002 = vsel %vm938, %v922, -inf
  %v1003 = vsel %vm938, %v923, -inf
  %v1004 = vmax.f32 %v1002, %v1003
  %v1005 = vsel %vm938, %v924, -inf
  %v1006 = vsel %vm938, %v925, -inf
  %v1007 = vmax.f32 %v1005, %v1006
  %v1008 = vsel %vm938, %v926, -inf
  %v1009 = vsel %vm938, %v927, -inf
  %v1010 = vmax.f32 %v1008, %v1009
  %v1011 = vsel %vm938, %v928, -inf
  %v1012 = vsel %vm938, %v929, -inf
  %v1013 = vmax.f32 %v1011, %v1012
  %v1014 = vsel %vm938, %v930, -inf
  %v1015 = vsel %vm938, %v931, -inf
  %v1016 = vmax.f32 %v1014, %v1015
  %v1017 = vsel %vm938, %v932, -inf
  %v1018 = vsel %vm938, %v933, -inf
  %v1019 = vmax.f32 %v1017, %v1018
  %v1020 = vsel %vm938, %v934, -inf
  %v1021 = vsel %vm938, %v935, -inf
  %v1022 = vmax.f32 %v1020, %v1021
  %vm1023 = vcmp.lt.s32.totalorder %v937, 7
  %v1024 = vsel %vm1023, %v941, 0.0
  %v1025 = vsel %vm1023, %v944, 0.0
  %v1026 = vsel %vm1023, %v947, 0.0
  %v1027 = vsel %vm1023, %v950, 0.0
  %v1028 = vsel %vm1023, %v953, 0.0
  %v1029 = vsel %vm1023, %v956, 0.0
  %v1030 = vsel %vm1023, %v959, 0.0
  %v1031 = vsel %vm1023, %v962, 0.0
  %v1032 = vsel %vm1023, %v965, 0.0
  %v1033 = vsel %vm1023, %v968, 0.0
  %v1034 = vsel %vm1023, %v971, 0.0
  %v1035 = vsel %vm1023, %v974, 0.0
  %v1036 = vsel %vm1023, %v977, 0.0
  %v1037 = vsel %vm1023, %v980, 0.0
  %v1038 = vsel %vm1023, %v983, 0.0
  %v1039 = vsel %vm1023, %v986, 0.0
  %v1040 = vsel %vm1023, %v989, 0.0
  %v1041 = vsel %vm1023, %v992, 0.0
  %v1042 = vsel %vm1023, %v995, 0.0
  %v1043 = vsel %vm1023, %v998, 0.0
  %v1044 = vsel %vm1023, %v1001, 0.0
  %v1045 = vsel %vm1023, %v1004, 0.0
  %v1046 = vsel %vm1023, %v1007, 0.0
  %v1047 = vsel %vm1023, %v1010, 0.0
  %v1048 = vsel %vm1023, %v1013, 0.0
  %v1049 = vsel %vm1023, %v1016, 0.0
  %v1050 = vsel %vm1023, %v1019, 0.0
  %v1051 = vsel %vm1023, %v1022, 0.0
  %vm1052 = vcmask 785920
  %v1053 = vsel %vm1052, %v880, -inf
  %v1054 = vsel %vm1052, %v881, -inf
  %v1055 = vmax.f32 %v1053, %v1054
  %v1056 = vsel %vm1052, %v882, -inf
  %v1057 = vsel %vm1052, %v883, -inf
  %v1058 = vmax.f32 %v1056, %v1057
  %v1059 = vsel %vm1052, %v884, -inf
  %v1060 = vsel %vm1052, %v885, -inf
  %v1061 = vmax.f32 %v1059, %v1060
  %v1062 = vsel %vm1052, %v886, -inf
  %v1063 = vsel %vm1052, %v887, -inf
  %v1064 = vmax.f32 %v1062, %v1063
  %v1065 = vsel %vm1052, %v888, -inf
  %v1066 = vsel %vm1052, %v889, -inf
  %v1067 = vmax.f32 %v1065, %v1066
  %v1068 = vsel %vm1052, %v890, -inf
  %v1069 = vsel %vm1052, %v891, -inf
  %v1070 = vmax.f32 %v1068, %v1069
  %v1071 = vsel %vm1052, %v892, -inf
  %v1072 = vsel %vm1052, %v893, -inf
  %v1073 = vmax.f32 %v1071, %v1072
  %v1074 = vsel %vm1052, %v894, -inf
  %v1075 = vsel %vm1052, %v895, -inf
  %v1076 = vmax.f32 %v1074, %v1075
  %v1077 = vsel %vm1052, %v896, -inf
  %v1078 = vsel %vm1052, %v897, -inf
  %v1079 = vmax.f32 %v1077, %v1078
  %v1080 = vsel %vm1052, %v898, -inf
  %v1081 = vsel %vm1052, %v899, -inf
  %v1082 = vmax.f32 %v1080, %v1081
  %v1083 = vsel %vm1052, %v900, -inf
  %v1084 = vsel %vm1052, %v901, -inf
  %v1085 = vmax.f32 %v1083, %v1084
  %v1086 = vsel %vm1052, %v902, -inf
  %v1087 = vsel %vm1052, %v903, -inf
  %v1088 = vmax.f32 %v1086, %v1087
  %v1089 = vsel %vm1052, %v904, -inf
  %v1090 = vsel %vm1052, %v905, -inf
  %v1091 = vmax.f32 %v1089, %v1090
  %v1092 = vsel %vm1052, %v906, -inf
  %v1093 = vsel %vm1052, %v907, -inf
  %v1094 = vmax.f32 %v1092, %v1093
  %v1095 = vsel %vm1052, %v908, -inf
  %v1096 = vsel %vm1052, %v909, -inf
  %v1097 = vmax.f32 %v1095, %v1096
  %v1098 = vsel %vm1052, %v910, -inf
  %v1099 = vsel %vm1052, %v911, -inf
  %v1100 = vmax.f32 %v1098, %v1099
  %v1101 = vsel %vm1052, %v912, -inf
  %v1102 = vsel %vm1052, %v913, -inf
  %v1103 = vmax.f32 %v1101, %v1102
  %v1104 = vsel %vm1052, %v914, -inf
  %v1105 = vsel %vm1052, %v915, -inf
  %v1106 = vmax.f32 %v1104, %v1105
  %v1107 = vsel %vm1052, %v916, -inf
  %v1108 = vsel %vm1052, %v917, -inf
  %v1109 = vmax.f32 %v1107, %v1108
  %v1110 = vsel %vm1052, %v918, -inf
  %v1111 = vsel %vm1052, %v919, -inf
  %v1112 = vmax.f32 %v1110, %v1111
  %v1113 = vsel %vm1052, %v920, -inf
  %v1114 = vsel %vm1052, %v921, -inf
  %v1115 = vmax.f32 %v1113, %v1114
  %v1116 = vsel %vm1052, %v922, -inf
  %v1117 = vsel %vm1052, %v923, -inf
  %v1118 = vmax.f32 %v1116, %v1117
  %v1119 = vsel %vm1052, %v924, -inf
  %v1120 = vsel %vm1052, %v925, -inf
  %v1121 = vmax.f32 %v1119, %v1120
  %v1122 = vsel %vm1052, %v926, -inf
  %v1123 = vsel %vm1052, %v927, -inf
  %v1124 = vmax.f32 %v1122, %v1123
  %v1125 = vsel %vm1052, %v928, -inf
  %v1126 = vsel %vm1052, %v929, -inf
  %v1127 = vmax.f32 %v1125, %v1126
  %v1128 = vsel %vm1052, %v930, -inf
  %v1129 = vsel %vm1052, %v931, -inf
  %v1130 = vmax.f32 %v1128, %v1129
  %v1131 = vsel %vm1052, %v932, -inf
  %v1132 = vsel %vm1052, %v933, -inf
  %v1133 = vmax.f32 %v1131, %v1132
  %v1134 = vsel %vm1052, %v934, -inf
  %v1135 = vsel %vm1052, %v935, -inf
  %v1136 = vmax.f32 %v1134, %v1135
  %v1137 = vsel %vm1023, %v1055, 0.0
  %v1138 = vsel %vm1023, %v1058, 0.0
  %v1139 = vsel %vm1023, %v1061, 0.0
  %v1140 = vsel %vm1023, %v1064, 0.0
  %v1141 = vsel %vm1023, %v1067, 0.0
  %v1142 = vsel %vm1023, %v1070, 0.0
  %v1143 = vsel %vm1023, %v1073, 0.0
  %v1144 = vsel %vm1023, %v1076, 0.0
  %v1145 = vsel %vm1023, %v1079, 0.0
  %v1146 = vsel %vm1023, %v1082, 0.0
  %v1147 = vsel %vm1023, %v1085, 0.0
  %v1148 = vsel %vm1023, %v1088, 0.0
  %v1149 = vsel %vm1023, %v1091, 0.0
  %v1150 = vsel %vm1023, %v1094, 0.0
  %v1151 = vsel %vm1023, %v1097, 0.0
  %v1152 = vsel %vm1023, %v1100, 0.0
  %v1153 = vsel %vm1023, %v1103, 0.0
  %v1154 = vsel %vm1023, %v1106, 0.0
  %v1155 = vsel %vm1023, %v1109, 0.0
  %v1156 = vsel %vm1023, %v1112, 0.0
  %v1157 = vsel %vm1023, %v1115, 0.0
  %v1158 = vsel %vm1023, %v1118, 0.0
  %v1159 = vsel %vm1023, %v1121, 0.0
  %v1160 = vsel %vm1023, %v1124, 0.0
  %v1161 = vsel %vm1023, %v1127, 0.0
  %v1162 = vsel %vm1023, %v1130, 0.0
  %v1163 = vsel %vm1023, %v1133, 0.0
  %v1164 = vsel %vm1023, %v1136, 0.0
  %1193 = vrot.lane.b32.xlu0 %v1137, 64
  %v1194 = vpop.permute.xlu0 %1193
  %1195 = vrot.lane.b32.xlu0 %v1138, 64
  %v1196 = vpop.permute.xlu0 %1195
  %1197 = vrot.lane.b32.xlu0 %v1139, 64
  %v1198 = vpop.permute.xlu0 %1197
  %1199 = vrot.lane.b32.xlu0 %v1140, 64
  %v1200 = vpop.permute.xlu0 %1199
  %1201 = vrot.lane.b32.xlu0 %v1141, 64
  %v1202 = vpop.permute.xlu0 %1201
  %1203 = vrot.lane.b32.xlu0 %v1142, 64
  %v1204 = vpop.permute.xlu0 %1203
  %1205 = vrot.lane.b32.xlu0 %v1143, 64
  %v1206 = vpop.permute.xlu0 %1205
  %1207 = vrot.lane.b32.xlu0 %v1144, 64
  %v1208 = vpop.permute.xlu0 %1207
  %1209 = vrot.lane.b32.xlu0 %v1145, 64
  %v1210 = vpop.permute.xlu0 %1209
  %1211 = vrot.lane.b32.xlu0 %v1146, 64
  %v1212 = vpop.permute.xlu0 %1211
  %1213 = vrot.lane.b32.xlu0 %v1147, 64
  %v1214 = vpop.permute.xlu0 %1213
  %1215 = vrot.lane.b32.xlu0 %v1148, 64
  %v1216 = vpop.permute.xlu0 %1215
  %1217 = vrot.lane.b32.xlu0 %v1149, 64
  %v1218 = vpop.permute.xlu0 %1217
  %1219 = vrot.lane.b32.xlu0 %v1150, 64
  %v1220 = vpop.permute.xlu0 %1219
  %1221 = vrot.lane.b32.xlu0 %v1151, 64
  %v1222 = vpop.permute.xlu0 %1221
  %1223 = vrot.lane.b32.xlu0 %v1152, 64
  %v1224 = vpop.permute.xlu0 %1223
  %1225 = vrot.lane.b32.xlu0 %v1153, 64
  %v1226 = vpop.permute.xlu0 %1225
  %1227 = vrot.lane.b32.xlu0 %v1154, 64
  %v1228 = vpop.permute.xlu0 %1227
  %1229 = vrot.lane.b32.xlu0 %v1155, 64
  %v1230 = vpop.permute.xlu0 %1229
  %1231 = vrot.lane.b32.xlu0 %v1156, 64
  %v1232 = vpop.permute.xlu0 %1231
  %1233 = vrot.lane.b32.xlu0 %v1157, 64
  %v1234 = vpop.permute.xlu0 %1233
  %1235 = vrot.lane.b32.xlu0 %v1158, 64
  %v1236 = vpop.permute.xlu0 %1235
  %1237 = vrot.lane.b32.xlu0 %v1159, 64
  %v1238 = vpop.permute.xlu0 %1237
  %1239 = vrot.lane.b32.xlu0 %v1160, 64
  %v1240 = vpop.permute.xlu0 %1239
  %1241 = vrot.lane.b32.xlu0 %v1161, 64
  %v1242 = vpop.permute.xlu0 %1241
  %1243 = vrot.lane.b32.xlu0 %v1162, 64
  %v1244 = vpop.permute.xlu0 %1243
  %1245 = vrot.lane.b32.xlu0 %v1163, 64
  %v1246 = vpop.permute.xlu0 %1245
  %1247 = vrot.lane.b32.xlu0 %v1164, 64
  %v1248 = vpop.permute.xlu0 %1247
  %vm1304 = vcmask 1046528
  %v1305 = vrot.slane 0.0, 1
  %v1306 = vrot.slane %v1024, 1
  %v1307 = vsel %vm1304, %v1305, %v1306
  %v1308 = vrot.slane %v1025, 1
  %v1309 = vsel %vm1304, %v1306, %v1308
  %v1310 = vrot.slane %v1026, 1
  %v1311 = vsel %vm1304, %v1308, %v1310
  %v1312 = vrot.slane %v1027, 1
  %v1313 = vsel %vm1304, %v1310, %v1312
  %v1314 = vrot.slane %v1028, 1
  %v1315 = vsel %vm1304, %v1312, %v1314
  %v1316 = vrot.slane %v1029, 1
  %v1317 = vsel %vm1304, %v1314, %v1316
  %v1318 = vrot.slane %v1030, 1
  %v1319 = vsel %vm1304, %v1316, %v1318
  %v1320 = vrot.slane %v1031, 1
  %v1321 = vsel %vm1304, %v1318, %v1320
  %v1322 = vrot.slane %v1032, 1
  %v1323 = vsel %vm1304, %v1320, %v1322
  %v1324 = vrot.slane %v1033, 1
  %v1325 = vsel %vm1304, %v1322, %v1324
  %v1326 = vrot.slane %v1034, 1
  %v1327 = vsel %vm1304, %v1324, %v1326
  %v1328 = vrot.slane %v1035, 1
  %v1329 = vsel %vm1304, %v1326, %v1328
  %v1330 = vrot.slane %v1036, 1
  %v1331 = vsel %vm1304, %v1328, %v1330
  %v1332 = vrot.slane %v1038, 1
  %v1333 = vsel %vm1304, %v1305, %v1332
  %v1334 = vrot.slane %v1039, 1
  %v1335 = vsel %vm1304, %v1332, %v1334
  %v1336 = vrot.slane %v1040, 1
  %v1337 = vsel %vm1304, %v1334, %v1336
  %v1338 = vrot.slane %v1041, 1
  %v1339 = vsel %vm1304, %v1336, %v1338
  %v1340 = vrot.slane %v1042, 1
  %v1341 = vsel %vm1304, %v1338, %v1340
  %v1342 = vrot.slane %v1043, 1
  %v1343 = vsel %vm1304, %v1340, %v1342
  %v1344 = vrot.slane %v1044, 1
  %v1345 = vsel %vm1304, %v1342, %v1344
  %v1346 = vrot.slane %v1045, 1
  %v1347 = vsel %vm1304, %v1344, %v1346
  %v1348 = vrot.slane %v1046, 1
  %v1349 = vsel %vm1304, %v1346, %v1348
  %v1350 = vrot.slane %v1047, 1
  %v1351 = vsel %vm1304, %v1348, %v1350
  %v1352 = vrot.slane %v1048, 1
  %v1353 = vsel %vm1304, %v1350, %v1352
  %v1354 = vrot.slane %v1049, 1
  %v1355 = vsel %vm1304, %v1352, %v1354
  %v1356 = vrot.slane %v1050, 1
  %v1357 = vsel %vm1304, %v1354, %v1356
  %1358 = vrot.lane.b32.xlu0 %v1305, 32
  %v1359 = vpop.permute.xlu0 %1358
  %1360 = vrot.lane.b32.xlu0 %v1307, 32
  %v1361 = vpop.permute.xlu0 %1360
  %1362 = vrot.lane.b32.xlu0 %v1309, 32
  %v1363 = vpop.permute.xlu0 %1362
  %1364 = vrot.lane.b32.xlu0 %v1311, 32
  %v1365 = vpop.permute.xlu0 %1364
  %1366 = vrot.lane.b32.xlu0 %v1313, 32
  %v1367 = vpop.permute.xlu0 %1366
  %1368 = vrot.lane.b32.xlu0 %v1315, 32
  %v1369 = vpop.permute.xlu0 %1368
  %1370 = vrot.lane.b32.xlu0 %v1317, 32
  %v1371 = vpop.permute.xlu0 %1370
  %1372 = vrot.lane.b32.xlu0 %v1319, 32
  %v1373 = vpop.permute.xlu0 %1372
  %1374 = vrot.lane.b32.xlu0 %v1321, 32
  %v1375 = vpop.permute.xlu0 %1374
  %1376 = vrot.lane.b32.xlu0 %v1323, 32
  %v1377 = vpop.permute.xlu0 %1376
  %1378 = vrot.lane.b32.xlu0 %v1325, 32
  %v1379 = vpop.permute.xlu0 %1378
  %1380 = vrot.lane.b32.xlu0 %v1327, 32
  %v1381 = vpop.permute.xlu0 %1380
  %1382 = vrot.lane.b32.xlu0 %v1329, 32
  %v1383 = vpop.permute.xlu0 %1382
  %1384 = vrot.lane.b32.xlu0 %v1331, 32
  %v1385 = vpop.permute.xlu0 %1384
  %1386 = vrot.lane.b32.xlu0 %v1330, 32
  %v1387 = vpop.permute.xlu0 %1386
  %1388 = vrot.lane.b32.xlu0 %v1333, 32
  %v1389 = vpop.permute.xlu0 %1388
  %1390 = vrot.lane.b32.xlu0 %v1335, 32
  %v1391 = vpop.permute.xlu0 %1390
  %1392 = vrot.lane.b32.xlu0 %v1337, 32
  %v1393 = vpop.permute.xlu0 %1392
  %1394 = vrot.lane.b32.xlu0 %v1339, 32
  %v1395 = vpop.permute.xlu0 %1394
  %1396 = vrot.lane.b32.xlu0 %v1341, 32
  %v1397 = vpop.permute.xlu0 %1396
  %1398 = vrot.lane.b32.xlu0 %v1343, 32
  %v1399 = vpop.permute.xlu0 %1398
  %1400 = vrot.lane.b32.xlu0 %v1345, 32
  %v1401 = vpop.permute.xlu0 %1400
  %1402 = vrot.lane.b32.xlu0 %v1347, 32
  %v1403 = vpop.permute.xlu0 %1402
  %1404 = vrot.lane.b32.xlu0 %v1349, 32
  %v1405 = vpop.permute.xlu0 %1404
  %1406 = vrot.lane.b32.xlu0 %v1351, 32
  %v1407 = vpop.permute.xlu0 %1406
  %1408 = vrot.lane.b32.xlu0 %v1353, 32
  %v1409 = vpop.permute.xlu0 %1408
  %1410 = vrot.lane.b32.xlu0 %v1355, 32
  %v1411 = vpop.permute.xlu0 %1410
  %1412 = vrot.lane.b32.xlu0 %v1357, 32
  %v1413 = vpop.permute.xlu0 %1412
  %1414 = vrot.lane.b32.xlu0 %v1356, 32
  %v1415 = vpop.permute.xlu0 %1414
  %v1445 = vrot.slane %v1194, 1
  %v1446 = vsel %vm1304, %v1305, %v1445
  %v1447 = vrot.slane %v1196, 1
  %v1448 = vsel %vm1304, %v1445, %v1447
  %v1449 = vrot.slane %v1198, 1
  %v1450 = vsel %vm1304, %v1447, %v1449
  %v1451 = vrot.slane %v1200, 1
  %v1452 = vsel %vm1304, %v1449, %v1451
  %v1453 = vrot.slane %v1202, 1
  %v1454 = vsel %vm1304, %v1451, %v1453
  %v1455 = vrot.slane %v1204, 1
  %v1456 = vsel %vm1304, %v1453, %v1455
  %v1457 = vrot.slane %v1206, 1
  %v1458 = vsel %vm1304, %v1455, %v1457
  %v1459 = vrot.slane %v1208, 1
  %v1460 = vsel %vm1304, %v1457, %v1459
  %v1461 = vrot.slane %v1210, 1
  %v1462 = vsel %vm1304, %v1459, %v1461
  %v1463 = vrot.slane %v1212, 1
  %v1464 = vsel %vm1304, %v1461, %v1463
  %v1465 = vrot.slane %v1214, 1
  %v1466 = vsel %vm1304, %v1463, %v1465
  %v1467 = vrot.slane %v1216, 1
  %v1468 = vsel %vm1304, %v1465, %v1467
  %v1469 = vrot.slane %v1218, 1
  %v1470 = vsel %vm1304, %v1467, %v1469
  %v1471 = vrot.slane %v1222, 1
  %v1472 = vsel %vm1304, %v1305, %v1471
  %v1473 = vrot.slane %v1224, 1
  %v1474 = vsel %vm1304, %v1471, %v1473
  %v1475 = vrot.slane %v1226, 1
  %v1476 = vsel %vm1304, %v1473, %v1475
  %v1477 = vrot.slane %v1228, 1
  %v1478 = vsel %vm1304, %v1475, %v1477
  %v1479 = vrot.slane %v1230, 1
  %v1480 = vsel %vm1304, %v1477, %v1479
  %v1481 = vrot.slane %v1232, 1
  %v1482 = vsel %vm1304, %v1479, %v1481
  %v1483 = vrot.slane %v1234, 1
  %v1484 = vsel %vm1304, %v1481, %v1483
  %v1485 = vrot.slane %v1236, 1
  %v1486 = vsel %vm1304, %v1483, %v1485
  %v1487 = vrot.slane %v1238, 1
  %v1488 = vsel %vm1304, %v1485, %v1487
  %v1489 = vrot.slane %v1240, 1
  %v1490 = vsel %vm1304, %v1487, %v1489
  %v1491 = vrot.slane %v1242, 1
  %v1492 = vsel %vm1304, %v1489, %v1491
  %v1493 = vrot.slane %v1244, 1
  %v1494 = vsel %vm1304, %v1491, %v1493
  %v1495 = vrot.slane %v1246, 1
  %v1496 = vsel %vm1304, %v1493, %v1495
  %1497 = vrot.lane.b32.xlu0 %v1305, 64
  %v1498 = vpop.permute.xlu0 %1497
  %1499 = vrot.lane.b32.xlu0 %v1446, 64
  %v1500 = vpop.permute.xlu0 %1499
  %1501 = vrot.lane.b32.xlu0 %v1448, 64
  %v1502 = vpop.permute.xlu0 %1501
  %1503 = vrot.lane.b32.xlu0 %v1450, 64
  %v1504 = vpop.permute.xlu0 %1503
  %1505 = vrot.lane.b32.xlu0 %v1452, 64
  %v1506 = vpop.permute.xlu0 %1505
  %1507 = vrot.lane.b32.xlu0 %v1454, 64
  %v1508 = vpop.permute.xlu0 %1507
  %1509 = vrot.lane.b32.xlu0 %v1456, 64
  %v1510 = vpop.permute.xlu0 %1509
  %1511 = vrot.lane.b32.xlu0 %v1458, 64
  %v1512 = vpop.permute.xlu0 %1511
  %1513 = vrot.lane.b32.xlu0 %v1460, 64
  %v1514 = vpop.permute.xlu0 %1513
  %1515 = vrot.lane.b32.xlu0 %v1462, 64
  %v1516 = vpop.permute.xlu0 %1515
  %1517 = vrot.lane.b32.xlu0 %v1464, 64
  %v1518 = vpop.permute.xlu0 %1517
  %1519 = vrot.lane.b32.xlu0 %v1466, 64
  %v1520 = vpop.permute.xlu0 %1519
  %1521 = vrot.lane.b32.xlu0 %v1468, 64
  %v1522 = vpop.permute.xlu0 %1521
  %1523 = vrot.lane.b32.xlu0 %v1470, 64
  %v1524 = vpop.permute.xlu0 %1523
  %1525 = vrot.lane.b32.xlu0 %v1469, 64
  %v1526 = vpop.permute.xlu0 %1525
  %1527 = vrot.lane.b32.xlu0 %v1472, 64
  %v1528 = vpop.permute.xlu0 %1527
  %1529 = vrot.lane.b32.xlu0 %v1474, 64
  %v1530 = vpop.permute.xlu0 %1529
  %1531 = vrot.lane.b32.xlu0 %v1476, 64
  %v1532 = vpop.permute.xlu0 %1531
  %1533 = vrot.lane.b32.xlu0 %v1478, 64
  %v1534 = vpop.permute.xlu0 %1533
  %1535 = vrot.lane.b32.xlu0 %v1480, 64
  %v1536 = vpop.permute.xlu0 %1535
  %1537 = vrot.lane.b32.xlu0 %v1482, 64
  %v1538 = vpop.permute.xlu0 %1537
  %1539 = vrot.lane.b32.xlu0 %v1484, 64
  %v1540 = vpop.permute.xlu0 %1539
  %1541 = vrot.lane.b32.xlu0 %v1486, 64
  %v1542 = vpop.permute.xlu0 %1541
  %1543 = vrot.lane.b32.xlu0 %v1488, 64
  %v1544 = vpop.permute.xlu0 %1543
  %1545 = vrot.lane.b32.xlu0 %v1490, 64
  %v1546 = vpop.permute.xlu0 %1545
  %1547 = vrot.lane.b32.xlu0 %v1492, 64
  %v1548 = vpop.permute.xlu0 %1547
  %1549 = vrot.lane.b32.xlu0 %v1494, 64
  %v1550 = vpop.permute.xlu0 %1549
  %1551 = vrot.lane.b32.xlu0 %v1496, 64
  %v1552 = vpop.permute.xlu0 %1551
  %1553 = vrot.lane.b32.xlu0 %v1495, 64
  %v1554 = vpop.permute.xlu0 %1553
  %vm1586 = vcmask 1045504
  %v1587 = vrot.slane 0.0, 2
  %v1588 = vrot.slane %v1024, 2
  %v1589 = vsel %vm1586, %v1587, %v1588
  %v1590 = vrot.slane %v1025, 2
  %v1591 = vsel %vm1586, %v1588, %v1590
  %v1592 = vrot.slane %v1026, 2
  %v1593 = vsel %vm1586, %v1590, %v1592
  %v1594 = vrot.slane %v1027, 2
  %v1595 = vsel %vm1586, %v1592, %v1594
  %v1596 = vrot.slane %v1028, 2
  %v1597 = vsel %vm1586, %v1594, %v1596
  %v1598 = vrot.slane %v1029, 2
  %v1599 = vsel %vm1586, %v1596, %v1598
  %v1600 = vrot.slane %v1030, 2
  %v1601 = vsel %vm1586, %v1598, %v1600
  %v1602 = vrot.slane %v1031, 2
  %v1603 = vsel %vm1586, %v1600, %v1602
  %v1604 = vrot.slane %v1032, 2
  %v1605 = vsel %vm1586, %v1602, %v1604
  %v1606 = vrot.slane %v1033, 2
  %v1607 = vsel %vm1586, %v1604, %v1606
  %v1608 = vrot.slane %v1034, 2
  %v1609 = vsel %vm1586, %v1606, %v1608
  %v1610 = vrot.slane %v1035, 2
  %v1611 = vsel %vm1586, %v1608, %v1610
  %v1612 = vrot.slane %v1036, 2
  %v1613 = vsel %vm1586, %v1610, %v1612
  %v1614 = vrot.slane %v1037, 2
  %v1615 = vsel %vm1586, %v1612, %v1614
  %v1616 = vrot.slane %v1038, 2
  %v1617 = vsel %vm1586, %v1587, %v1616
  %v1618 = vrot.slane %v1039, 2
  %v1619 = vsel %vm1586, %v1616, %v1618
  %v1620 = vrot.slane %v1040, 2
  %v1621 = vsel %vm1586, %v1618, %v1620
  %v1622 = vrot.slane %v1041, 2
  %v1623 = vsel %vm1586, %v1620, %v1622
  %v1624 = vrot.slane %v1042, 2
  %v1625 = vsel %vm1586, %v1622, %v1624
  %v1626 = vrot.slane %v1043, 2
  %v1627 = vsel %vm1586, %v1624, %v1626
  %v1628 = vrot.slane %v1044, 2
  %v1629 = vsel %vm1586, %v1626, %v1628
  %v1630 = vrot.slane %v1045, 2
  %v1631 = vsel %vm1586, %v1628, %v1630
  %v1632 = vrot.slane %v1046, 2
  %v1633 = vsel %vm1586, %v1630, %v1632
  %v1634 = vrot.slane %v1047, 2
  %v1635 = vsel %vm1586, %v1632, %v1634
  %v1636 = vrot.slane %v1048, 2
  %v1637 = vsel %vm1586, %v1634, %v1636
  %v1638 = vrot.slane %v1049, 2
  %v1639 = vsel %vm1586, %v1636, %v1638
  %v1640 = vrot.slane %v1050, 2
  %v1641 = vsel %vm1586, %v1638, %v1640
  %v1642 = vrot.slane %v1051, 2
  %v1643 = vsel %vm1586, %v1640, %v1642
  %1644 = vrot.lane.b32.xlu0 %v1587, 96
  %v1645 = vpop.permute.xlu0 %1644
  %1646 = vrot.lane.b32.xlu0 %v1589, 96
  %v1647 = vpop.permute.xlu0 %1646
  %1648 = vrot.lane.b32.xlu0 %v1591, 96
  %v1649 = vpop.permute.xlu0 %1648
  %1650 = vrot.lane.b32.xlu0 %v1593, 96
  %v1651 = vpop.permute.xlu0 %1650
  %1652 = vrot.lane.b32.xlu0 %v1595, 96
  %v1653 = vpop.permute.xlu0 %1652
  %1654 = vrot.lane.b32.xlu0 %v1597, 96
  %v1655 = vpop.permute.xlu0 %1654
  %1656 = vrot.lane.b32.xlu0 %v1599, 96
  %v1657 = vpop.permute.xlu0 %1656
  %1658 = vrot.lane.b32.xlu0 %v1601, 96
  %v1659 = vpop.permute.xlu0 %1658
  %1660 = vrot.lane.b32.xlu0 %v1603, 96
  %v1661 = vpop.permute.xlu0 %1660
  %1662 = vrot.lane.b32.xlu0 %v1605, 96
  %v1663 = vpop.permute.xlu0 %1662
  %1664 = vrot.lane.b32.xlu0 %v1607, 96
  %v1665 = vpop.permute.xlu0 %1664
  %1666 = vrot.lane.b32.xlu0 %v1609, 96
  %v1667 = vpop.permute.xlu0 %1666
  %1668 = vrot.lane.b32.xlu0 %v1611, 96
  %v1669 = vpop.permute.xlu0 %1668
  %1670 = vrot.lane.b32.xlu0 %v1613, 96
  %v1671 = vpop.permute.xlu0 %1670
  %1672 = vrot.lane.b32.xlu0 %v1615, 96
  %v1673 = vpop.permute.xlu0 %1672
  %1674 = vrot.lane.b32.xlu0 %v1617, 96
  %v1675 = vpop.permute.xlu0 %1674
  %1676 = vrot.lane.b32.xlu0 %v1619, 96
  %v1677 = vpop.permute.xlu0 %1676
  %1678 = vrot.lane.b32.xlu0 %v1621, 96
  %v1679 = vpop.permute.xlu0 %1678
  %1680 = vrot.lane.b32.xlu0 %v1623, 96
  %v1681 = vpop.permute.xlu0 %1680
  %1682 = vrot.lane.b32.xlu0 %v1625, 96
  %v1683 = vpop.permute.xlu0 %1682
  %1684 = vrot.lane.b32.xlu0 %v1627, 96
  %v1685 = vpop.permute.xlu0 %1684
  %1686 = vrot.lane.b32.xlu0 %v1629, 96
  %v1687 = vpop.permute.xlu0 %1686
  %1688 = vrot.lane.b32.xlu0 %v1631, 96
  %v1689 = vpop.permute.xlu0 %1688
  %1690 = vrot.lane.b32.xlu0 %v1633, 96
  %v1691 = vpop.permute.xlu0 %1690
  %1692 = vrot.lane.b32.xlu0 %v1635, 96
  %v1693 = vpop.permute.xlu0 %1692
  %1694 = vrot.lane.b32.xlu0 %v1637, 96
  %v1695 = vpop.permute.xlu0 %1694
  %1696 = vrot.lane.b32.xlu0 %v1639, 96
  %v1697 = vpop.permute.xlu0 %1696
  %1698 = vrot.lane.b32.xlu0 %v1641, 96
  %v1699 = vpop.permute.xlu0 %1698
  %1700 = vrot.lane.b32.xlu0 %v1643, 96
  %v1701 = vpop.permute.xlu0 %1700
  %v1731 = vrot.slane %v1037, 1
  %v1732 = vsel %vm1304, %v1330, %v1731
  %v1733 = vrot.slane %v1051, 1
  %v1734 = vsel %vm1304, %v1356, %v1733
  %1735 = vrot.lane.b32.xlu0 %v1306, 32
  %v1736 = vpop.permute.xlu0 %1735
  %1737 = vrot.lane.b32.xlu0 %v1732, 32
  %v1738 = vpop.permute.xlu0 %1737
  %1739 = vrot.lane.b32.xlu0 %v1731, 32
  %v1740 = vpop.permute.xlu0 %1739
  %1741 = vrot.lane.b32.xlu0 %v1332, 32
  %v1742 = vpop.permute.xlu0 %1741
  %1743 = vrot.lane.b32.xlu0 %v1734, 32
  %v1744 = vpop.permute.xlu0 %1743
  %1745 = vrot.lane.b32.xlu0 %v1733, 32
  %v1746 = vpop.permute.xlu0 %1745
  %v1753 = vrot.slane %v1220, 1
  %v1754 = vsel %vm1304, %v1469, %v1753
  %v1755 = vrot.slane %v1248, 1
  %v1756 = vsel %vm1304, %v1495, %v1755
  %1757 = vrot.lane.b32.xlu0 %v1445, 64
  %v1758 = vpop.permute.xlu0 %1757
  %1759 = vrot.lane.b32.xlu0 %v1754, 64
  %v1760 = vpop.permute.xlu0 %1759
  %1761 = vrot.lane.b32.xlu0 %v1753, 64
  %v1762 = vpop.permute.xlu0 %1761
  %1763 = vrot.lane.b32.xlu0 %v1471, 64
  %v1764 = vpop.permute.xlu0 %1763
  %1765 = vrot.lane.b32.xlu0 %v1756, 64
  %v1766 = vpop.permute.xlu0 %1765
  %1767 = vrot.lane.b32.xlu0 %v1755, 64
  %v1768 = vpop.permute.xlu0 %1767
  %v1775 = vsel %vm1586, %v1614, %v1587
  %v1776 = vsel %vm1586, %v1642, %v1587
  %1777 = vrot.lane.b32.xlu0 %v1588, 96
  %v1778 = vpop.permute.xlu0 %1777
  %1779 = vrot.lane.b32.xlu0 %v1775, 96
  %v1780 = vpop.permute.xlu0 %1779
  %1781 = vrot.lane.b32.xlu0 %v1616, 96
  %v1782 = vpop.permute.xlu0 %1781
  %1783 = vrot.lane.b32.xlu0 %v1776, 96
  %v1784 = vpop.permute.xlu0 %1783
  %v1789 = vsel %vm1304, %v1731, %v1305
  %v1790 = vsel %vm1304, %v1733, %v1305
  %1791 = vrot.lane.b32.xlu0 %v1308, 32
  %v1792 = vpop.permute.xlu0 %1791
  %1793 = vrot.lane.b32.xlu0 %v1789, 32
  %v1794 = vpop.permute.xlu0 %1793
  %1795 = vrot.lane.b32.xlu0 %v1334, 32
  %v1796 = vpop.permute.xlu0 %1795
  %1797 = vrot.lane.b32.xlu0 %v1790, 32
  %v1798 = vpop.permute.xlu0 %1797
  %v1803 = vsel %vm1304, %v1753, %v1305
  %v1804 = vsel %vm1304, %v1755, %v1305
  %1805 = vrot.lane.b32.xlu0 %v1447, 64
  %v1806 = vpop.permute.xlu0 %1805
  %1807 = vrot.lane.b32.xlu0 %v1803, 64
  %v1808 = vpop.permute.xlu0 %1807
  %1809 = vrot.lane.b32.xlu0 %v1473, 64
  %v1810 = vpop.permute.xlu0 %1809
  %1811 = vrot.lane.b32.xlu0 %v1804, 64
  %v1812 = vpop.permute.xlu0 %1811
  %v1817 = vsel %vm1586, %v1587, %v1587
  %1818 = vrot.lane.b32.xlu0 %v1590, 96
  %v1819 = vpop.permute.xlu0 %1818
  %1820 = vrot.lane.b32.xlu0 %v1817, 96
  %v1821 = vpop.permute.xlu0 %1820
  %1822 = vrot.lane.b32.xlu0 %v1618, 96
  %v1823 = vpop.permute.xlu0 %1822
  %v1827 = vsel %vm938, 0.0, %v1359
  %v1828 = vsel %vm938, 0.0, %v1361
  %v1829 = vsel %vm938, %v1194, %v1363
  %v1830 = vsel %vm938, %v1196, %v1365
  %v1831 = vsel %vm938, %v1198, %v1367
  %v1832 = vsel %vm938, %v1200, %v1369
  %v1833 = vsel %vm938, %v1202, %v1371
  %v1834 = vsel %vm938, %v1204, %v1373
  %v1835 = vsel %vm938, %v1206, %v1375
  %v1836 = vsel %vm938, %v1208, %v1377
  %v1837 = vsel %vm938, %v1210, %v1379
  %v1838 = vsel %vm938, %v1212, %v1381
  %v1839 = vsel %vm938, %v1214, %v1383
  %v1840 = vsel %vm938, %v1216, %v1385
  %v1841 = vsel %vm938, %v1218, %v1387
  %v1842 = vsel %vm938, 0.0, %v1389
  %v1843 = vsel %vm938, %v1222, %v1391
  %v1844 = vsel %vm938, %v1224, %v1393
  %v1845 = vsel %vm938, %v1226, %v1395
  %v1846 = vsel %vm938, %v1228, %v1397
  %v1847 = vsel %vm938, %v1230, %v1399
  %v1848 = vsel %vm938, %v1232, %v1401
  %v1849 = vsel %vm938, %v1234, %v1403
  %v1850 = vsel %vm938, %v1236, %v1405
  %v1851 = vsel %vm938, %v1238, %v1407
  %v1852 = vsel %vm938, %v1240, %v1409
  %v1853 = vsel %vm938, %v1242, %v1411
  %v1854 = vsel %vm938, %v1244, %v1413
  %v1855 = vsel %vm938, %v1246, %v1415
  %vm1856 = vcmask 523264
  %v1857 = vsel %vm1856, %v1827, %v1498
  %v1858 = vsel %vm1856, %v1828, %v1500
  %v1859 = vsel %vm1856, %v1829, %v1502
  %v1860 = vsel %vm1856, %v1830, %v1504
  %v1861 = vsel %vm1856, %v1831, %v1506
  %v1862 = vsel %vm1856, %v1832, %v1508
  %v1863 = vsel %vm1856, %v1833, %v1510
  %v1864 = vsel %vm1856, %v1834, %v1512
  %v1865 = vsel %vm1856, %v1835, %v1514
  %v1866 = vsel %vm1856, %v1836, %v1516
  %v1867 = vsel %vm1856, %v1837, %v1518
  %v1868 = vsel %vm1856, %v1838, %v1520
  %v1869 = vsel %vm1856, %v1839, %v1522
  %v1870 = vsel %vm1856, %v1840, %v1524
  %v1871 = vsel %vm1856, %v1841, %v1526
  %v1872 = vsel %vm1856, %v1842, %v1528
  %v1873 = vsel %vm1856, %v1843, %v1530
  %v1874 = vsel %vm1856, %v1844, %v1532
  %v1875 = vsel %vm1856, %v1845, %v1534
  %v1876 = vsel %vm1856, %v1846, %v1536
  %v1877 = vsel %vm1856, %v1847, %v1538
  %v1878 = vsel %vm1856, %v1848, %v1540
  %v1879 = vsel %vm1856, %v1849, %v1542
  %v1880 = vsel %vm1856, %v1850, %v1544
  %v1881 = vsel %vm1856, %v1851, %v1546
  %v1882 = vsel %vm1856, %v1852, %v1548
  %v1883 = vsel %vm1856, %v1853, %v1550
  %v1884 = vsel %vm1856, %v1854, %v1552
  %v1885 = vsel %vm1856, %v1855, %v1554
  %vm1886 = vcmask 785408
  %v1887 = vsel %vm1886, %v1857, %v1645
  %v1888 = vsel %vm1886, %v1858, %v1647
  %v1889 = vsel %vm1886, %v1859, %v1649
  %v1890 = vsel %vm1886, %v1860, %v1651
  %v1891 = vsel %vm1886, %v1861, %v1653
  %v1892 = vsel %vm1886, %v1862, %v1655
  %v1893 = vsel %vm1886, %v1863, %v1657
  %v1894 = vsel %vm1886, %v1864, %v1659
  %v1895 = vsel %vm1886, %v1865, %v1661
  %v1896 = vsel %vm1886, %v1866, %v1663
  %v1897 = vsel %vm1886, %v1867, %v1665
  %v1898 = vsel %vm1886, %v1868, %v1667
  %v1899 = vsel %vm1886, %v1869, %v1669
  %v1900 = vsel %vm1886, %v1870, %v1671
  %v1901 = vsel %vm1886, %v1871, %v1673
  %v1902 = vsel %vm1886, %v1872, %v1675
  %v1903 = vsel %vm1886, %v1873, %v1677
  %v1904 = vsel %vm1886, %v1874, %v1679
  %v1905 = vsel %vm1886, %v1875, %v1681
  %v1906 = vsel %vm1886, %v1876, %v1683
  %v1907 = vsel %vm1886, %v1877, %v1685
  %v1908 = vsel %vm1886, %v1878, %v1687
  %v1909 = vsel %vm1886, %v1879, %v1689
  %v1910 = vsel %vm1886, %v1880, %v1691
  %v1911 = vsel %vm1886, %v1881, %v1693
  %v1912 = vsel %vm1886, %v1882, %v1695
  %v1913 = vsel %vm1886, %v1883, %v1697
  %v1914 = vsel %vm1886, %v1884, %v1699
  %v1915 = vsel %vm1886, %v1885, %v1701
  %v1916 = vsel %vm938, 0.0, %v1736
  %v1917 = vsel %vm938, %v1218, %v1738
  %v1918 = vsel %vm938, %v1220, %v1740
  %v1919 = vsel %vm938, 0.0, %v1742
  %v1920 = vsel %vm938, %v1246, %v1744
  %v1921 = vsel %vm938, %v1248, %v1746
  %v1922 = vsel %vm1856, %v1916, %v1758
  %v1923 = vsel %vm1856, %v1917, %v1760
  %v1924 = vsel %vm1856, %v1918, %v1762
  %v1925 = vsel %vm1856, %v1919, %v1764
  %v1926 = vsel %vm1856, %v1920, %v1766
  %v1927 = vsel %vm1856, %v1921, %v1768
  %v1928 = vsel %vm1886, %v1922, %v1778
  %v1929 = vsel %vm1886, %v1923, %v1673
  %v1930 = vsel %vm1886, %v1924, %v1780
  %v1931 = vsel %vm1886, %v1925, %v1782
  %v1932 = vsel %vm1886, %v1926, %v1701
  %v1933 = vsel %vm1886, %v1927, %v1784
  %v1934 = vsel %vm938, %v1194, %v1792
  %v1935 = vsel %vm938, %v1220, %v1794
  %v1936 = vsel %vm938, %v1222, %v1796
  %v1937 = vsel %vm938, %v1248, %v1798
  %v1938 = vsel %vm1856, %v1934, %v1806
  %v1939 = vsel %vm1856, %v1935, %v1808
  %v1940 = vsel %vm1856, %v1936, %v1810
  %v1941 = vsel %vm1856, %v1937, %v1812
  %v1942 = vsel %vm1886, %v1938, %v1819
  %v1943 = vsel %vm1886, %v1939, %v1780
  %v1944 = vsel %vm1886, %v1857, %v1821
  %v1945 = vsel %vm1886, %v1940, %v1823
  %v1946 = vsel %vm1886, %v1941, %v1784
  %vm1987 = vcmask 1040384
  %v1988 = vrot.slane %v1887, 7
  %v1989 = vrot.slane %v1888, 7
  %v1990 = vsel %vm1987, %v1988, %v1989
  %v1991 = vrot.slane %v1928, 7
  %v1992 = vrot.slane %v1889, 7
  %v1993 = vsel %vm1987, %v1991, %v1992
  %v1994 = vrot.slane %v1942, 7
  %v1995 = vrot.slane %v1890, 7
  %v1996 = vsel %vm1987, %v1994, %v1995
  %v1997 = vsel %vm1987, %v1989, %v1992
  %v1998 = vsel %vm1987, %v1992, %v1995
  %v1999 = vrot.slane %v1891, 7
  %v2000 = vsel %vm1987, %v1995, %v1999
  %v2001 = vrot.slane %v1892, 7
  %v2002 = vsel %vm1987, %v1999, %v2001
  %v2003 = vrot.slane %v1893, 7
  %v2004 = vsel %vm1987, %v2001, %v2003
  %v2005 = vrot.slane %v1894, 7
  %v2006 = vsel %vm1987, %v2003, %v2005
  %v2007 = vrot.slane %v1895, 7
  %v2008 = vsel %vm1987, %v2005, %v2007
  %v2009 = vrot.slane %v1896, 7
  %v2010 = vsel %vm1987, %v2007, %v2009
  %v2011 = vrot.slane %v1897, 7
  %v2012 = vsel %vm1987, %v2009, %v2011
  %v2013 = vrot.slane %v1898, 7
  %v2014 = vsel %vm1987, %v2011, %v2013
  %v2015 = vrot.slane %v1899, 7
  %v2016 = vsel %vm1987, %v2013, %v2015
  %v2017 = vrot.slane %v1900, 7
  %v2018 = vsel %vm1987, %v2015, %v2017
  %v2019 = vrot.slane %v1929, 7
  %v2020 = vsel %vm1987, %v2017, %v2019
  %v2021 = vrot.slane %v1943, 7
  %v2022 = vsel %vm1987, %v2019, %v2021
  %v2023 = vrot.slane %v1901, 7
  %v2024 = vsel %vm1987, %v2017, %v2023
  %v2025 = vrot.slane %v1930, 7
  %v2026 = vsel %vm1987, %v2019, %v2025
  %v2027 = vrot.slane %v1944, 7
  %v2028 = vsel %vm1987, %v2021, %v2027
  %v2029 = vrot.slane %v1902, 7
  %v2030 = vsel %vm1987, %v1988, %v2029
  %v2031 = vrot.slane %v1931, 7
  %v2032 = vrot.slane %v1903, 7
  %v2033 = vsel %vm1987, %v2031, %v2032
  %v2034 = vrot.slane %v1945, 7
  %v2035 = vrot.slane %v1904, 7
  %v2036 = vsel %vm1987, %v2034, %v2035
  %v2037 = vsel %vm1987, %v2029, %v2032
  %v2038 = vsel %vm1987, %v2032, %v2035
  %v2039 = vrot.slane %v1905, 7
  %v2040 = vsel %vm1987, %v2035, %v2039
  %v2041 = vrot.slane %v1906, 7
  %v2042 = vsel %vm1987, %v2039, %v2041
  %v2043 = vrot.slane %v1907, 7
  %v2044 = vsel %vm1987, %v2041, %v2043
  %v2045 = vrot.slane %v1908, 7
  %v2046 = vsel %vm1987, %v2043, %v2045
  %v2047 = vrot.slane %v1909, 7
  %v2048 = vsel %vm1987, %v2045, %v2047
  %v2049 = vrot.slane %v1910, 7
  %v2050 = vsel %vm1987, %v2047, %v2049
  %v2051 = vrot.slane %v1911, 7
  %v2052 = vsel %vm1987, %v2049, %v2051
  %v2053 = vrot.slane %v1912, 7
  %v2054 = vsel %vm1987, %v2051, %v2053
  %v2055 = vrot.slane %v1913, 7
  %v2056 = vsel %vm1987, %v2053, %v2055
  %v2057 = vrot.slane %v1914, 7
  %v2058 = vsel %vm1987, %v2055, %v2057
  %v2059 = vrot.slane %v1932, 7
  %v2060 = vsel %vm1987, %v2057, %v2059
  %v2061 = vrot.slane %v1946, 7
  %v2062 = vsel %vm1987, %v2059, %v2061
  %v2063 = vrot.slane %v1915, 7
  %v2064 = vsel %vm1987, %v2057, %v2063
  %v2065 = vrot.slane %v1933, 7
  %v2066 = vsel %vm1987, %v2059, %v2065
  %v2067 = vsel %vm1987, %v2061, %v2027
  %v2108 = vld [vmem:[%s3] sm:$0xff]
  %v2109 = vld [vmem:[%s3 + $0x8] sm:$0xff]
  %v2110 = vld [vmem:[%s3 + $0x10] sm:$0xff]
  %v2111 = vld [vmem:[%s3 + $0x18] sm:$0xff]
  %v2112 = vld [vmem:[%s3 + $0x20] sm:$0xff]
  %v2113 = vld [vmem:[%s3 + $0x28] sm:$0xff]
  %v2114 = vld [vmem:[%s3 + $0x30] sm:$0xff]
  %v2115 = vld [vmem:[%s3 + $0x38] sm:$0xff]
  %v2116 = vld [vmem:[%s3 + $0x40] sm:$0xff]
  %v2117 = vld [vmem:[%s3 + $0x48] sm:$0xff]
  %v2118 = vld [vmem:[%s3 + $0x50] sm:$0xff]
  %v2119 = vld [vmem:[%s3 + $0x58] sm:$0xff]
  %v2120 = vld [vmem:[%s3 + $0x60] sm:$0xff]
  %v2121 = vld [vmem:[%s3 + $0x68] sm:$0xff]
  %v2122 = vld [vmem:[%s3 + $0x70] sm:$0xff]
  %v2123 = vld [vmem:[%s3 + $0x78] sm:$0xff]
  %v2124 = vld [vmem:[%s3 + $0x80] sm:$0xff]
  %v2125 = vld [vmem:[%s3 + $0x88] sm:$0xff]
  %v2126 = vld [vmem:[%s3 + $0x90] sm:$0xff]
  %v2127 = vld [vmem:[%s3 + $0x98] sm:$0xff]
  %v2128 = vld [vmem:[%s3 + $0xa0] sm:$0xff]
  %v2129 = vld [vmem:[%s3 + $0xa8] sm:$0xff]
  %v2130 = vld [vmem:[%s3 + $0xb0] sm:$0xff]
  %v2131 = vld [vmem:[%s3 + $0xb8] sm:$0xff]
  %v2132 = vld [vmem:[%s3 + $0xc0] sm:$0xff]
  %v2133 = vld [vmem:[%s3 + $0xc8] sm:$0xff]
  %v2134 = vld [vmem:[%s3 + $0xd0] sm:$0xff]
  %v2135 = vld [vmem:[%s3 + $0xd8] sm:$0xff]
  %v2136 = vld [vmem:[%s3 + $0xe0] sm:$0xff]
  %v2137 = vld [vmem:[%s3 + $0xe8] sm:$0xff]
  %v2138 = vld [vmem:[%s3 + $0xf0] sm:$0xff]
  %v2139 = vld [vmem:[%s3 + $0xf8] sm:$0xff]
  %v2140 = vld [vmem:[%s3 + $0x100] sm:$0xff]
  %v2141 = vld [vmem:[%s3 + $0x108] sm:$0xff]
  %v2142 = vld [vmem:[%s3 + $0x110] sm:$0xff]
  %v2143 = vld [vmem:[%s3 + $0x118] sm:$0xff]
  %v2144 = vld [vmem:[%s3 + $0x120] sm:$0xff]
  %v2145 = vld [vmem:[%s3 + $0x128] sm:$0xff]
  %v2146 = vld [vmem:[%s3 + $0x130] sm:$0xff]
  %v2147 = vld [vmem:[%s3 + $0x138] sm:$0xff]
  %v2148 = vld [vmem:[%s3 + $0x140] sm:$0xff]
  %v2149 = vld [vmem:[%s3 + $0x148] sm:$0xff]
  %v2150 = vld [vmem:[%s3 + $0x150] sm:$0xff]
  %v2151 = vld [vmem:[%s3 + $0x158] sm:$0xff]
  %v2152 = vld [vmem:[%s3 + $0x160] sm:$0xff]
  %v2153 = vld [vmem:[%s3 + $0x168] sm:$0xff]
  %v2154 = vld [vmem:[%s3 + $0x170] sm:$0xff]
  %v2155 = vld [vmem:[%s3 + $0x178] sm:$0xff]
  %v2156 = vld [vmem:[%s4] sm:$0x1]
  %v2158 = vlaneseq
  %v2159 = vshrl.u32 %v2158, 7
  %v2160 = vsub.s32 0, %v2159
  %v2161 = vrot.slane %v2156, %v2160
  %2163 = vmatprep.subr.mxu0 0.0
  %2164 = vmatpush1.msra.mxu0 %v2108
  %2165 = vmatprep.subr.mxu0 0.0
  %2166 = vmatpush1.msra.mxu0 %v2109
  %2167 = vmatprep.subr.mxu0 0.0
  %2168 = vmatpush1.msra.mxu0 %v2110
  %2169 = vmatprep.subr.mxu0 0.0
  %2170 = vmatpush1.msra.mxu0 %v2111
  %2171 = vmatprep.subr.mxu0 0.0
  %2172 = vmatpush1.msra.mxu0 %v2112
  %2173 = vmatprep.subr.mxu0 0.0
  %2174 = vmatpush1.msra.mxu0 %v2113
  %2175 = vmatprep.subr.mxu0 0.0
  %2176 = vmatpush1.msra.mxu0 %v2114
  %2177 = vmatprep.subr.mxu0 0.0
  %2178 = vmatpush1.msra.mxu0 %v2115
  %2179 = vmatprep.subr.mxu0 0.0
  %2180 = vmatpush1.msra.mxu0 %v2116
  %2181 = vmatprep.subr.mxu0 0.0
  %2182 = vmatpush1.msra.mxu0 %v2117
  %2183 = vmatprep.subr.mxu0 0.0
  %2184 = vmatpush1.msra.mxu0 %v2118
  %2185 = vmatprep.subr.mxu0 0.0
  %2186 = vmatpush1.msra.mxu0 %v2119
  %2187 = vmatprep.subr.mxu0 0.0
  %2188 = vmatpush1.msra.mxu0 %v2120
  %2189 = vmatprep.subr.mxu0 0.0
  %2190 = vmatpush1.msra.mxu0 %v2121
  %2191 = vmatprep.subr.mxu0 0.0
  %2192 = vmatpush1.msra.mxu0 %v2122
  %2193 = vmatprep.subr.mxu0 0.0
  %2194 = vmatpush1.msra.mxu0 %v2123
  %2195 = vmatprep.subr.mxu0 0.0
  %2196 = vmatpush1.msra.mxu0 %v2124
  %2197 = vmatprep.subr.mxu0 0.0
  %2198 = vmatpush1.msra.mxu0 %v2125
  %2199 = vmatprep.subr.mxu0 0.0
  %2200 = vmatpush1.msra.mxu0 %v2126
  %2201 = vmatprep.subr.mxu0 0.0
  %2202 = vmatpush1.msra.mxu0 %v2127
  %2203 = vmatprep.subr.mxu0 0.0
  %2204 = vmatpush1.msra.mxu0 %v2128
  %2205 = vmatprep.subr.mxu0 0.0
  %2206 = vmatpush1.msra.mxu0 %v2129
  %2207 = vmatprep.subr.mxu0 0.0
  %2208 = vmatpush1.msra.mxu0 %v2130
  %2209 = vmatprep.subr.mxu0 0.0
  %2210 = vmatpush1.msra.mxu0 %v2131
  %2211 = vmatprep.subr.mxu0 0.0
  %2212 = vmatpush1.msra.mxu0 %v2132
  %2213 = vmatprep.subr.mxu0 0.0
  %2214 = vmatpush1.msra.mxu0 %v2133
  %2215 = vmatprep.subr.mxu0 0.0
  %2216 = vmatpush1.msra.mxu0 %v2134
  %2217 = vmatprep.subr.mxu0 0.0
  %2218 = vmatpush1.msra.mxu0 %v2135
  %2219 = vmatprep.subr.mxu0 0.0
  %2220 = vmatpush1.msra.mxu0 %v2136
  %2221 = vmatprep.subr.mxu0 0.0
  %2222 = vmatpush1.msra.mxu0 %v2137
  %2223 = vmatprep.subr.mxu0 0.0
  %2224 = vmatpush1.msra.mxu0 %v2138
  %2225 = vmatprep.subr.mxu0 0.0
  %2226 = vmatpush1.msra.mxu0 %v2139
  %2227 = vmatprep.mubr.f32.mxu0 %v1993
  %2228 = vmatmul.mubr.f32.gmra.mrb[0].mxu0 %v1990
  %v2229 = vpop.f32.mrb[0].mxu0
  %v2230 = vadd.f32 %v2161, %v2229
  %v2231 = vpop.f32.mrb[0].mxu0
  %2232 = vmatprep.mubr.f32.mxu0 %v1998
  %2233 = vmatmul.mubr.f32.gmra.mrb[0].mxu0 %v1997
  %v2234 = vpop.f32.mrb[0].mxu0
  %v2235 = vadd.f32 %v2161, %v2234
  %v2236 = vpop.f32.mrb[0].mxu0
  %2237 = vmatprep.mubr.f32.mxu0 %v2000
  %2238 = vmatmul.mubr.f32.gmra.mrb[0].mxu0 %v1998
  %v2239 = vpop.f32.mrb[0].mxu0
  %v2240 = vadd.f32 %v2161, %v2239
  %v2241 = vpop.f32.mrb[0].mxu0
  %2242 = vmatprep.mubr.f32.mxu0 %v2002
  %2243 = vmatmul.mubr.f32.gmra.mrb[0].mxu0 %v2000
  %v2244 = vpop.f32.mrb[0].mxu0
  %v2245 = vadd.f32 %v2161, %v2244
  %v2246 = vpop.f32.mrb[0].mxu0
  %2247 = vmatprep.mubr.f32.mxu0 %v2004
  %2248 = vmatmul.mubr.f32.gmra.mrb[0].mxu0 %v2002
  %v2249 = vpop.f32.mrb[0].mxu0
  %v2250 = vadd.f32 %v2161, %v2249
  %v2251 = vpop.f32.mrb[0].mxu0
  %2252 = vmatprep.mubr.f32.mxu0 %v2006
  %2253 = vmatmul.mubr.f32.gmra.mrb[0].mxu0 %v2004
  %v2254 = vpop.f32.mrb[0].mxu0
  %v2255 = vadd.f32 %v2161, %v2254
  %v2256 = vpop.f32.mrb[0].mxu0
  %2257 = vmatprep.mubr.f32.mxu0 %v2008
  %2258 = vmatmul.mubr.f32.gmra.mrb[0].mxu0 %v2006
  %v2259 = vpop.f32.mrb[0].mxu0
  %v2260 = vadd.f32 %v2161, %v2259
  %v2261 = vpop.f32.mrb[0].mxu0
  %2262 = vmatprep.mubr.f32.mxu0 %v2010
  %2263 = vmatmul.mubr.f32.gmra.mrb[0].mxu0 %v2008
  %v2264 = vpop.f32.mrb[0].mxu0
  %v2265 = vadd.f32 %v2161, %v2264
  %v2266 = vpop.f32.mrb[0].mxu0
  %2267 = vmatprep.mubr.f32.mxu0 %v2012
  %2268 = vmatmul.mubr.f32.gmra.mrb[0].mxu0 %v2010
  %v2269 = vpop.f32.mrb[0].mxu0
  %v2270 = vadd.f32 %v2161, %v2269
  %v2271 = vpop.f32.mrb[0].mxu0
  %2272 = vmatprep.mubr.f32.mxu0 %v2014
  %2273 = vmatmul.mubr.f32.gmra.mrb[0].mxu0 %v2012
  %v2274 = vpop.f32.mrb[0].mxu0
  %v2275 = vadd.f32 %v2161, %v2274
  %v2276 = vpop.f32.mrb[0].mxu0
  %2277 = vmatprep.mubr.f32.mxu0 %v2016
  %2278 = vmatmul.mubr.f32.gmra.mrb[0].mxu0 %v2014
  %v2279 = vpop.f32.mrb[0].mxu0
  %v2280 = vadd.f32 %v2161, %v2279
  %v2281 = vpop.f32.mrb[0].mxu0
  %2282 = vmatprep.mubr.f32.mxu0 %v2018
  %2283 = vmatmul.mubr.f32.gmra.mrb[0].mxu0 %v2016
  %v2284 = vpop.f32.mrb[0].mxu0
  %v2285 = vadd.f32 %v2161, %v2284
  %v2286 = vpop.f32.mrb[0].mxu0
  %2287 = vmatprep.mubr.f32.mxu0 %v2020
  %2288 = vmatmul.mubr.f32.gmra.mrb[0].mxu0 %v2018
  %v2289 = vpop.f32.mrb[0].mxu0
  %v2290 = vadd.f32 %v2161, %v2289
  %v2291 = vpop.f32.mrb[0].mxu0
  %2292 = vmatprep.mubr.f32.mxu0 %v2026
  %2293 = vmatmul.mubr.f32.gmra.mrb[0].mxu0 %v2024
  %v2294 = vpop.f32.mrb[0].mxu0
  %v2295 = vadd.f32 %v2161, %v2294
  %v2296 = vpop.f32.mrb[0].mxu0
  %2297 = vmatprep.mubr.f32.mxu0 %v2033
  %2298 = vmatmul.mubr.f32.gmra.mrb[0].mxu0 %v2030
  %v2299 = vpop.f32.mrb[0].mxu0
  %v2300 = vadd.f32 %v2161, %v2299
  %v2301 = vpop.f32.mrb[0].mxu0
  %2302 = vmatprep.mubr.f32.mxu0 %v2038
  %2303 = vmatmul.mubr.f32.gmra.mrb[0].mxu0 %v2037
  %v2304 = vpop.f32.mrb[0].mxu0
  %v2305 = vadd.f32 %v2161, %v2304
  %v2306 = vpop.f32.mrb[0].mxu0
  %2307 = vmatprep.mubr.f32.mxu0 %v2040
  %2308 = vmatmul.mubr.f32.gmra.mrb[0].mxu0 %v2038
  %v2309 = vpop.f32.mrb[0].mxu0
  %v2310 = vadd.f32 %v2161, %v2309
  %v2311 = vpop.f32.mrb[0].mxu0
  %2312 = vmatprep.mubr.f32.mxu0 %v2042
  %2313 = vmatmul.mubr.f32.gmra.mrb[0].mxu0 %v2040
  %v2314 = vpop.f32.mrb[0].mxu0
  %v2315 = vadd.f32 %v2161, %v2314
  %v2316 = vpop.f32.mrb[0].mxu0
  %2317 = vmatprep.mubr.f32.mxu0 %v2044
  %2318 = vmatmul.mubr.f32.gmra.mrb[0].mxu0 %v2042
  %v2319 = vpop.f32.mrb[0].mxu0
  %v2320 = vadd.f32 %v2161, %v2319
  %v2321 = vpop.f32.mrb[0].mxu0
  %2322 = vmatprep.mubr.f32.mxu0 %v2046
  %2323 = vmatmul.mubr.f32.gmra.mrb[0].mxu0 %v2044
  %v2324 = vpop.f32.mrb[0].mxu0
  %v2325 = vadd.f32 %v2161, %v2324
  %v2326 = vpop.f32.mrb[0].mxu0
  %2327 = vmatprep.mubr.f32.mxu0 %v2048
  %2328 = vmatmul.mubr.f32.gmra.mrb[0].mxu0 %v2046
  %v2329 = vpop.f32.mrb[0].mxu0
  %v2330 = vadd.f32 %v2161, %v2329
  %v2331 = vpop.f32.mrb[0].mxu0
  %2332 = vmatprep.mubr.f32.mxu0 %v2050
  %2333 = vmatmul.mubr.f32.gmra.mrb[0].mxu0 %v2048
  %v2334 = vpop.f32.mrb[0].mxu0
  %v2335 = vadd.f32 %v2161, %v2334
  %v2336 = vpop.f32.mrb[0].mxu0
  %2337 = vmatprep.mubr.f32.mxu0 %v2052
  %2338 = vmatmul.mubr.f32.gmra.mrb[0].mxu0 %v2050
  %v2339 = vpop.f32.mrb[0].mxu0
  %v2340 = vadd.f32 %v2161, %v2339
  %v2341 = vpop.f32.mrb[0].mxu0
  %2342 = vmatprep.mubr.f32.mxu0 %v2054
  %2343 = vmatmul.mubr.f32.gmra.mrb[0].mxu0 %v2052
  %v2344 = vpop.f32.mrb[0].mxu0
  %v2345 = vadd.f32 %v2161, %v2344
  %v2346 = vpop.f32.mrb[0].mxu0
  %2347 = vmatprep.mubr.f32.mxu0 %v2056
  %2348 = vmatmul.mubr.f32.gmra.mrb[0].mxu0 %v2054
  %v2349 = vpop.f32.mrb[0].mxu0
  %v2350 = vadd.f32 %v2161, %v2349
  %v2351 = vpop.f32.mrb[0].mxu0
  %2352 = vmatprep.mubr.f32.mxu0 %v2058
  %2353 = vmatmul.mubr.f32.gmra.mrb[0].mxu0 %v2056
  %v2354 = vpop.f32.mrb[0].mxu0
  %v2355 = vadd.f32 %v2161, %v2354
  %v2356 = vpop.f32.mrb[0].mxu0
  %2357 = vmatprep.mubr.f32.mxu0 %v2060
  %2358 = vmatmul.mubr.f32.gmra.mrb[0].mxu0 %v2058
  %v2359 = vpop.f32.mrb[0].mxu0
  %v2360 = vadd.f32 %v2161, %v2359
  %v2361 = vpop.f32.mrb[0].mxu0
  %2362 = vmatprep.mubr.f32.mxu0 %v2066
  %2363 = vmatmul.mubr.f32.gmra.mrb[0].mxu0 %v2064
  %v2364 = vpop.f32.mrb[0].mxu0
  %v2365 = vadd.f32 %v2161, %v2364
  %v2366 = vpop.f32.mrb[0].mxu0
  %2367 = vdwg.mxu0
  %2368 = vmatprep.subr.mxu0 0.0
  %2369 = vmatpush1.msra.mxu0 %v2140
  %2370 = vmatprep.subr.mxu0 0.0
  %2371 = vmatpush1.msra.mxu0 %v2141
  %2372 = vmatprep.subr.mxu0 0.0
  %2373 = vmatpush1.msra.mxu0 %v2142
  %2374 = vmatprep.subr.mxu0 0.0
  %2375 = vmatpush1.msra.mxu0 %v2143
  %2376 = vmatprep.subr.mxu0 0.0
  %2377 = vmatpush1.msra.mxu0 %v2144
  %2378 = vmatprep.subr.mxu0 0.0
  %2379 = vmatpush1.msra.mxu0 %v2145
  %2380 = vmatprep.subr.mxu0 0.0
  %2381 = vmatpush1.msra.mxu0 %v2146
  %2382 = vmatprep.subr.mxu0 0.0
  %2383 = vmatpush1.msra.mxu0 %v2147
  %2384 = vmatprep.subr.mxu0 0.0
  %2385 = vmatpush1.msra.mxu0 %v2148
  %2386 = vmatprep.subr.mxu0 0.0
  %2387 = vmatpush1.msra.mxu0 %v2149
  %2388 = vmatprep.subr.mxu0 0.0
  %2389 = vmatpush1.msra.mxu0 %v2150
  %2390 = vmatprep.subr.mxu0 0.0
  %2391 = vmatpush1.msra.mxu0 %v2151
  %2392 = vmatprep.subr.mxu0 0.0
  %2393 = vmatpush1.msra.mxu0 %v2152
  %2394 = vmatprep.subr.mxu0 0.0
  %2395 = vmatpush1.msra.mxu0 %v2153
  %2396 = vmatprep.subr.mxu0 0.0
  %2397 = vmatpush1.msra.mxu0 %v2154
  %2398 = vmatprep.subr.mxu0 0.0
  %2399 = vmatpush1.msra.mxu0 %v2155
  %2400 = vmatprep.subr.mxu0 0.0
  %2401 = vmatpush1.msra.mxu0 0.0
  %2402 = vmatprep.subr.mxu0 0.0
  %2403 = vmatpush1.msra.mxu0 0.0
  %2404 = vmatprep.subr.mxu0 0.0
  %2405 = vmatpush1.msra.mxu0 0.0
  %2406 = vmatprep.subr.mxu0 0.0
  %2407 = vmatpush1.msra.mxu0 0.0
  %2408 = vmatprep.subr.mxu0 0.0
  %2409 = vmatpush1.msra.mxu0 0.0
  %2410 = vmatprep.subr.mxu0 0.0
  %2411 = vmatpush1.msra.mxu0 0.0
  %2412 = vmatprep.subr.mxu0 0.0
  %2413 = vmatpush1.msra.mxu0 0.0
  %2414 = vmatprep.subr.mxu0 0.0
  %2415 = vmatpush1.msra.mxu0 0.0
  %2416 = vmatprep.subr.mxu0 0.0
  %2417 = vmatpush1.msra.mxu0 0.0
  %2418 = vmatprep.subr.mxu0 0.0
  %2419 = vmatpush1.msra.mxu0 0.0
  %2420 = vmatprep.subr.mxu0 0.0
  %2421 = vmatpush1.msra.mxu0 0.0
  %2422 = vmatprep.subr.mxu0 0.0
  %2423 = vmatpush1.msra.mxu0 0.0
  %2424 = vmatprep.subr.mxu0 0.0
  %2425 = vmatpush1.msra.mxu0 0.0
  %2426 = vmatprep.subr.mxu0 0.0
  %2427 = vmatpush1.msra.mxu0 0.0
  %2428 = vmatprep.subr.mxu0 0.0
  %2429 = vmatpush1.msra.mxu0 0.0
  %2430 = vmatprep.subr.mxu0 0.0
  %2431 = vmatpush1.msra.mxu0 0.0
  %2432 = vmatprep.mubr.f32.mxu0 0.0
  %2433 = vmatmul.mubr.f32.gmra.mrb[0].mxu0 %v1996
  %v2434 = vpop.f32.mrb[0].mxu0
  %v2435 = vadd.f32 %v2230, %v2434
  %v2436 = vpop.f32.mrb[0].mxu0
  %2437 = vmatprep.mubr.f32.mxu0 0.0
  %2438 = vmatmul.mubr.f32.gmra.mrb[0].mxu0 %v2000
  %v2439 = vpop.f32.mrb[0].mxu0
  %v2440 = vadd.f32 %v2235, %v2439
  %v2441 = vpop.f32.mrb[0].mxu0
  %2442 = vmatprep.mubr.f32.mxu0 0.0
  %2443 = vmatmul.mubr.f32.gmra.mrb[0].mxu0 %v2002
  %v2444 = vpop.f32.mrb[0].mxu0
  %v2445 = vadd.f32 %v2240, %v2444
  %v2446 = vpop.f32.mrb[0].mxu0
  %2447 = vmatprep.mubr.f32.mxu0 0.0
  %2448 = vmatmul.mubr.f32.gmra.mrb[0].mxu0 %v2004
  %v2449 = vpop.f32.mrb[0].mxu0
  %v2450 = vadd.f32 %v2245, %v2449
  %v2451 = vpop.f32.mrb[0].mxu0
  %2452 = vmatprep.mubr.f32.mxu0 0.0
  %2453 = vmatmul.mubr.f32.gmra.mrb[0].mxu0 %v2006
  %v2454 = vpop.f32.mrb[0].mxu0
  %v2455 = vadd.f32 %v2250, %v2454
  %v2456 = vpop.f32.mrb[0].mxu0
  %2457 = vmatprep.mubr.f32.mxu0 0.0
  %2458 = vmatmul.mubr.f32.gmra.mrb[0].mxu0 %v2008
  %v2459 = vpop.f32.mrb[0].mxu0
  %v2460 = vadd.f32 %v2255, %v2459
  %v2461 = vpop.f32.mrb[0].mxu0
  %2462 = vmatprep.mubr.f32.mxu0 0.0
  %2463 = vmatmul.mubr.f32.gmra.mrb[0].mxu0 %v2010
  %v2464 = vpop.f32.mrb[0].mxu0
  %v2465 = vadd.f32 %v2260, %v2464
  %v2466 = vpop.f32.mrb[0].mxu0
  %2467 = vmatprep.mubr.f32.mxu0 0.0
  %2468 = vmatmul.mubr.f32.gmra.mrb[0].mxu0 %v2012
  %v2469 = vpop.f32.mrb[0].mxu0
  %v2470 = vadd.f32 %v2265, %v2469
  %v2471 = vpop.f32.mrb[0].mxu0
  %2472 = vmatprep.mubr.f32.mxu0 0.0
  %2473 = vmatmul.mubr.f32.gmra.mrb[0].mxu0 %v2014
  %v2474 = vpop.f32.mrb[0].mxu0
  %v2475 = vadd.f32 %v2270, %v2474
  %v2476 = vpop.f32.mrb[0].mxu0
  %2477 = vmatprep.mubr.f32.mxu0 0.0
  %2478 = vmatmul.mubr.f32.gmra.mrb[0].mxu0 %v2016
  %v2479 = vpop.f32.mrb[0].mxu0
  %v2480 = vadd.f32 %v2275, %v2479
  %v2481 = vpop.f32.mrb[0].mxu0
  %2482 = vmatprep.mubr.f32.mxu0 0.0
  %2483 = vmatmul.mubr.f32.gmra.mrb[0].mxu0 %v2018
  %v2484 = vpop.f32.mrb[0].mxu0
  %v2485 = vadd.f32 %v2280, %v2484
  %v2486 = vpop.f32.mrb[0].mxu0
  %2487 = vmatprep.mubr.f32.mxu0 0.0
  %2488 = vmatmul.mubr.f32.gmra.mrb[0].mxu0 %v2020
  %v2489 = vpop.f32.mrb[0].mxu0
  %v2490 = vadd.f32 %v2285, %v2489
  %v2491 = vpop.f32.mrb[0].mxu0
  %2492 = vmatprep.mubr.f32.mxu0 0.0
  %2493 = vmatmul.mubr.f32.gmra.mrb[0].mxu0 %v2022
  %v2494 = vpop.f32.mrb[0].mxu0
  %v2495 = vadd.f32 %v2290, %v2494
  %v2496 = vpop.f32.mrb[0].mxu0
  %2497 = vmatprep.mubr.f32.mxu0 0.0
  %2498 = vmatmul.mubr.f32.gmra.mrb[0].mxu0 %v2028
  %v2499 = vpop.f32.mrb[0].mxu0
  %v2500 = vadd.f32 %v2295, %v2499
  %v2501 = vpop.f32.mrb[0].mxu0
  %2502 = vmatprep.mubr.f32.mxu0 0.0
  %2503 = vmatmul.mubr.f32.gmra.mrb[0].mxu0 %v2036
  %v2504 = vpop.f32.mrb[0].mxu0
  %v2505 = vadd.f32 %v2300, %v2504
  %v2506 = vpop.f32.mrb[0].mxu0
  %2507 = vmatprep.mubr.f32.mxu0 0.0
  %2508 = vmatmul.mubr.f32.gmra.mrb[0].mxu0 %v2040
  %v2509 = vpop.f32.mrb[0].mxu0
  %v2510 = vadd.f32 %v2305, %v2509
  %v2511 = vpop.f32.mrb[0].mxu0
  %2512 = vmatprep.mubr.f32.mxu0 0.0
  %2513 = vmatmul.mubr.f32.gmra.mrb[0].mxu0 %v2042
  %v2514 = vpop.f32.mrb[0].mxu0
  %v2515 = vadd.f32 %v2310, %v2514
  %v2516 = vpop.f32.mrb[0].mxu0
  %2517 = vmatprep.mubr.f32.mxu0 0.0
  %2518 = vmatmul.mubr.f32.gmra.mrb[0].mxu0 %v2044
  %v2519 = vpop.f32.mrb[0].mxu0
  %v2520 = vadd.f32 %v2315, %v2519
  %v2521 = vpop.f32.mrb[0].mxu0
  %2522 = vmatprep.mubr.f32.mxu0 0.0
  %2523 = vmatmul.mubr.f32.gmra.mrb[0].mxu0 %v2046
  %v2524 = vpop.f32.mrb[0].mxu0
  %v2525 = vadd.f32 %v2320, %v2524
  %v2526 = vpop.f32.mrb[0].mxu0
  %2527 = vmatprep.mubr.f32.mxu0 0.0
  %2528 = vmatmul.mubr.f32.gmra.mrb[0].mxu0 %v2048
  %v2529 = vpop.f32.mrb[0].mxu0
  %v2530 = vadd.f32 %v2325, %v2529
  %v2531 = vpop.f32.mrb[0].mxu0
  %2532 = vmatprep.mubr.f32.mxu0 0.0
  %2533 = vmatmul.mubr.f32.gmra.mrb[0].mxu0 %v2050
  %v2534 = vpop.f32.mrb[0].mxu0
  %v2535 = vadd.f32 %v2330, %v2534
  %v2536 = vpop.f32.mrb[0].mxu0
  %2537 = vmatprep.mubr.f32.mxu0 0.0
  %2538 = vmatmul.mubr.f32.gmra.mrb[0].mxu0 %v2052
  %v2539 = vpop.f32.mrb[0].mxu0
  %v2540 = vadd.f32 %v2335, %v2539
  %v2541 = vpop.f32.mrb[0].mxu0
  %2542 = vmatprep.mubr.f32.mxu0 0.0
  %2543 = vmatmul.mubr.f32.gmra.mrb[0].mxu0 %v2054
  %v2544 = vpop.f32.mrb[0].mxu0
  %v2545 = vadd.f32 %v2340, %v2544
  %v2546 = vpop.f32.mrb[0].mxu0
  %2547 = vmatprep.mubr.f32.mxu0 0.0
  %2548 = vmatmul.mubr.f32.gmra.mrb[0].mxu0 %v2056
  %v2549 = vpop.f32.mrb[0].mxu0
  %v2550 = vadd.f32 %v2345, %v2549
  %v2551 = vpop.f32.mrb[0].mxu0
  %2552 = vmatprep.mubr.f32.mxu0 0.0
  %2553 = vmatmul.mubr.f32.gmra.mrb[0].mxu0 %v2058
  %v2554 = vpop.f32.mrb[0].mxu0
  %v2555 = vadd.f32 %v2350, %v2554
  %v2556 = vpop.f32.mrb[0].mxu0
  %2557 = vmatprep.mubr.f32.mxu0 0.0
  %2558 = vmatmul.mubr.f32.gmra.mrb[0].mxu0 %v2060
  %v2559 = vpop.f32.mrb[0].mxu0
  %v2560 = vadd.f32 %v2355, %v2559
  %v2561 = vpop.f32.mrb[0].mxu0
  %2562 = vmatprep.mubr.f32.mxu0 0.0
  %2563 = vmatmul.mubr.f32.gmra.mrb[0].mxu0 %v2062
  %v2564 = vpop.f32.mrb[0].mxu0
  %v2565 = vadd.f32 %v2360, %v2564
  %v2566 = vpop.f32.mrb[0].mxu0
  %2567 = vmatprep.mubr.f32.mxu0 0.0
  %2568 = vmatmul.mubr.f32.gmra.mrb[0].mxu0 %v2067
  %v2569 = vpop.f32.mrb[0].mxu0
  %v2570 = vadd.f32 %v2365, %v2569
  %v2571 = vpop.f32.mrb[0].mxu0
  %2572 = vdwg.mxu0
  %v2573 = vmax.f32 %v2435, 0.0
  %v2574 = vmax.f32 %v2440, 0.0
  %v2575 = vmax.f32 %v2445, 0.0
  %v2576 = vmax.f32 %v2450, 0.0
  %v2577 = vmax.f32 %v2455, 0.0
  %v2578 = vmax.f32 %v2460, 0.0
  %v2579 = vmax.f32 %v2465, 0.0
  %v2580 = vmax.f32 %v2470, 0.0
  %v2581 = vmax.f32 %v2475, 0.0
  %v2582 = vmax.f32 %v2480, 0.0
  %v2583 = vmax.f32 %v2485, 0.0
  %v2584 = vmax.f32 %v2490, 0.0
  %v2585 = vmax.f32 %v2495, 0.0
  %v2586 = vmax.f32 %v2500, 0.0
  %v2587 = vmax.f32 %v2505, 0.0
  %v2588 = vmax.f32 %v2510, 0.0
  %v2589 = vmax.f32 %v2515, 0.0
  %v2590 = vmax.f32 %v2520, 0.0
  %v2591 = vmax.f32 %v2525, 0.0
  %v2592 = vmax.f32 %v2530, 0.0
  %v2593 = vmax.f32 %v2535, 0.0
  %v2594 = vmax.f32 %v2540, 0.0
  %v2595 = vmax.f32 %v2545, 0.0
  %v2596 = vmax.f32 %v2550, 0.0
  %v2597 = vmax.f32 %v2555, 0.0
  %v2598 = vmax.f32 %v2560, 0.0
  %v2599 = vmax.f32 %v2565, 0.0
  %v2600 = vmax.f32 %v2570, 0.0
  %2629 = vrot.lane.b32.xlu0 %v2573, 64
  %v2630 = vpop.permute.xlu0 %2629
  %2631 = vrot.lane.b32.xlu0 %v2574, 64
  %v2632 = vpop.permute.xlu0 %2631
  %2633 = vrot.lane.b32.xlu0 %v2575, 64
  %v2634 = vpop.permute.xlu0 %2633
  %2635 = vrot.lane.b32.xlu0 %v2576, 64
  %v2636 = vpop.permute.xlu0 %2635
  %2637 = vrot.lane.b32.xlu0 %v2577, 64
  %v2638 = vpop.permute.xlu0 %2637
  %2639 = vrot.lane.b32.xlu0 %v2578, 64
  %v2640 = vpop.permute.xlu0 %2639
  %2641 = vrot.lane.b32.xlu0 %v2579, 64
  %v2642 = vpop.permute.xlu0 %2641
  %2643 = vrot.lane.b32.xlu0 %v2580, 64
  %v2644 = vpop.permute.xlu0 %2643
  %2645 = vrot.lane.b32.xlu0 %v2581, 64
  %v2646 = vpop.permute.xlu0 %2645
  %2647 = vrot.lane.b32.xlu0 %v2582, 64
  %v2648 = vpop.permute.xlu0 %2647
  %2649 = vrot.lane.b32.xlu0 %v2583, 64
  %v2650 = vpop.permute.xlu0 %2649
  %2651 = vrot.lane.b32.xlu0 %v2584, 64
  %v2652 = vpop.permute.xlu0 %2651
  %2653 = vrot.lane.b32.xlu0 %v2585, 64
  %v2654 = vpop.permute.xlu0 %2653
  %2655 = vrot.lane.b32.xlu0 %v2586, 64
  %v2656 = vpop.permute.xlu0 %2655
  %2657 = vrot.lane.b32.xlu0 %v2587, 64
  %v2658 = vpop.permute.xlu0 %2657
  %2659 = vrot.lane.b32.xlu0 %v2588, 64
  %v2660 = vpop.permute.xlu0 %2659
  %2661 = vrot.lane.b32.xlu0 %v2589, 64
  %v2662 = vpop.permute.xlu0 %2661
  %2663 = vrot.lane.b32.xlu0 %v2590, 64
  %v2664 = vpop.permute.xlu0 %2663
  %2665 = vrot.lane.b32.xlu0 %v2591, 64
  %v2666 = vpop.permute.xlu0 %2665
  %2667 = vrot.lane.b32.xlu0 %v2592, 64
  %v2668 = vpop.permute.xlu0 %2667
  %2669 = vrot.lane.b32.xlu0 %v2593, 64
  %v2670 = vpop.permute.xlu0 %2669
  %2671 = vrot.lane.b32.xlu0 %v2594, 64
  %v2672 = vpop.permute.xlu0 %2671
  %2673 = vrot.lane.b32.xlu0 %v2595, 64
  %v2674 = vpop.permute.xlu0 %2673
  %2675 = vrot.lane.b32.xlu0 %v2596, 64
  %v2676 = vpop.permute.xlu0 %2675
  %2677 = vrot.lane.b32.xlu0 %v2597, 64
  %v2678 = vpop.permute.xlu0 %2677
  %2679 = vrot.lane.b32.xlu0 %v2598, 64
  %v2680 = vpop.permute.xlu0 %2679
  %2681 = vrot.lane.b32.xlu0 %v2599, 64
  %v2682 = vpop.permute.xlu0 %2681
  %2683 = vrot.lane.b32.xlu0 %v2600, 64
  %v2684 = vpop.permute.xlu0 %2683
  %v2713 = vmax.f32 %v2573, %v2630
  %v2714 = vmax.f32 %v2574, %v2632
  %v2715 = vmax.f32 %v2575, %v2634
  %v2716 = vmax.f32 %v2576, %v2636
  %v2717 = vmax.f32 %v2577, %v2638
  %v2718 = vmax.f32 %v2578, %v2640
  %v2719 = vmax.f32 %v2579, %v2642
  %v2720 = vmax.f32 %v2580, %v2644
  %v2721 = vmax.f32 %v2581, %v2646
  %v2722 = vmax.f32 %v2582, %v2648
  %v2723 = vmax.f32 %v2583, %v2650
  %v2724 = vmax.f32 %v2584, %v2652
  %v2725 = vmax.f32 %v2585, %v2654
  %v2726 = vmax.f32 %v2586, %v2656
  %v2727 = vmax.f32 %v2587, %v2658
  %v2728 = vmax.f32 %v2588, %v2660
  %v2729 = vmax.f32 %v2589, %v2662
  %v2730 = vmax.f32 %v2590, %v2664
  %v2731 = vmax.f32 %v2591, %v2666
  %v2732 = vmax.f32 %v2592, %v2668
  %v2733 = vmax.f32 %v2593, %v2670
  %v2734 = vmax.f32 %v2594, %v2672
  %v2735 = vmax.f32 %v2595, %v2674
  %v2736 = vmax.f32 %v2596, %v2676
  %v2737 = vmax.f32 %v2597, %v2678
  %v2738 = vmax.f32 %v2598, %v2680
  %v2739 = vmax.f32 %v2599, %v2682
  %v2740 = vmax.f32 %v2600, %v2684
  %v2741 = vsel %vm1856, %v2713, -inf
  %v2742 = vsel %vm1856, %v2714, -inf
  %v2743 = vmax.f32 %v2741, %v2742
  %v2744 = vsel %vm1856, %v2715, -inf
  %v2745 = vsel %vm1856, %v2716, -inf
  %v2746 = vmax.f32 %v2744, %v2745
  %v2747 = vsel %vm1856, %v2717, -inf
  %v2748 = vsel %vm1856, %v2718, -inf
  %v2749 = vmax.f32 %v2747, %v2748
  %v2750 = vsel %vm1856, %v2719, -inf
  %v2751 = vsel %vm1856, %v2720, -inf
  %v2752 = vmax.f32 %v2750, %v2751
  %v2753 = vsel %vm1856, %v2721, -inf
  %v2754 = vsel %vm1856, %v2722, -inf
  %v2755 = vmax.f32 %v2753, %v2754
  %v2756 = vsel %vm1856, %v2723, -inf
  %v2757 = vsel %vm1856, %v2724, -inf
  %v2758 = vmax.f32 %v2756, %v2757
  %v2759 = vsel %vm1856, %v2725, -inf
  %v2760 = vsel %vm1856, %v2726, -inf
  %v2761 = vmax.f32 %v2759, %v2760
  %v2762 = vsel %vm1856, %v2727, -inf
  %v2763 = vsel %vm1856, %v2728, -inf
  %v2764 = vmax.f32 %v2762, %v2763
  %v2765 = vsel %vm1856, %v2729, -inf
  %v2766 = vsel %vm1856, %v2730, -inf
  %v2767 = vmax.f32 %v2765, %v2766
  %v2768 = vsel %vm1856, %v2731, -inf
  %v2769 = vsel %vm1856, %v2732, -inf
  %v2770 = vmax.f32 %v2768, %v2769
  %v2771 = vsel %vm1856, %v2733, -inf
  %v2772 = vsel %vm1856, %v2734, -inf
  %v2773 = vmax.f32 %v2771, %v2772
  %v2774 = vsel %vm1856, %v2735, -inf
  %v2775 = vsel %vm1856, %v2736, -inf
  %v2776 = vmax.f32 %v2774, %v2775
  %v2777 = vsel %vm1856, %v2737, -inf
  %v2778 = vsel %vm1856, %v2738, -inf
  %v2779 = vmax.f32 %v2777, %v2778
  %v2780 = vsel %vm1856, %v2739, -inf
  %v2781 = vsel %vm1856, %v2740, -inf
  %v2782 = vmax.f32 %v2780, %v2781
  %2783 = vst.msk [vmem:[%s5] sm:$0xff] %vm1856, %v2743
  %2784 = vst.msk [vmem:[%s5 + $0x8] sm:$0xff] %vm1856, %v2746
  %2785 = vst.msk [vmem:[%s5 + $0x10] sm:$0xff] %vm1856, %v2749
  %2786 = vst.msk [vmem:[%s5 + $0x18] sm:$0xff] %vm1856, %v2752
  %2787 = vst.msk [vmem:[%s5 + $0x20] sm:$0xff] %vm1856, %v2755
  %2788 = vst.msk [vmem:[%s5 + $0x28] sm:$0xff] %vm1856, %v2758
  %2789 = vst.msk [vmem:[%s5 + $0x30] sm:$0xff] %vm1856, %v2761
  %2790 = vst.msk [vmem:[%s5 + $0x38] sm:$0xff] %vm1856, %v2764
  %2791 = vst.msk [vmem:[%s5 + $0x40] sm:$0xff] %vm1856, %v2767
  %2792 = vst.msk [vmem:[%s5 + $0x48] sm:$0xff] %vm1856, %v2770
  %2793 = vst.msk [vmem:[%s5 + $0x50] sm:$0xff] %vm1856, %v2773
  %2794 = vst.msk [vmem:[%s5 + $0x58] sm:$0xff] %vm1856, %v2776
  %2795 = vst.msk [vmem:[%s5 + $0x60] sm:$0xff] %vm1856, %v2779
  %2796 = vst.msk [vmem:[%s5 + $0x68] sm:$0xff] %vm1856, %v2782
  // Predicated region
  $region22: #{forward.2} parent=0 // pred_check
    _
  $region23: #{forward.2} parent=0 // pred_check_branch
    %2798 = sbr.rel (0) target = $region25
  $region24: #{forward.2} parent=0 // pred_region
    _
  $region25: #{forward.2} parent=0 // pred_fallthru
    _
  // Predicated region
  $region26: #{forward.2} parent=0 // pred_check
    _
  $region27: #{forward.2} parent=0 // pred_check_branch
    %2800 = sbr.rel (0) target = $region29
  $region28: #{forward.2} parent=0 // pred_region
    _
  $region29: #{forward.2} parent=0 // pred_fallthru
    _

</llo_original>
